<compile_context>
chip_gen: v5e
topology: v5e:2x2
jax: 0.10.0
libtpu: 0.0.40
codegen_flags: <defaults>
</compile_context>

<pallas_src>
import functools

import jax
import jax.numpy as jnp
import numpy as np
from jax.experimental import pallas as pl
from jax.experimental.pallas import tpu as pltpu

ALPHA = 0.6          # Attention.alpha
NEG_SLOPE = 0.01     # F.leaky_relu default negative_slope
MAX_TILE_B = 256     # default batch rows per grid step once B grows


def _disc_kernel(x_ref, y_ref, mem_ref,
                 w1x_ref, w1y_ref, b1_ref,
                 wq_ref, bq_ref, wo_ref, bo_ref,
                 w2_ref, b2_ref, w3_ref, b3_ref,
                 out_ref, mem_out_ref, *, total_batch):
    f32 = jnp.float32
    bf16 = jnp.bfloat16

    step = pl.program_id(0)
    last = pl.num_programs(0) - 1

    x = x_ref[...].astype(bf16)      # f32 in HBM; cast on the VPU (free slot)
    y = y_ref[...]                   # f32, kept exact for argmax / one-hot
    mem = mem_ref[...]               # [10, 128] f32

    # ---- layer1 on cat([x, y]) + leaky_relu (bf16 MXU, f32 accumulate) ----
    h1 = (jnp.dot(x, w1x_ref[...], preferred_element_type=f32)
          + jnp.dot(y.astype(bf16), w1y_ref[...], preferred_element_type=f32)
          + b1_ref[...])                                          # [TB, 512]
    h1 = jnp.where(h1 > 0, h1, NEG_SLOPE * h1)

    # ---- Attention(512) ---------------------------------------------------
    q = (jnp.dot(h1.astype(bf16), wq_ref[...], preferred_element_type=f32)
         + bq_ref[...])                                           # [TB, 128]
    # logits = q @ mem.T  as an RHS-transposed contraction (no memT operand).
    logits = jax.lax.dot_general(q, mem, (((1,), (1,)), ((), ())),
                                 preferred_element_type=f32)      # [TB, 10]
    m = jnp.max(logits, axis=-1, keepdims=True)
    e = jnp.exp(logits - m)
    p = e * pl.reciprocal(jnp.sum(e, axis=-1, keepdims=True), approx=True)
    att = jnp.dot(p, mem, preferred_element_type=f32)             # [TB, 128]

    # one-hot of argmax(y, dim=1) (first occurrence — matches torch/jnp argmax)
    TB, CLS = y.shape
    iota = jax.lax.broadcasted_iota(jnp.int32, (TB, CLS), 1)
    ymax = jnp.max(y, axis=-1, keepdims=True)
    masked = jnp.where(y == ymax, iota, CLS)
    am = jnp.min(masked, axis=-1, keepdims=True)                  # [TB, 1]
    onehot = (iota == am).astype(f32)                             # [TB, 10]

    # mem_tmp[i] = alpha*mem[i] + (1-alpha)*mean_b(onehot[b,i]*att[b,:]).
    # The sum over the batch is accumulated in the resident output block
    # across the batch grid steps and finalized on the last step.
    upd = jax.lax.dot_general(onehot, att, (((0,), (0,)), ((), ())),
                              preferred_element_type=f32)         # [10, 128]

    @pl.when(step == 0)
    def _():
        mem_out_ref[...] = jnp.zeros_like(mem_out_ref)

    mem_out_ref[...] += upd

    @pl.when(step == last)
    def _():
        mem_out_ref[...] = (ALPHA * mem
                            + (1.0 - ALPHA) * mem_out_ref[...]
                            * (1.0 / total_batch))

    # Attention.fc2 + residual shortcut
    a_out = (jnp.dot(att.astype(bf16), wo_ref[...], preferred_element_type=f32)
             + bo_ref[...] + h1)                                  # [TB, 512]

    # ---- layer2 / layer3 / sigmoid (exact) --------------------------------
    h2 = (jnp.dot(a_out.astype(bf16), w2_ref[...], preferred_element_type=f32)
          + b2_ref[...])                                          # [TB, 128]
    h2 = jnp.where(h2 > 0, h2, NEG_SLOPE * h2)
    h3 = (jnp.dot(h2.astype(bf16), w3_ref[...], preferred_element_type=f32)
          + b3_ref[...])                                          # [TB, 1]
    out_ref[...] = 1.0 / (1.0 + jnp.exp(-h3))


def prepare_params(params_f32):
    """Cast MXU weight matrices to bf16 once (halves the per-call HBM fetch).
    Biases stay f32 (added after the f32-accumulated matmul)."""
    p = dict(params_f32)
    for k in ("w1x", "w1y", "wq", "wo", "w2", "w3"):
        p[k] = p[k].astype(jnp.bfloat16)
    return p


def _resolve_tile_b(B, tile_b):
    """Pick a batch tile: either the full batch (single resident block) or a
    tile that divides B and is a multiple of 8 (sublane constraint)."""
    if tile_b is None:
        tile_b = MAX_TILE_B
    if tile_b >= B:
        return B
    if B % tile_b != 0 or tile_b % 8 != 0:
        return B
    return tile_b


def _tile_map(b):
    return (b, 0)


def _const_map(b):
    return (0, 0)


@functools.partial(jax.jit, static_argnames=("tile_b",), donate_argnums=(2,))
def discriminator_forward(x, y, mem, params, *, tile_b=None):
    B, X = x.shape
    Y = y.shape[1]
    C = params["w1x"].shape[1]       # 512
    H = params["wq"].shape[1]        # 128

    x = x.astype(jnp.float32)        # bf16 cast happens inside the kernel
    mem = mem.astype(jnp.float32)

    tb = _resolve_tile_b(B, tile_b)
    grid = (B // tb,)

    weights = (params["w1x"], params["w1y"], params["b1"],
               params["wq"], params["bq"], params["wo"], params["bo"],
               params["w2"], params["b2"], params["w3"], params["b3"])
    args = (x, y, mem) + weights

    in_specs = ([pl.BlockSpec((tb, X), _tile_map),          # x: per-tile
                 pl.BlockSpec((tb, Y), _tile_map),          # y: per-tile
                 pl.BlockSpec(mem.shape, _const_map)]       # mem: resident
                + [pl.BlockSpec(w.shape, _const_map)        # weights: resident,
                   for w in weights])                       # DMA'd once per call
    out_specs = (pl.BlockSpec((tb, 1), _tile_map),
                 pl.BlockSpec(mem.shape, _const_map))       # resident accumulator

    # Advisory cost estimate so XLA can schedule/overlap this tiny, DMA-bound call.
    bytes_accessed = sum(int(a.size) * a.dtype.itemsize for a in args)
    bytes_accessed += B * 4 + int(mem.size) * 4             # outputs
    flops = 2 * B * ((X + Y) * C + C * H + H * Y + Y * H
                     + H * C + C * H + H * 1 + Y * H)
    cost = pl.CostEstimate(flops=flops, transcendentals=B * (Y + 2),
                           bytes_accessed=bytes_accessed)

    out, mem_tmp = pl.pallas_call(
        functools.partial(_disc_kernel, total_batch=B),
        out_shape=(jax.ShapeDtypeStruct((B, 1), jnp.float32),
                   jax.ShapeDtypeStruct(mem.shape, jnp.float32)),
        grid=grid,
        in_specs=in_specs,
        out_specs=out_specs,
        # mem (input 2) aliases mem_tmp (output 1); realized because `mem`
        # is donated at the jit boundary.
        input_output_aliases={2: 1},
        # Batch axis carries the mem_tmp reduction -> must be "arbitrary".
        compiler_params=pltpu.CompilerParams(
            dimension_semantics=("arbitrary",)),
        cost_estimate=cost,
    )(*args)
    return out, mem_tmp


def reference(x, y, mem, params_f32):
    """Pure-JAX f32 mirror of the PyTorch forward (for a sanity check)."""
    W1 = jnp.concatenate([params_f32["w1x"], params_f32["w1y"]], axis=0)
    cat = jnp.concatenate([x, y], axis=-1)
    h1 = jax.nn.leaky_relu(cat @ W1 + params_f32["b1"][0], NEG_SLOPE)
    q = h1 @ params_f32["wq"] + params_f32["bq"][0]
    p = jax.nn.softmax(q @ mem.T, axis=-1)
    att = p @ mem
    onehot = jax.nn.one_hot(jnp.argmax(y, axis=1), y.shape[1], dtype=x.dtype)
    mem_tmp = ALPHA * mem + (1.0 - ALPHA) * jnp.mean(
        onehot[:, :, None] * att[:, None, :], axis=0)
    a_out = att @ params_f32["wo"] + params_f32["bo"][0] + h1
    h2 = jax.nn.leaky_relu(a_out @ params_f32["w2"] + params_f32["b2"][0], NEG_SLOPE)
    h3 = h2 @ params_f32["w3"] + params_f32["b3"][0]
    return jax.nn.sigmoid(h3), mem_tmp


if __name__ == "__main__":
    key = jax.random.PRNGKey(0)
    keys = jax.random.split(key, 10)

    # Fuse the "real" and "fake" half-batches into one call: the ~1.2 MB bf16
    # weight fetch is paid once, so the second half-batch is essentially free.
    Bh, X, Y, C, H = 8, 784, 10, 512, 128
    x_real = jax.random.normal(keys[0], (Bh, X), jnp.float32)
    x_fake = jax.random.normal(keys[1], (Bh, X), jnp.float32)
    y_real = jax.random.normal(keys[2], (Bh, Y), jnp.float32)
    y_fake = jax.random.normal(keys[3], (Bh, Y), jnp.float32)
    x = jnp.concatenate([x_real, x_fake], axis=0)      # B = 16
    y = jnp.concatenate([y_real, y_fake], axis=0)
    mem = jax.random.normal(keys[4], (Y, H), jnp.float32)

    def xavier(k, fan_in, fan_out):   # xavier_normal_ on torch [out,in] weight
        std = (2.0 / (fan_in + fan_out)) ** 0.5
        return std * jax.random.normal(k, (fan_in, fan_out), jnp.float32)

    W1 = xavier(keys[5], X + Y, C)
    params_f32 = dict(
        w1x=W1[:X], w1y=W1[X:], b1=jnp.zeros((1, C), jnp.float32),
        wq=xavier(keys[6], C, H), bq=jnp.zeros((1, H), jnp.float32),  # Attention.fc1
        wo=xavier(keys[7], H, C), bo=jnp.zeros((1, C), jnp.float32),  # Attention.fc2
        w2=xavier(keys[8], C, H), b2=jnp.zeros((1, H), jnp.float32),  # layer2
        w3=xavier(keys[9], H, 1), b3=jnp.zeros((1, 1), jnp.float32),  # layer3
    )
    params = prepare_params(params_f32)   # bf16 weights for the kernel

    # Reference must run BEFORE the kernel: `mem` is donated to the pallas
    # call (so the mem -> mem_tmp alias is realized) and is invalid afterwards.
    ref_out, ref_mem = reference(x, y, mem, params_f32)
    jax.block_until_ready((ref_out, ref_mem))

    # tile_b=8 -> 2-step batch grid; exercises the resident mem_tmp accumulator
    # and constant weight index_maps (weights DMA'd only once for the call).
    out, mem_tmp = discriminator_forward(x, y, mem, params, tile_b=8)
    jax.block_until_ready((out, mem_tmp))

    # Tolerance covers bf16 weight/activation compression on the MXU path.
    np.testing.assert_allclose(np.asarray(out), np.asarray(ref_out),
                               rtol=5e-2, atol=5e-2)
    np.testing.assert_allclose(np.asarray(mem_tmp), np.asarray(ref_mem),
                               rtol=5e-2, atol=5e-2)
    print("KERNEL_OK")
</pallas_src>

<mosaic_0001>
module attributes {stable_mosaic.version = 11 : i64} {
  func.func @_disc_kernel(%arg0: i32, %arg1: memref<8x784xf32, #tpu.memory_space<vmem>>, %arg2: memref<8x10xf32, #tpu.memory_space<vmem>>, %arg3: memref<10x128xf32, #tpu.memory_space<vmem>>, %arg4: memref<784x512xbf16, #tpu.memory_space<vmem>>, %arg5: memref<10x512xbf16, #tpu.memory_space<vmem>>, %arg6: memref<1x512xf32, #tpu.memory_space<vmem>>, %arg7: memref<512x128xbf16, #tpu.memory_space<vmem>>, %arg8: memref<1x128xf32, #tpu.memory_space<vmem>>, %arg9: memref<128x512xbf16, #tpu.memory_space<vmem>>, %arg10: memref<1x512xf32, #tpu.memory_space<vmem>>, %arg11: memref<512x128xbf16, #tpu.memory_space<vmem>>, %arg12: memref<1x128xf32, #tpu.memory_space<vmem>>, %arg13: memref<128x1xbf16, #tpu.memory_space<vmem>>, %arg14: memref<1x1xf32, #tpu.memory_space<vmem>>, %arg15: memref<8x1xf32, #tpu.memory_space<vmem>>, %arg16: memref<10x128xf32, #tpu.memory_space<vmem>>) attributes {dimension_semantics = [#tpu.dimension_semantics<arbitrary>], iteration_bounds = array<i64: 2>, scalar_prefetch = 0 : i64, scratch_operands = 0 : i64, tpu.core_type = #tpu.core_type<tc>, window_params = [{transform_indices = @transform_0, window_bounds = array<i64: 8, 784>}, {transform_indices = @transform_1, window_bounds = array<i64: 8, 10>}, {pipeline_mode = #tpu.pipeline_mode<synchronous>, transform_indices = @transform_2, window_bounds = array<i64: 10, 128>}, {pipeline_mode = #tpu.pipeline_mode<synchronous>, transform_indices = @transform_3, window_bounds = array<i64: 784, 512>}, {pipeline_mode = #tpu.pipeline_mode<synchronous>, transform_indices = @transform_4, window_bounds = array<i64: 10, 512>}, {pipeline_mode = #tpu.pipeline_mode<synchronous>, transform_indices = @transform_5, window_bounds = array<i64: 1, 512>}, {pipeline_mode = #tpu.pipeline_mode<synchronous>, transform_indices = @transform_6, window_bounds = array<i64: 512, 128>}, {pipeline_mode = #tpu.pipeline_mode<synchronous>, transform_indices = @transform_7, window_bounds = array<i64: 1, 128>}, {pipeline_mode = #tpu.pipeline_mode<synchronous>, transform_indices = @transform_8, window_bounds = array<i64: 128, 512>}, {pipeline_mode = #tpu.pipeline_mode<synchronous>, transform_indices = @transform_9, window_bounds = array<i64: 1, 512>}, {pipeline_mode = #tpu.pipeline_mode<synchronous>, transform_indices = @transform_10, window_bounds = array<i64: 512, 128>}, {pipeline_mode = #tpu.pipeline_mode<synchronous>, transform_indices = @transform_11, window_bounds = array<i64: 1, 128>}, {pipeline_mode = #tpu.pipeline_mode<synchronous>, transform_indices = @transform_12, window_bounds = array<i64: 128, 1>}, {pipeline_mode = #tpu.pipeline_mode<synchronous>, transform_indices = @transform_13, window_bounds = array<i64: 1, 1>}, {transform_indices = @transform_14, window_bounds = array<i64: 8, 1>}, {pipeline_mode = #tpu.pipeline_mode<synchronous>, transform_indices = @transform_15, window_bounds = array<i64: 10, 128>}]} {
    %c0 = arith.constant 0 : index
    %c0_0 = arith.constant 0 : index
    %0 = vector.load %arg1[%c0, %c0_0] : memref<8x784xf32, #tpu.memory_space<vmem>>, vector<8x784xf32>
    %1 = arith.truncf %0 : vector<8x784xf32> to vector<8x784xbf16>
    %c0_1 = arith.constant 0 : index
    %c0_2 = arith.constant 0 : index
    %2 = vector.load %arg2[%c0_1, %c0_2] : memref<8x10xf32, #tpu.memory_space<vmem>>, vector<8x10xf32>
    %c0_3 = arith.constant 0 : index
    %c0_4 = arith.constant 0 : index
    %3 = vector.load %arg3[%c0_3, %c0_4] : memref<10x128xf32, #tpu.memory_space<vmem>>, vector<10x128xf32>
    %c0_5 = arith.constant 0 : index
    %c0_6 = arith.constant 0 : index
    %4 = vector.load %arg4[%c0_5, %c0_6] : memref<784x512xbf16, #tpu.memory_space<vmem>>, vector<784x512xbf16>
    %cst = arith.constant dense<0.000000e+00> : vector<8x512xf32>
    %5 = tpu.matmul %1, %4, %cst {dimension_numbers = #tpu.dot_dimension_numbers<[1], [0], [0], [1], [0, 0, 1, 1], [], []>} : vector<8x784xbf16>, vector<784x512xbf16>, vector<8x512xf32> -> vector<8x512xf32>
    %6 = arith.truncf %2 : vector<8x10xf32> to vector<8x10xbf16>
    %c0_7 = arith.constant 0 : index
    %c0_8 = arith.constant 0 : index
    %7 = vector.load %arg5[%c0_7, %c0_8] : memref<10x512xbf16, #tpu.memory_space<vmem>>, vector<10x512xbf16>
    %cst_9 = arith.constant dense<0.000000e+00> : vector<8x512xf32>
    %8 = tpu.matmul %6, %7, %cst_9 {dimension_numbers = #tpu.dot_dimension_numbers<[1], [0], [0], [1], [0, 0, 1, 1], [], []>} : vector<8x10xbf16>, vector<10x512xbf16>, vector<8x512xf32> -> vector<8x512xf32>
    %9 = arith.addf %5, %8 : vector<8x512xf32>
    %c0_10 = arith.constant 0 : index
    %c0_11 = arith.constant 0 : index
    %10 = vector.load %arg6[%c0_10, %c0_11] : memref<1x512xf32, #tpu.memory_space<vmem>>, vector<1x512xf32>
    %11 = vector.broadcast %10 : vector<1x512xf32> to vector<8x512xf32>
    %12 = arith.addf %9, %11 : vector<8x512xf32>
    %cst_12 = arith.constant 0.000000e+00 : f32
    %13 = vector.broadcast %cst_12 : f32 to vector<8x512xf32>
    %14 = arith.cmpf ogt, %12, %13 : vector<8x512xf32>
    %cst_13 = arith.constant 0.00999999977 : f32
    %15 = vector.broadcast %cst_13 : f32 to vector<8x512xf32>
    %16 = arith.mulf %15, %12 : vector<8x512xf32>
    %17 = arith.select %14, %12, %16 : vector<8x512xi1>, vector<8x512xf32>
    %18 = arith.truncf %17 : vector<8x512xf32> to vector<8x512xbf16>
    %c0_14 = arith.constant 0 : index
    %c0_15 = arith.constant 0 : index
    %19 = vector.load %arg7[%c0_14, %c0_15] : memref<512x128xbf16, #tpu.memory_space<vmem>>, vector<512x128xbf16>
    %cst_16 = arith.constant dense<0.000000e+00> : vector<8x128xf32>
    %20 = tpu.matmul %18, %19, %cst_16 {dimension_numbers = #tpu.dot_dimension_numbers<[1], [0], [0], [1], [0, 0, 1, 1], [], []>} : vector<8x512xbf16>, vector<512x128xbf16>, vector<8x128xf32> -> vector<8x128xf32>
    %c0_17 = arith.constant 0 : index
    %c0_18 = arith.constant 0 : index
    %21 = vector.load %arg8[%c0_17, %c0_18] : memref<1x128xf32, #tpu.memory_space<vmem>>, vector<1x128xf32>
    %22 = vector.broadcast %21 : vector<1x128xf32> to vector<8x128xf32>
    %23 = arith.addf %20, %22 : vector<8x128xf32>
    %cst_19 = arith.constant dense<0.000000e+00> : vector<8x10xf32>
    %24 = tpu.matmul %23, %3, %cst_19 {dimension_numbers = #tpu.dot_dimension_numbers<[1], [1], [0], [0], [0, 0, 1, 0], [], []>} : vector<8x128xf32>, vector<10x128xf32>, vector<8x10xf32> -> vector<8x10xf32>
    %cst_20 = arith.constant dense<0xFF800000> : vector<8xf32>
    %25 = vector.multi_reduction <maximumf>, %24, %cst_20 [1] : vector<8x10xf32> to vector<8xf32>
    %26 = vector.shape_cast %25 : vector<8xf32> to vector<8x1xf32>
    %27 = vector.broadcast %26 : vector<8x1xf32> to vector<8x10xf32>
    %28 = arith.subf %24, %27 : vector<8x10xf32>
    %29 = math.exp %28 : vector<8x10xf32>
    %cst_21 = arith.constant dense<0.000000e+00> : vector<8xf32>
    %30 = vector.multi_reduction <add>, %29, %cst_21 [1] : vector<8x10xf32> to vector<8xf32>
    %31 = vector.shape_cast %30 : vector<8xf32> to vector<8x1xf32>
    %32 = tpu.reciprocal %31 {approx = true} : vector<8x1xf32> -> vector<8x1xf32>
    %33 = vector.broadcast %32 : vector<8x1xf32> to vector<8x10xf32>
    %34 = arith.mulf %29, %33 : vector<8x10xf32>
    %cst_22 = arith.constant dense<0.000000e+00> : vector<8x128xf32>
    %35 = tpu.matmul %34, %3, %cst_22 {dimension_numbers = #tpu.dot_dimension_numbers<[1], [0], [0], [1], [0, 0, 1, 1], [], []>} : vector<8x10xf32>, vector<10x128xf32>, vector<8x128xf32> -> vector<8x128xf32>
    %36 = tpu.iota {dimensions = array<i32: 1>} : vector<8x10xi32>
    %cst_23 = arith.constant dense<0xFF800000> : vector<8xf32>
    %37 = vector.multi_reduction <maximumf>, %2, %cst_23 [1] : vector<8x10xf32> to vector<8xf32>
    %38 = vector.shape_cast %37 : vector<8xf32> to vector<8x1xf32>
    %39 = vector.broadcast %38 : vector<8x1xf32> to vector<8x10xf32>
    %40 = arith.cmpf oeq, %2, %39 : vector<8x10xf32>
    %c10_i32 = arith.constant 10 : i32
    %41 = vector.broadcast %c10_i32 : i32 to vector<8x10xi32>
    %42 = arith.select %40, %36, %41 : vector<8x10xi1>, vector<8x10xi32>
    %cst_24 = arith.constant dense<2147483647> : vector<8xi32>
    %43 = vector.multi_reduction <minsi>, %42, %cst_24 [1] : vector<8x10xi32> to vector<8xi32>
    %44 = vector.shape_cast %43 : vector<8xi32> to vector<8x1xi32>
    %45 = vector.broadcast %44 : vector<8x1xi32> to vector<8x10xi32>
    %46 = arith.cmpi eq, %36, %45 : vector<8x10xi32>
    %47 = arith.extui %46 : vector<8x10xi1> to vector<8x10xi32>
    %48 = arith.sitofp %47 : vector<8x10xi32> to vector<8x10xf32>
    %cst_25 = arith.constant dense<0.000000e+00> : vector<10x128xf32>
    %49 = tpu.matmul %48, %35, %cst_25 {dimension_numbers = #tpu.dot_dimension_numbers<[0], [0], [1], [1], [0, 1, 1, 1], [], []>} : vector<8x10xf32>, vector<8x128xf32>, vector<10x128xf32> -> vector<10x128xf32>
    %c0_i32 = arith.constant 0 : i32
    %50 = arith.cmpi eq, %arg0, %c0_i32 : i32
    %51 = arith.extui %50 : i1 to i32
    %c0_i32_26 = arith.constant 0 : i32
    %52 = arith.cmpi ne, %51, %c0_i32_26 : i32
    scf.if %52 {
      %cst_54 = arith.constant 0.000000e+00 : f32
      %91 = vector.broadcast %cst_54 : f32 to vector<10x128xf32>
      %c0_55 = arith.constant 0 : index
      %c0_56 = arith.constant 0 : index
      %92 = vector.load %arg16[%c0_55, %c0_56] : memref<10x128xf32, #tpu.memory_space<vmem>>, vector<10x128xf32>
      tpu.vector_store %arg16[%c0_55, %c0_56], %91 {strides = array<i32>} : memref<10x128xf32, #tpu.memory_space<vmem>>, vector<10x128xf32>,
    } else {
    }
    %c0_27 = arith.constant 0 : index
    %c0_28 = arith.constant 0 : index
    %53 = vector.load %arg16[%c0_27, %c0_28] : memref<10x128xf32, #tpu.memory_space<vmem>>, vector<10x128xf32>
    %54 = arith.addf %53, %49 : vector<10x128xf32>
    %c0_29 = arith.constant 0 : index
    %c0_30 = arith.constant 0 : index
    %55 = vector.load %arg16[%c0_29, %c0_30] : memref<10x128xf32, #tpu.memory_space<vmem>>, vector<10x128xf32>
    tpu.vector_store %arg16[%c0_29, %c0_30], %54 {strides = array<i32>} : memref<10x128xf32, #tpu.memory_space<vmem>>, vector<10x128xf32>,
    %c1_i32 = arith.constant 1 : i32
    %56 = arith.cmpi eq, %arg0, %c1_i32 : i32
    %57 = arith.extui %56 : i1 to i32
    %c0_i32_31 = arith.constant 0 : i32
    %58 = arith.cmpi ne, %57, %c0_i32_31 : i32
    scf.if %58 {
      %cst_54 = arith.constant 6.000000e-01 : f32
      %91 = vector.broadcast %cst_54 : f32 to vector<10x128xf32>
      %92 = arith.mulf %91, %3 : vector<10x128xf32>
      %c0_55 = arith.constant 0 : index
      %c0_56 = arith.constant 0 : index
      %93 = vector.load %arg16[%c0_55, %c0_56] : memref<10x128xf32, #tpu.memory_space<vmem>>, vector<10x128xf32>
      %cst_57 = arith.constant 4.000000e-01 : f32
      %94 = vector.broadcast %cst_57 : f32 to vector<10x128xf32>
      %95 = arith.mulf %94, %93 : vector<10x128xf32>
      %cst_58 = arith.constant 6.250000e-02 : f32
      %96 = vector.broadcast %cst_58 : f32 to vector<10x128xf32>
      %97 = arith.mulf %95, %96 : vector<10x128xf32>
      %98 = arith.addf %92, %97 : vector<10x128xf32>
      %c0_59 = arith.constant 0 : index
      %c0_60 = arith.constant 0 : index
      %99 = vector.load %arg16[%c0_59, %c0_60] : memref<10x128xf32, #tpu.memory_space<vmem>>, vector<10x128xf32>
      tpu.vector_store %arg16[%c0_59, %c0_60], %98 {strides = array<i32>} : memref<10x128xf32, #tpu.memory_space<vmem>>, vector<10x128xf32>,
    } else {
    }
    %59 = arith.truncf %35 : vector<8x128xf32> to vector<8x128xbf16>
    %c0_32 = arith.constant 0 : index
    %c0_33 = arith.constant 0 : index
    %60 = vector.load %arg9[%c0_32, %c0_33] : memref<128x512xbf16, #tpu.memory_space<vmem>>, vector<128x512xbf16>
    %cst_34 = arith.constant dense<0.000000e+00> : vector<8x512xf32>
    %61 = tpu.matmul %59, %60, %cst_34 {dimension_numbers = #tpu.dot_dimension_numbers<[1], [0], [0], [1], [0, 0, 1, 1], [], []>} : vector<8x128xbf16>, vector<128x512xbf16>, vector<8x512xf32> -> vector<8x512xf32>
    %c0_35 = arith.constant 0 : index
    %c0_36 = arith.constant 0 : index
    %62 = vector.load %arg10[%c0_35, %c0_36] : memref<1x512xf32, #tpu.memory_space<vmem>>, vector<1x512xf32>
    %63 = vector.broadcast %62 : vector<1x512xf32> to vector<8x512xf32>
    %64 = arith.addf %61, %63 : vector<8x512xf32>
    %65 = arith.addf %64, %17 : vector<8x512xf32>
    %66 = arith.truncf %65 : vector<8x512xf32> to vector<8x512xbf16>
    %c0_37 = arith.constant 0 : index
    %c0_38 = arith.constant 0 : index
    %67 = vector.load %arg11[%c0_37, %c0_38] : memref<512x128xbf16, #tpu.memory_space<vmem>>, vector<512x128xbf16>
    %cst_39 = arith.constant dense<0.000000e+00> : vector<8x128xf32>
    %68 = tpu.matmul %66, %67, %cst_39 {dimension_numbers = #tpu.dot_dimension_numbers<[1], [0], [0], [1], [0, 0, 1, 1], [], []>} : vector<8x512xbf16>, vector<512x128xbf16>, vector<8x128xf32> -> vector<8x128xf32>
    %c0_40 = arith.constant 0 : index
    %c0_41 = arith.constant 0 : index
    %69 = vector.load %arg12[%c0_40, %c0_41] : memref<1x128xf32, #tpu.memory_space<vmem>>, vector<1x128xf32>
    %70 = vector.broadcast %69 : vector<1x128xf32> to vector<8x128xf32>
    %71 = arith.addf %68, %70 : vector<8x128xf32>
    %cst_42 = arith.constant 0.000000e+00 : f32
    %72 = vector.broadcast %cst_42 : f32 to vector<8x128xf32>
    %73 = arith.cmpf ogt, %71, %72 : vector<8x128xf32>
    %cst_43 = arith.constant 0.00999999977 : f32
    %74 = vector.broadcast %cst_43 : f32 to vector<8x128xf32>
    %75 = arith.mulf %74, %71 : vector<8x128xf32>
    %76 = arith.select %73, %71, %75 : vector<8x128xi1>, vector<8x128xf32>
    %77 = arith.truncf %76 : vector<8x128xf32> to vector<8x128xbf16>
    %c0_44 = arith.constant 0 : index
    %c0_45 = arith.constant 0 : index
    %78 = vector.load %arg13[%c0_44, %c0_45] : memref<128x1xbf16, #tpu.memory_space<vmem>>, vector<128x1xbf16>
    %cst_46 = arith.constant dense<0.000000e+00> : vector<8x1xf32>
    %79 = tpu.matmul %77, %78, %cst_46 {dimension_numbers = #tpu.dot_dimension_numbers<[1], [0], [0], [1], [0, 0, 1, 1], [], []>} : vector<8x128xbf16>, vector<128x1xbf16>, vector<8x1xf32> -> vector<8x1xf32>
    %c0_47 = arith.constant 0 : index
    %c0_48 = arith.constant 0 : index
    %80 = vector.load %arg14[%c0_47, %c0_48] : memref<1x1xf32, #tpu.memory_space<vmem>>, vector<1x1xf32>
    %81 = vector.broadcast %80 : vector<1x1xf32> to vector<8x1xf32>
    %82 = arith.addf %79, %81 : vector<8x1xf32>
    %cst_49 = arith.constant 0.000000e+00 : f32
    %83 = vector.broadcast %cst_49 : f32 to vector<8x1xf32>
    %84 = arith.subf %83, %82 : vector<8x1xf32>
    %85 = math.exp %84 : vector<8x1xf32>
    %cst_50 = arith.constant 1.000000e+00 : f32
    %86 = vector.broadcast %cst_50 : f32 to vector<8x1xf32>
    %87 = arith.addf %86, %85 : vector<8x1xf32>
    %cst_51 = arith.constant 1.000000e+00 : f32
    %88 = vector.broadcast %cst_51 : f32 to vector<8x1xf32>
    %89 = arith.divf %88, %87 : vector<8x1xf32>
    %c0_52 = arith.constant 0 : index
    %c0_53 = arith.constant 0 : index
    %90 = vector.load %arg15[%c0_52, %c0_53] : memref<8x1xf32, #tpu.memory_space<vmem>>, vector<8x1xf32>
    tpu.vector_store %arg15[%c0_52, %c0_53], %89 {strides = array<i32>} : memref<8x1xf32, #tpu.memory_space<vmem>>, vector<8x1xf32>,
    return
  }
  func.func @transform_0(%arg0: i32) -> (i32, i32) {
    %c0_i32 = arith.constant 0 : i32
    %c0_i32_0 = arith.constant 0 : i32
    return %arg0, %c0_i32 : i32, i32
  }
  func.func @transform_1(%arg0: i32) -> (i32, i32) {
    %c0_i32 = arith.constant 0 : i32
    %c0_i32_0 = arith.constant 0 : i32
    return %arg0, %c0_i32 : i32, i32
  }
  func.func @transform_2(%arg0: i32) -> (i32, i32) {
    %c0_i32 = arith.constant 0 : i32
    %c0_i32_0 = arith.constant 0 : i32
    %c0_i32_1 = arith.constant 0 : i32
    return %c0_i32, %c0_i32_0 : i32, i32
  }
  func.func @transform_3(%arg0: i32) -> (i32, i32) {
    %c0_i32 = arith.constant 0 : i32
    %c0_i32_0 = arith.constant 0 : i32
    %c0_i32_1 = arith.constant 0 : i32
    return %c0_i32, %c0_i32_0 : i32, i32
  }
  func.func @transform_4(%arg0: i32) -> (i32, i32) {
    %c0_i32 = arith.constant 0 : i32
    %c0_i32_0 = arith.constant 0 : i32
    %c0_i32_1 = arith.constant 0 : i32
    return %c0_i32, %c0_i32_0 : i32, i32
  }
  func.func @transform_5(%arg0: i32) -> (i32, i32) {
    %c0_i32 = arith.constant 0 : i32
    %c0_i32_0 = arith.constant 0 : i32
    %c0_i32_1 = arith.constant 0 : i32
    return %c0_i32, %c0_i32_0 : i32, i32
  }
  func.func @transform_6(%arg0: i32) -> (i32, i32) {
    %c0_i32 = arith.constant 0 : i32
    %c0_i32_0 = arith.constant 0 : i32
    %c0_i32_1 = arith.constant 0 : i32
    return %c0_i32, %c0_i32_0 : i32, i32
  }
  func.func @transform_7(%arg0: i32) -> (i32, i32) {
    %c0_i32 = arith.constant 0 : i32
    %c0_i32_0 = arith.constant 0 : i32
    %c0_i32_1 = arith.constant 0 : i32
    return %c0_i32, %c0_i32_0 : i32, i32
  }
  func.func @transform_8(%arg0: i32) -> (i32, i32) {
    %c0_i32 = arith.constant 0 : i32
    %c0_i32_0 = arith.constant 0 : i32
    %c0_i32_1 = arith.constant 0 : i32
    return %c0_i32, %c0_i32_0 : i32, i32
  }
  func.func @transform_9(%arg0: i32) -> (i32, i32) {
    %c0_i32 = arith.constant 0 : i32
    %c0_i32_0 = arith.constant 0 : i32
    %c0_i32_1 = arith.constant 0 : i32
    return %c0_i32, %c0_i32_0 : i32, i32
  }
  func.func @transform_10(%arg0: i32) -> (i32, i32) {
    %c0_i32 = arith.constant 0 : i32
    %c0_i32_0 = arith.constant 0 : i32
    %c0_i32_1 = arith.constant 0 : i32
    return %c0_i32, %c0_i32_0 : i32, i32
  }
  func.func @transform_11(%arg0: i32) -> (i32, i32) {
    %c0_i32 = arith.constant 0 : i32
    %c0_i32_0 = arith.constant 0 : i32
    %c0_i32_1 = arith.constant 0 : i32
    return %c0_i32, %c0_i32_0 : i32, i32
  }
  func.func @transform_12(%arg0: i32) -> (i32, i32) {
    %c0_i32 = arith.constant 0 : i32
    %c0_i32_0 = arith.constant 0 : i32
    %c0_i32_1 = arith.constant 0 : i32
    return %c0_i32, %c0_i32_0 : i32, i32
  }
  func.func @transform_13(%arg0: i32) -> (i32, i32) {
    %c0_i32 = arith.constant 0 : i32
    %c0_i32_0 = arith.constant 0 : i32
    %c0_i32_1 = arith.constant 0 : i32
    return %c0_i32, %c0_i32_0 : i32, i32
  }
  func.func @transform_14(%arg0: i32) -> (i32, i32) {
    %c0_i32 = arith.constant 0 : i32
    %c0_i32_0 = arith.constant 0 : i32
    return %arg0, %c0_i32 : i32, i32
  }
  func.func @transform_15(%arg0: i32) -> (i32, i32) {
    %c0_i32 = arith.constant 0 : i32
    %c0_i32_0 = arith.constant 0 : i32
    %c0_i32_1 = arith.constant 0 : i32
    return %c0_i32, %c0_i32_0 : i32, i32
  }
}

</mosaic_0001>

<llo_original>
// kernel: discriminator_forward.1
$region0: #{discriminator_forward.1}
  #allocation0 [shape = 'u32[]', space=smem, size = 0x4, offset = 0x4, fixed_abs, tag = 'smem constant byte address 0x4 - core index']
  #allocation1 [shape = 'u32[72,128]{1,0:T(1,128)}', space=vmem, size = 0x9000, scoped, tag = 'internal scratch']
  #allocation2 [shape = 'f32[1,1]{1,0:T(1,128)S(1)}', space=vmem, size = 0x200, scoped, tag = 'scoped memory for discriminator_forward.1']
  %s0 = inlined_call_operand.hbm [shape: f32[16,784], index: 0, kind: input, shape index: {}]
  %s1 = inlined_call_operand.vmem [shape: f32[16,10], index: 1, kind: input, shape index: {}]
  %s2 = inlined_call_operand.vmem [shape: f32[10,128], index: 2, kind: input, shape index: {}, may-alias: {2,15}]
  %s3 = inlined_call_operand.hbm [shape: bf16[784,512], index: 3, kind: input, shape index: {}]
  %s4 = inlined_call_operand.vmem [shape: bf16[10,512], index: 4, kind: input, shape index: {}]
  %s5 = inlined_call_operand.vmem [shape: f32[1,512], index: 5, kind: input, shape index: {}]
  %s6 = inlined_call_operand.hbm [shape: bf16[512,128], index: 6, kind: input, shape index: {}]
  %s7 = inlined_call_operand.vmem [shape: f32[1,128], index: 7, kind: input, shape index: {}]
  %s8 = inlined_call_operand.hbm [shape: bf16[128,512], index: 8, kind: input, shape index: {}]
  %s9 = inlined_call_operand.hbm [shape: f32[1,512], index: 9, kind: input, shape index: {}]
  %s10 = inlined_call_operand.hbm [shape: bf16[512,128], index: 10, kind: input, shape index: {}]
  %s11 = inlined_call_operand.vmem [shape: f32[1,128], index: 11, kind: input, shape index: {}]
  %s12 = inlined_call_operand.vmem [shape: bf16[128,1], index: 12, kind: input, shape index: {}]
  %s13 = inlined_call_operand.<no memory space> [shape: f32[1,1], index: 13, kind: input, shape index: {}]
  %s14 = inlined_call_operand.vmem [shape: f32[16,1], index: 14, kind: output, shape index: {0}]
  %s15 = inlined_call_operand.vmem [shape: f32[10,128], index: 15, kind: output, shape index: {1}, may-alias: {2,15}]
  %16 = xla_tuple %s14, %s15
  %s17 = sld [smem:[#allocation0]]
  $region129: #{discriminator_forward.1} parent=0
    _
  %s19 = ssub.s32 1, %s17
  %s20 = scalar_select 0, %s19, %s17
  %v21 = vstv %s13
  %22 = vst [vmem:[#allocation2] sm:$0x1] %v21
  $region1: #{discriminator_forward.1} parent=0
    #allocation3 [shape = 'u8[57344]{0}', space=vmem, size = 0xe000, scoped, tag = 'input window, operand 0']
    #allocation4 [shape = 's32[2]{0}', space=sflag, size = 0x8, scoped, tag = 'scoped memory for discriminator_forward.1']
    #allocation5 [shape = 'u8[802816]{0}', space=vmem, size = 0xc4000, scoped, tag = 'input window, operand 3, single buffered']
    #allocation6 [shape = 's32[1]{0}', space=sflag, size = 0x4, scoped, tag = 'scoped memory for discriminator_forward.1']
    #allocation7 [shape = 'u8[131072]{0}', space=vmem, size = 0x20000, scoped, tag = 'input window, operand 6, single buffered']
    #allocation8 [shape = 'u8[131072]{0}', space=vmem, size = 0x20000, scoped, tag = 'input window, operand 8, single buffered']
    #allocation9 [shape = 's32[1]{0}', space=sflag, size = 0x4, scoped, tag = 'scoped memory for discriminator_forward.1']
    #allocation10 [shape = 'u8[2048]{0}', space=vmem, size = 0x800, scoped, tag = 'input window, operand 9, single buffered']
    #allocation11 [shape = 'u8[131072]{0}', space=vmem, size = 0x20000, scoped, tag = 'input window, operand 10, single buffered']
    #allocation12 [shape = 's32[1]{0}', space=sflag, size = 0x4, scoped, tag = 'scoped memory for discriminator_forward.1']
    %23 = vsyncpa [#allocation4], 0
    %s24 = scalar_lea.sflag [#allocation4], 1
    %25 = vsyncpa %s24, 0
    %26 = vsyncpa [#allocation6], 0
    %27 = vsyncpa [#allocation9], 0
    %28 = vsyncpa [#allocation12], 0
    loop: start=0, step=1, limit=4
    $region2: #{discriminator_forward.1} parent=1 // loop_pre_header
      _
    $region3: #{discriminator_forward.1} parent=1 // loop_header
      %s30 = sphi 0, %s34
      %p31 = scmp.ge.s32.totalorder %s30, 4
      %s40 = sphi 0, %s42
      %s43 = sphi 0, %s40
      %s44 = sphi 0, %s43
      %s60 = sphi 0, %s44
      %s66 = sphi 0, %s68
      %s69 = sphi 0, %s66
      %s70 = sphi 0, %s69
      %s86 = sphi 0, %s70
      %s90 = sphi 0, %s90
      %s92 = sphi 0, %s90
      %s93 = sphi 0, %s92
      %s107 = sphi 0, %s93
      %s111 = sphi 0, %s111
      %s113 = sphi 0, %s111
      %s114 = sphi 0, %s113
      %s128 = sphi 0, %s114
      %s132 = sphi 0, %s132
      %s134 = sphi 0, %s132
      %s135 = sphi 0, %s134
      %s149 = sphi 0, %s135
      %s153 = sphi 0, %s153
      %s155 = sphi 0, %s153
      %s156 = sphi 0, %s155
      %s170 = sphi 0, %s156
      %s174 = sphi 0, %s174
      %s176 = sphi 0, %s174
      %s177 = sphi 0, %s176
      %s191 = sphi 0, %s177
      %s195 = sphi 0, %s195
      %s197 = sphi 0, %s195
      %s198 = sphi 0, %s197
      %s212 = sphi 0, %s198
      %s216 = sphi 0, %s216
      %s218 = sphi 0, %s216
      %s219 = sphi 0, %s218
      %s233 = sphi 0, %s219
      %s237 = sphi 0, %s237
      %s239 = sphi 0, %s237
      %s240 = sphi 0, %s239
      %s254 = sphi 0, %s240
      %s258 = sphi 0, %s258
      %s260 = sphi 0, %s258
      %s261 = sphi 0, %s260
      %s275 = sphi 0, %s261
      %s279 = sphi 0, %s279
      %s281 = sphi 0, %s279
      %s282 = sphi 0, %s281
      %s296 = sphi 0, %s282
      %s300 = sphi 0, %s300
      %s302 = sphi 0, %s300
      %s303 = sphi 0, %s302
      %s317 = sphi 0, %s303
      %s321 = sphi 0, %s321
      %s323 = sphi 0, %s321
      %s324 = sphi 0, %s323
      %s338 = sphi 0, %s324
      %s344 = sphi 0, %s346
      %s347 = sphi 0, %s344
      %s348 = sphi 0, %s347
      %s364 = sphi 0, %s348
      %s368 = sphi 0, %s368
      %s370 = sphi 0, %s368
      %s371 = sphi 0, %s370
      %s385 = sphi 0, %s371
    $region4: #{discriminator_forward.1} parent=1 // loop_header_branch
      %33 = sbr.rel (%p31) target = $region8
    $region5: #{discriminator_forward.1} parent=1 // loop_body
      %s35 = ssub.s32 %s30, 1
      %s36 = ssub.s32 %s30, 2
      %s37 = sadd.s32 %s30, 1
      %s38 = ssub.s32 %s30, %s37
      %p39 = scmp.eq.s32.totalorder %s38, 0
      %s41 = sadd.s32 %s40, 1
      %s42 = scalar_select %p39, %s40, %s41
      %p45 = pneg %p39
      %p46 = scmp.eq.s32.totalorder %s30, 1
      %p47 = por %p45, %p46
      %p48 = scmp.ne.s32.totalorder %s40, %s43
      %p49 = scmp.eq.s32.totalorder %s30, 0
      %p50 = por %p48, %p49
      %p51 = scmp.ne.s32.totalorder %s40, %s43
      %p52 = scmp.eq.s32.totalorder %s35, 1
      %p53 = por %p51, %p52
      %p54 = scmp.ne.s32.totalorder %s43, %s44
      %p55 = scmp.eq.s32.totalorder %s35, 0
      %p56 = por %p54, %p55
      %p57 = scmp.ne.s32.totalorder %s43, %s44
      %p58 = scmp.eq.s32.totalorder %s36, 1
      %p59 = por %p57, %p58
      %p61 = scmp.ne.s32.totalorder %s44, %s60
      %p62 = scmp.eq.s32.totalorder %s36, 0
      %p63 = por %p61, %p62
      %s64 = ssub.s32 %s30, %s37
      %p65 = scmp.eq.s32.totalorder %s64, 0
      %s67 = sadd.s32 %s66, 1
      %s68 = scalar_select %p65, %s66, %s67
      %p71 = pneg %p65
      %p72 = scmp.eq.s32.totalorder %s30, 1
      %p73 = por %p71, %p72
      %p74 = scmp.ne.s32.totalorder %s66, %s69
      %p75 = scmp.eq.s32.totalorder %s30, 0
      %p76 = por %p74, %p75
      %p77 = scmp.ne.s32.totalorder %s66, %s69
      %p78 = scmp.eq.s32.totalorder %s35, 1
      %p79 = por %p77, %p78
      %p80 = scmp.ne.s32.totalorder %s69, %s70
      %p81 = scmp.eq.s32.totalorder %s35, 0
      %p82 = por %p80, %p81
      %p83 = scmp.ne.s32.totalorder %s69, %s70
      %p84 = scmp.eq.s32.totalorder %s36, 1
      %p85 = por %p83, %p84
      %p87 = scmp.ne.s32.totalorder %s70, %s86
      %p88 = scmp.eq.s32.totalorder %s36, 0
      %p89 = por %p87, %p88
      %s91 = sadd.s32 %s90, 1
      %p94 = scmp.eq.s32.totalorder %s30, 1
      %p95 = scmp.ne.s32.totalorder %s90, %s92
      %p96 = scmp.eq.s32.totalorder %s30, 0
      %p97 = por %p95, %p96
      %p98 = scmp.ne.s32.totalorder %s90, %s92
      %p99 = scmp.eq.s32.totalorder %s35, 1
      %p100 = por %p98, %p99
      %p101 = scmp.ne.s32.totalorder %s92, %s93
      %p102 = scmp.eq.s32.totalorder %s35, 0
      %p103 = por %p101, %p102
      %p104 = scmp.ne.s32.totalorder %s92, %s93
      %p105 = scmp.eq.s32.totalorder %s36, 1
      %p106 = por %p104, %p105
      %p108 = scmp.ne.s32.totalorder %s93, %s107
      %p109 = scmp.eq.s32.totalorder %s36, 0
      %p110 = por %p108, %p109
      %s112 = sadd.s32 %s111, 1
      %p115 = scmp.eq.s32.totalorder %s30, 1
      %p116 = scmp.ne.s32.totalorder %s111, %s113
      %p117 = scmp.eq.s32.totalorder %s30, 0
      %p118 = por %p116, %p117
      %p119 = scmp.ne.s32.totalorder %s111, %s113
      %p120 = scmp.eq.s32.totalorder %s35, 1
      %p121 = por %p119, %p120
      %p122 = scmp.ne.s32.totalorder %s113, %s114
      %p123 = scmp.eq.s32.totalorder %s35, 0
      %p124 = por %p122, %p123
      %p125 = scmp.ne.s32.totalorder %s113, %s114
      %p126 = scmp.eq.s32.totalorder %s36, 1
      %p127 = por %p125, %p126
      %p129 = scmp.ne.s32.totalorder %s114, %s128
      %p130 = scmp.eq.s32.totalorder %s36, 0
      %p131 = por %p129, %p130
      %s133 = sadd.s32 %s132, 1
      %p136 = scmp.eq.s32.totalorder %s30, 1
      %p137 = scmp.ne.s32.totalorder %s132, %s134
      %p138 = scmp.eq.s32.totalorder %s30, 0
      %p139 = por %p137, %p138
      %p140 = scmp.ne.s32.totalorder %s132, %s134
      %p141 = scmp.eq.s32.totalorder %s35, 1
      %p142 = por %p140, %p141
      %p143 = scmp.ne.s32.totalorder %s134, %s135
      %p144 = scmp.eq.s32.totalorder %s35, 0
      %p145 = por %p143, %p144
      %p146 = scmp.ne.s32.totalorder %s134, %s135
      %p147 = scmp.eq.s32.totalorder %s36, 1
      %p148 = por %p146, %p147
      %p150 = scmp.ne.s32.totalorder %s135, %s149
      %p151 = scmp.eq.s32.totalorder %s36, 0
      %p152 = por %p150, %p151
      %s154 = sadd.s32 %s153, 1
      %p157 = scmp.eq.s32.totalorder %s30, 1
      %p158 = scmp.ne.s32.totalorder %s153, %s155
      %p159 = scmp.eq.s32.totalorder %s30, 0
      %p160 = por %p158, %p159
      %p161 = scmp.ne.s32.totalorder %s153, %s155
      %p162 = scmp.eq.s32.totalorder %s35, 1
      %p163 = por %p161, %p162
      %p164 = scmp.ne.s32.totalorder %s155, %s156
      %p165 = scmp.eq.s32.totalorder %s35, 0
      %p166 = por %p164, %p165
      %p167 = scmp.ne.s32.totalorder %s155, %s156
      %p168 = scmp.eq.s32.totalorder %s36, 1
      %p169 = por %p167, %p168
      %p171 = scmp.ne.s32.totalorder %s156, %s170
      %p172 = scmp.eq.s32.totalorder %s36, 0
      %p173 = por %p171, %p172
      %s175 = sadd.s32 %s174, 1
      %p178 = scmp.eq.s32.totalorder %s30, 1
      %p179 = scmp.ne.s32.totalorder %s174, %s176
      %p180 = scmp.eq.s32.totalorder %s30, 0
      %p181 = por %p179, %p180
      %p182 = scmp.ne.s32.totalorder %s174, %s176
      %p183 = scmp.eq.s32.totalorder %s35, 1
      %p184 = por %p182, %p183
      %p185 = scmp.ne.s32.totalorder %s176, %s177
      %p186 = scmp.eq.s32.totalorder %s35, 0
      %p187 = por %p185, %p186
      %p188 = scmp.ne.s32.totalorder %s176, %s177
      %p189 = scmp.eq.s32.totalorder %s36, 1
      %p190 = por %p188, %p189
      %p192 = scmp.ne.s32.totalorder %s177, %s191
      %p193 = scmp.eq.s32.totalorder %s36, 0
      %p194 = por %p192, %p193
      %s196 = sadd.s32 %s195, 1
      %p199 = scmp.eq.s32.totalorder %s30, 1
      %p200 = scmp.ne.s32.totalorder %s195, %s197
      %p201 = scmp.eq.s32.totalorder %s30, 0
      %p202 = por %p200, %p201
      %p203 = scmp.ne.s32.totalorder %s195, %s197
      %p204 = scmp.eq.s32.totalorder %s35, 1
      %p205 = por %p203, %p204
      %p206 = scmp.ne.s32.totalorder %s197, %s198
      %p207 = scmp.eq.s32.totalorder %s35, 0
      %p208 = por %p206, %p207
      %p209 = scmp.ne.s32.totalorder %s197, %s198
      %p210 = scmp.eq.s32.totalorder %s36, 1
      %p211 = por %p209, %p210
      %p213 = scmp.ne.s32.totalorder %s198, %s212
      %p214 = scmp.eq.s32.totalorder %s36, 0
      %p215 = por %p213, %p214
      %s217 = sadd.s32 %s216, 1
      %p220 = scmp.eq.s32.totalorder %s30, 1
      %p221 = scmp.ne.s32.totalorder %s216, %s218
      %p222 = scmp.eq.s32.totalorder %s30, 0
      %p223 = por %p221, %p222
      %p224 = scmp.ne.s32.totalorder %s216, %s218
      %p225 = scmp.eq.s32.totalorder %s35, 1
      %p226 = por %p224, %p225
      %p227 = scmp.ne.s32.totalorder %s218, %s219
      %p228 = scmp.eq.s32.totalorder %s35, 0
      %p229 = por %p227, %p228
      %p230 = scmp.ne.s32.totalorder %s218, %s219
      %p231 = scmp.eq.s32.totalorder %s36, 1
      %p232 = por %p230, %p231
      %p234 = scmp.ne.s32.totalorder %s219, %s233
      %p235 = scmp.eq.s32.totalorder %s36, 0
      %p236 = por %p234, %p235
      %s238 = sadd.s32 %s237, 1
      %p241 = scmp.eq.s32.totalorder %s30, 1
      %p242 = scmp.ne.s32.totalorder %s237, %s239
      %p243 = scmp.eq.s32.totalorder %s30, 0
      %p244 = por %p242, %p243
      %p245 = scmp.ne.s32.totalorder %s237, %s239
      %p246 = scmp.eq.s32.totalorder %s35, 1
      %p247 = por %p245, %p246
      %p248 = scmp.ne.s32.totalorder %s239, %s240
      %p249 = scmp.eq.s32.totalorder %s35, 0
      %p250 = por %p248, %p249
      %p251 = scmp.ne.s32.totalorder %s239, %s240
      %p252 = scmp.eq.s32.totalorder %s36, 1
      %p253 = por %p251, %p252
      %p255 = scmp.ne.s32.totalorder %s240, %s254
      %p256 = scmp.eq.s32.totalorder %s36, 0
      %p257 = por %p255, %p256
      %s259 = sadd.s32 %s258, 1
      %p262 = scmp.eq.s32.totalorder %s30, 1
      %p263 = scmp.ne.s32.totalorder %s258, %s260
      %p264 = scmp.eq.s32.totalorder %s30, 0
      %p265 = por %p263, %p264
      %p266 = scmp.ne.s32.totalorder %s258, %s260
      %p267 = scmp.eq.s32.totalorder %s35, 1
      %p268 = por %p266, %p267
      %p269 = scmp.ne.s32.totalorder %s260, %s261
      %p270 = scmp.eq.s32.totalorder %s35, 0
      %p271 = por %p269, %p270
      %p272 = scmp.ne.s32.totalorder %s260, %s261
      %p273 = scmp.eq.s32.totalorder %s36, 1
      %p274 = por %p272, %p273
      %p276 = scmp.ne.s32.totalorder %s261, %s275
      %p277 = scmp.eq.s32.totalorder %s36, 0
      %p278 = por %p276, %p277
      %s280 = sadd.s32 %s279, 1
      %p283 = scmp.eq.s32.totalorder %s30, 1
      %p284 = scmp.ne.s32.totalorder %s279, %s281
      %p285 = scmp.eq.s32.totalorder %s30, 0
      %p286 = por %p284, %p285
      %p287 = scmp.ne.s32.totalorder %s279, %s281
      %p288 = scmp.eq.s32.totalorder %s35, 1
      %p289 = por %p287, %p288
      %p290 = scmp.ne.s32.totalorder %s281, %s282
      %p291 = scmp.eq.s32.totalorder %s35, 0
      %p292 = por %p290, %p291
      %p293 = scmp.ne.s32.totalorder %s281, %s282
      %p294 = scmp.eq.s32.totalorder %s36, 1
      %p295 = por %p293, %p294
      %p297 = scmp.ne.s32.totalorder %s282, %s296
      %p298 = scmp.eq.s32.totalorder %s36, 0
      %p299 = por %p297, %p298
      %s301 = sadd.s32 %s300, 1
      %p304 = scmp.eq.s32.totalorder %s30, 1
      %p305 = scmp.ne.s32.totalorder %s300, %s302
      %p306 = scmp.eq.s32.totalorder %s30, 0
      %p307 = por %p305, %p306
      %p308 = scmp.ne.s32.totalorder %s300, %s302
      %p309 = scmp.eq.s32.totalorder %s35, 1
      %p310 = por %p308, %p309
      %p311 = scmp.ne.s32.totalorder %s302, %s303
      %p312 = scmp.eq.s32.totalorder %s35, 0
      %p313 = por %p311, %p312
      %p314 = scmp.ne.s32.totalorder %s302, %s303
      %p315 = scmp.eq.s32.totalorder %s36, 1
      %p316 = por %p314, %p315
      %p318 = scmp.ne.s32.totalorder %s303, %s317
      %p319 = scmp.eq.s32.totalorder %s36, 0
      %p320 = por %p318, %p319
      %s322 = sadd.s32 %s321, 1
      %p325 = scmp.eq.s32.totalorder %s30, 1
      %p326 = scmp.ne.s32.totalorder %s321, %s323
      %p327 = scmp.eq.s32.totalorder %s30, 0
      %p328 = por %p326, %p327
      %p329 = scmp.ne.s32.totalorder %s321, %s323
      %p330 = scmp.eq.s32.totalorder %s35, 1
      %p331 = por %p329, %p330
      %p332 = scmp.ne.s32.totalorder %s323, %s324
      %p333 = scmp.eq.s32.totalorder %s35, 0
      %p334 = por %p332, %p333
      %p335 = scmp.ne.s32.totalorder %s323, %s324
      %p336 = scmp.eq.s32.totalorder %s36, 1
      %p337 = por %p335, %p336
      %p339 = scmp.ne.s32.totalorder %s324, %s338
      %p340 = scmp.eq.s32.totalorder %s36, 0
      %p341 = por %p339, %p340
      %s342 = ssub.s32 %s30, %s37
      %p343 = scmp.eq.s32.totalorder %s342, 0
      %s345 = sadd.s32 %s344, 1
      %s346 = scalar_select %p343, %s344, %s345
      %p349 = pneg %p343
      %p350 = scmp.eq.s32.totalorder %s30, 1
      %p351 = por %p349, %p350
      %p352 = scmp.ne.s32.totalorder %s344, %s347
      %p353 = scmp.eq.s32.totalorder %s30, 0
      %p354 = por %p352, %p353
      %p355 = scmp.ne.s32.totalorder %s344, %s347
      %p356 = scmp.eq.s32.totalorder %s35, 1
      %p357 = por %p355, %p356
      %p358 = scmp.ne.s32.totalorder %s347, %s348
      %p359 = scmp.eq.s32.totalorder %s35, 0
      %p360 = por %p358, %p359
      %p361 = scmp.ne.s32.totalorder %s347, %s348
      %p362 = scmp.eq.s32.totalorder %s36, 1
      %p363 = por %p361, %p362
      %p365 = scmp.ne.s32.totalorder %s348, %s364
      %p366 = scmp.eq.s32.totalorder %s36, 0
      %p367 = por %p365, %p366
      %s369 = sadd.s32 %s368, 1
      %p372 = scmp.eq.s32.totalorder %s30, 1
      %p373 = scmp.ne.s32.totalorder %s368, %s370
      %p374 = scmp.eq.s32.totalorder %s30, 0
      %p375 = por %p373, %p374
      %p376 = scmp.ne.s32.totalorder %s368, %s370
      %p377 = scmp.eq.s32.totalorder %s35, 1
      %p378 = por %p376, %p377
      %p379 = scmp.ne.s32.totalorder %s370, %s371
      %p380 = scmp.eq.s32.totalorder %s35, 0
      %p381 = por %p379, %p380
      %p382 = scmp.ne.s32.totalorder %s370, %s371
      %p383 = scmp.eq.s32.totalorder %s36, 1
      %p384 = por %p382, %p383
      %p386 = scmp.ne.s32.totalorder %s371, %s385
      %p387 = scmp.eq.s32.totalorder %s36, 0
      %p388 = por %p386, %p387
      %p389 = scmp.le.s32.totalorder 1, %s30
      %p390 = scmp.lt.s32.totalorder %s30, 3
      %p391 = pnand %p389, %p390
      %p392 = pneg %p391
      // Predicated region
      $region9: #{discriminator_forward.1} parent=5 // pred_check
        _
      $region10: #{discriminator_forward.1} parent=5 // pred_check_branch
        %394 = sbr.rel (%p391) target = $region12
      $region11: #{discriminator_forward.1} parent=5 // pred_region
        %s395 = ssub.s32 %s30, 1
        // Predicated region
        $region13: #{discriminator_forward.1} parent=11 // pred_check
          %p396 = pneg %p103
        $region14: #{discriminator_forward.1} parent=11 // pred_check_branch
          %398 = sbr.rel (%p396) target = $region16
        $region15: #{discriminator_forward.1} parent=11 // pred_region
          _
        $region16: #{discriminator_forward.1} parent=11 // pred_fallthru
          _
        // Predicated region
        $region17: #{discriminator_forward.1} parent=11 // pred_check
          %p399 = pneg %p124
        $region18: #{discriminator_forward.1} parent=11 // pred_check_branch
          %401 = sbr.rel (%p399) target = $region20
        $region19: #{discriminator_forward.1} parent=11 // pred_region
          %403 = vsyncadd [#allocation6], 0
          %s404 = sshll.u32 %s3, 4
          %s405 = int_to_ptr.hbm [resolvable:$true] %s404
          %s406 = sshll.u32 [#allocation5], 4
          %s407 = int_to_ptr.vmem [resolvable:$true] %s406
          %412 = dma.hbm_to_vmem [thread:$0]  %s405, 25088, %s407, [#allocation6], 256, 256, 16
        $region20: #{discriminator_forward.1} parent=11 // pred_fallthru
          _
        // Predicated region
        $region21: #{discriminator_forward.1} parent=11 // pred_check
          %p413 = pneg %p145
        $region22: #{discriminator_forward.1} parent=11 // pred_check_branch
          %415 = sbr.rel (%p413) target = $region24
        $region23: #{discriminator_forward.1} parent=11 // pred_region
          _
        $region24: #{discriminator_forward.1} parent=11 // pred_fallthru
          _
        // Predicated region
        $region25: #{discriminator_forward.1} parent=11 // pred_check
          %p416 = pneg %p166
        $region26: #{discriminator_forward.1} parent=11 // pred_check_branch
          %418 = sbr.rel (%p416) target = $region28
        $region27: #{discriminator_forward.1} parent=11 // pred_region
          _
        $region28: #{discriminator_forward.1} parent=11 // pred_fallthru
          _
        // Predicated region
        $region29: #{discriminator_forward.1} parent=11 // pred_check
          %p419 = pneg %p187
        $region30: #{discriminator_forward.1} parent=11 // pred_check_branch
          %421 = sbr.rel (%p419) target = $region32
        $region31: #{discriminator_forward.1} parent=11 // pred_region
          %423 = vsyncadd [#allocation6], 0
          %s424 = sshll.u32 %s6, 4
          %s425 = int_to_ptr.hbm [resolvable:$true] %s424
          %s426 = sshll.u32 [#allocation7], 4
          %s427 = int_to_ptr.vmem [resolvable:$true] %s426
          %432 = dma.hbm_to_vmem [thread:$0]  %s425, 4096, %s427, [#allocation6], 64, 64, 4
        $region32: #{discriminator_forward.1} parent=11 // pred_fallthru
          _
        // Predicated region
        $region33: #{discriminator_forward.1} parent=11 // pred_check
          %p433 = pneg %p208
        $region34: #{discriminator_forward.1} parent=11 // pred_check_branch
          %435 = sbr.rel (%p433) target = $region36
        $region35: #{discriminator_forward.1} parent=11 // pred_region
          _
        $region36: #{discriminator_forward.1} parent=11 // pred_fallthru
          _
        // Predicated region
        $region37: #{discriminator_forward.1} parent=11 // pred_check
          %p436 = pneg %p229
        $region38: #{discriminator_forward.1} parent=11 // pred_check_branch
          %438 = sbr.rel (%p436) target = $region40
        $region39: #{discriminator_forward.1} parent=11 // pred_region
          %440 = vsyncadd [#allocation9], 0
          %s441 = sshll.u32 %s8, 4
          %s442 = int_to_ptr.hbm [resolvable:$true] %s441
          %s443 = sshll.u32 [#allocation8], 4
          %s444 = int_to_ptr.vmem [resolvable:$true] %s443
          %449 = dma.hbm_to_vmem [thread:$0]  %s442, 4096, %s444, [#allocation9], 256, 256, 16
        $region40: #{discriminator_forward.1} parent=11 // pred_fallthru
          _
        // Predicated region
        $region41: #{discriminator_forward.1} parent=11 // pred_check
          %p450 = pneg %p250
        $region42: #{discriminator_forward.1} parent=11 // pred_check_branch
          %452 = sbr.rel (%p450) target = $region44
        $region43: #{discriminator_forward.1} parent=11 // pred_region
          %454 = vsyncadd [#allocation9], 0
          %s456 = sshll.u32 %s9, 4
          %s457 = int_to_ptr.hbm [resolvable:$true] %s456
          %s458 = sshll.u32 [#allocation10], 4
          %s459 = int_to_ptr.vmem [resolvable:$true] %s458
          %461 = dma.hbm_to_vmem [thread:$0]  %s457, 64, %s459, [#allocation9]
        $region44: #{discriminator_forward.1} parent=11 // pred_fallthru
          _
        // Predicated region
        $region45: #{discriminator_forward.1} parent=11 // pred_check
          %p462 = pneg %p271
        $region46: #{discriminator_forward.1} parent=11 // pred_check_branch
          %464 = sbr.rel (%p462) target = $region48
        $region47: #{discriminator_forward.1} parent=11 // pred_region
          %466 = vsyncadd [#allocation12], 0
          %s467 = sshll.u32 %s10, 4
          %s468 = int_to_ptr.hbm [resolvable:$true] %s467
          %s469 = sshll.u32 [#allocation11], 4
          %s470 = int_to_ptr.vmem [resolvable:$true] %s469
          %475 = dma.hbm_to_vmem [thread:$0]  %s468, 4096, %s470, [#allocation12], 64, 64, 4
        $region48: #{discriminator_forward.1} parent=11 // pred_fallthru
          _
        // Predicated region
        $region49: #{discriminator_forward.1} parent=11 // pred_check
          %p476 = pneg %p292
        $region50: #{discriminator_forward.1} parent=11 // pred_check_branch
          %478 = sbr.rel (%p476) target = $region52
        $region51: #{discriminator_forward.1} parent=11 // pred_region
          _
        $region52: #{discriminator_forward.1} parent=11 // pred_fallthru
          _
        // Predicated region
        $region53: #{discriminator_forward.1} parent=11 // pred_check
          %p479 = pneg %p313
        $region54: #{discriminator_forward.1} parent=11 // pred_check_branch
          %481 = sbr.rel (%p479) target = $region56
        $region55: #{discriminator_forward.1} parent=11 // pred_region
          _
        $region56: #{discriminator_forward.1} parent=11 // pred_fallthru
          _
        // Predicated region
        $region57: #{discriminator_forward.1} parent=11 // pred_check
          %p482 = pneg %p334
        $region58: #{discriminator_forward.1} parent=11 // pred_check_branch
          %484 = sbr.rel (%p482) target = $region60
        $region59: #{discriminator_forward.1} parent=11 // pred_region
          _
        $region60: #{discriminator_forward.1} parent=11 // pred_fallthru
          _
      $region12: #{discriminator_forward.1} parent=5 // pred_fallthru
        _
      %p485 = scmp.lt.s32.totalorder %s30, 2
      // Predicated region
      $region61: #{discriminator_forward.1} parent=5 // pred_check
        %p486 = pneg %p485
      $region62: #{discriminator_forward.1} parent=5 // pred_check_branch
        %488 = sbr.rel (%p486) target = $region64
      $region63: #{discriminator_forward.1} parent=5 // pred_region
        // Predicated region
        $region65: #{discriminator_forward.1} parent=63 // pred_check
          %p489 = pneg %p50
        $region66: #{discriminator_forward.1} parent=63 // pred_check_branch
          %491 = sbr.rel (%p489) target = $region68
        $region67: #{discriminator_forward.1} parent=63 // pred_region
          %s492 = sand.u32 %s40, 1
          %s493 = scalar_lea.sflag [#allocation4], %s492
          %s494 = sand.u32 %s40, 1
          %s495 = smul.addr %s494, 56
          %s496 = scalar_lea.vmem [#allocation3], %s495
          %498 = vsyncadd %s493, 0
          %s499 = smul.addr %s30, 7
          %s500 = smul.addr %s499, 8
          %s501 = scalar_lea.hbm %s0, %s500
          %s503 = sshll.u32 %s501, 4
          %s504 = int_to_ptr.hbm [resolvable:$true] %s503
          %s505 = sshll.u32 %s496, 4
          %s506 = int_to_ptr.vmem [resolvable:$true] %s505
          %508 = dma.hbm_to_vmem [thread:$0]  %s504, 896, %s506, %s493
        $region68: #{discriminator_forward.1} parent=63 // pred_fallthru
          _
        // Predicated region
        $region69: #{discriminator_forward.1} parent=63 // pred_check
          %p509 = pneg %p76
        $region70: #{discriminator_forward.1} parent=63 // pred_check_branch
          %511 = sbr.rel (%p509) target = $region72
        $region71: #{discriminator_forward.1} parent=63 // pred_region
          %p512 = scmp.lt.s32.totalorder %s30, 1
          %s513 = scalar_select %p512, %s30, 1
          %s514 = smul.addr %s513, 8
          %s515 = scalar_lea.vmem %s1, %s514
        $region72: #{discriminator_forward.1} parent=63 // pred_fallthru
          _
      $region64: #{discriminator_forward.1} parent=5 // pred_fallthru
        _
      %p516 = scmp.le.s32.totalorder 1, %s30
      %p517 = scmp.lt.s32.totalorder %s30, 3
      %p518 = pnand %p516, %p517
      %p519 = pneg %p518
      // Predicated region
      $region73: #{discriminator_forward.1} parent=5 // pred_check
        _
      $region74: #{discriminator_forward.1} parent=5 // pred_check_branch
        %521 = sbr.rel (%p518) target = $region76
      $region75: #{discriminator_forward.1} parent=5 // pred_region
        %s522 = ssub.s32 %s30, 1
        %s523 = sand.u32 %s43, 1
        %s524 = scalar_lea.sflag [#allocation4], %s523
        %s525 = sand.u32 %s43, 1
        %s526 = smul.addr %s525, 56
        %s527 = scalar_lea.vmem [#allocation3], %s526
        // Predicated region
        $region77: #{discriminator_forward.1} parent=75 // pred_check
          %p528 = pneg %p56
        $region78: #{discriminator_forward.1} parent=75 // pred_check_branch
          %530 = sbr.rel (%p528) target = $region80
        $region79: #{discriminator_forward.1} parent=75 // pred_region
          %532 = dma.done %s524, 896
        $region80: #{discriminator_forward.1} parent=75 // pred_fallthru
          _
        // Predicated region
        $region81: #{discriminator_forward.1} parent=75 // pred_check
          %p533 = pneg %p124
        $region82: #{discriminator_forward.1} parent=75 // pred_check_branch
          %535 = sbr.rel (%p533) target = $region84
        $region83: #{discriminator_forward.1} parent=75 // pred_region
          %537 = dma.done [#allocation6], 25088
        $region84: #{discriminator_forward.1} parent=75 // pred_fallthru
          _
        // Predicated region
        $region85: #{discriminator_forward.1} parent=75 // pred_check
          %p538 = pneg %p187
        $region86: #{discriminator_forward.1} parent=75 // pred_check_branch
          %540 = sbr.rel (%p538) target = $region88
        $region87: #{discriminator_forward.1} parent=75 // pred_region
          %542 = dma.done [#allocation6], 4096
        $region88: #{discriminator_forward.1} parent=75 // pred_fallthru
          _
        // Predicated region
        $region89: #{discriminator_forward.1} parent=75 // pred_check
          %p543 = pneg %p229
        $region90: #{discriminator_forward.1} parent=75 // pred_check_branch
          %545 = sbr.rel (%p543) target = $region92
        $region91: #{discriminator_forward.1} parent=75 // pred_region
          %547 = dma.done [#allocation9], 4096
        $region92: #{discriminator_forward.1} parent=75 // pred_fallthru
          _
        // Predicated region
        $region93: #{discriminator_forward.1} parent=75 // pred_check
          %p548 = pneg %p250
        $region94: #{discriminator_forward.1} parent=75 // pred_check_branch
          %550 = sbr.rel (%p548) target = $region96
        $region95: #{discriminator_forward.1} parent=75 // pred_region
          %552 = dma.done [#allocation9], 64
        $region96: #{discriminator_forward.1} parent=75 // pred_fallthru
          _
        // Predicated region
        $region97: #{discriminator_forward.1} parent=75 // pred_check
          %p553 = pneg %p271
        $region98: #{discriminator_forward.1} parent=75 // pred_check_branch
          %555 = sbr.rel (%p553) target = $region100
        $region99: #{discriminator_forward.1} parent=75 // pred_region
          %557 = dma.done [#allocation12], 4096
        $region100: #{discriminator_forward.1} parent=75 // pred_fallthru
          _
        %s558 = sand.u32 %s43, 1
        %s559 = scalar_lea.sflag [#allocation4], %s558
        %s560 = sand.u32 %s43, 1
        %s561 = smul.addr %s560, 56
        %s562 = scalar_lea.vmem [#allocation3], %s561
        %p563 = pneg %p56
        %p564 = pneg %p53
        %p565 = scmp.lt.s32.totalorder %s35, 1
        %s566 = scalar_select %p565, %s35, 1
        %s567 = smul.addr %s566, 8
        %s568 = scalar_lea.vmem %s1, %s567
        %p569 = pneg %p82
        %p570 = pneg %p79
        %p571 = pneg %p103
        %p572 = pneg %p100
        %p573 = pneg %p124
        %p574 = pneg %p121
        %p575 = pneg %p145
        %p576 = pneg %p142
        %p577 = pneg %p166
        %p578 = pneg %p163
        %p579 = pneg %p187
        %p580 = pneg %p184
        %p581 = pneg %p208
        %p582 = pneg %p205
        %p583 = pneg %p229
        %p584 = pneg %p226
        %p585 = pneg %p250
        %p586 = pneg %p247
        %p587 = pneg %p271
        %p588 = pneg %p268
        %p589 = pneg %p292
        %p590 = pneg %p289
        %p591 = pneg %p313
        %p592 = pneg %p310
        %p593 = pneg %p334
        %p594 = pneg %p331
        %p595 = pneg %p360
        %p596 = pneg %p357
        %p597 = scmp.lt.s32.totalorder %s35, 1
        %s598 = scalar_select %p597, %s35, 1
        %s599 = smul.addr %s598, 8
        %s600 = scalar_lea.vmem %s14, %s599
        %p601 = pneg %p381
        %p602 = pneg %p378
        %p603 = scmp.lt.s32.totalorder %s35, 1
        %s604 = scalar_select %p603, %s35, 1
        %s605 = smul.addr %s604, 8
        %s606 = scalar_lea.vmem %s1, %s605
        %p607 = scmp.lt.s32.totalorder %s35, 1
        %s608 = scalar_select %p607, %s35, 1
        %s609 = smul.addr %s608, 8
        %s610 = scalar_lea.vmem %s14, %s609
        %v612 = vld [vmem:[%s527] sm:$0xff]
        %v613 = vld [vmem:[%s527 + $0x8] sm:$0xff]
        %v614 = vld [vmem:[%s527 + $0x10] sm:$0xff]
        %v615 = vld [vmem:[%s527 + $0x18] sm:$0xff]
        %v616 = vld [vmem:[%s527 + $0x20] sm:$0xff]
        %v617 = vld [vmem:[%s527 + $0x28] sm:$0xff]
        %v618 = vld [vmem:[%s527 + $0x30] sm:$0xff]
        %v619 = vpack.c.bf16 %v612, %v612
        %v620 = vpack.c.bf16 %v613, %v613
        %v621 = vpack.c.bf16 %v614, %v614
        %v622 = vpack.c.bf16 %v615, %v615
        %v623 = vpack.c.bf16 %v616, %v616
        %v624 = vpack.c.bf16 %v617, %v617
        %v625 = vpack.c.bf16 %v618, %v618
        %v626 = vld [vmem:[%s606] sm:$0xff]
        %v627 = vld [vmem:[%s2] sm:$0xff]
        %v628 = vld [vmem:[%s2 + $0x8] sm:$0x3]
        %v629 = vld [vmem:[#allocation5] sm:$0xff]
        %v630 = vld [vmem:[#allocation5 + $0x8] sm:$0xff]
        %v631 = vld [vmem:[#allocation5 + $0x10] sm:$0xff]
        %v632 = vld [vmem:[#allocation5 + $0x18] sm:$0xff]
        %v633 = vld [vmem:[#allocation5 + $0x20] sm:$0xff]
        %v634 = vld [vmem:[#allocation5 + $0x28] sm:$0xff]
        %v635 = vld [vmem:[#allocation5 + $0x30] sm:$0xff]
        %v636 = vld [vmem:[#allocation5 + $0x38] sm:$0xff]
        %v637 = vld [vmem:[#allocation5 + $0x40] sm:$0xff]
        %v638 = vld [vmem:[#allocation5 + $0x48] sm:$0xff]
        %v639 = vld [vmem:[#allocation5 + $0x50] sm:$0xff]
        %v640 = vld [vmem:[#allocation5 + $0x58] sm:$0xff]
        %v641 = vld [vmem:[#allocation5 + $0x60] sm:$0xff]
        %v642 = vld [vmem:[#allocation5 + $0x68] sm:$0xff]
        %v643 = vld [vmem:[#allocation5 + $0x70] sm:$0xff]
        %v644 = vld [vmem:[#allocation5 + $0x78] sm:$0xff]
        %v645 = vld [vmem:[#allocation5 + $0x80] sm:$0xff]
        %v646 = vld [vmem:[#allocation5 + $0x88] sm:$0xff]
        %v647 = vld [vmem:[#allocation5 + $0x90] sm:$0xff]
        %v648 = vld [vmem:[#allocation5 + $0x98] sm:$0xff]
        %v649 = vld [vmem:[#allocation5 + $0xa0] sm:$0xff]
        %v650 = vld [vmem:[#allocation5 + $0xa8] sm:$0xff]
        %v651 = vld [vmem:[#allocation5 + $0xb0] sm:$0xff]
        %v652 = vld [vmem:[#allocation5 + $0xb8] sm:$0xff]
        %v653 = vld [vmem:[#allocation5 + $0xc0] sm:$0xff]
        %v654 = vld [vmem:[#allocation5 + $0xc8] sm:$0xff]
        %v655 = vld [vmem:[#allocation5 + $0xd0] sm:$0xff]
        %v656 = vld [vmem:[#allocation5 + $0xd8] sm:$0xff]
        %v657 = vld [vmem:[#allocation5 + $0xe0] sm:$0xff]
        %v658 = vld [vmem:[#allocation5 + $0xe8] sm:$0xff]
        %v659 = vld [vmem:[#allocation5 + $0xf0] sm:$0xff]
        %v660 = vld [vmem:[#allocation5 + $0xf8] sm:$0xff]
        %v661 = vld [vmem:[#allocation5 + $0x100] sm:$0xff]
        %v662 = vld [vmem:[#allocation5 + $0x108] sm:$0xff]
        %v663 = vld [vmem:[#allocation5 + $0x110] sm:$0xff]
        %v664 = vld [vmem:[#allocation5 + $0x118] sm:$0xff]
        %v665 = vld [vmem:[#allocation5 + $0x120] sm:$0xff]
        %v666 = vld [vmem:[#allocation5 + $0x128] sm:$0xff]
        %v667 = vld [vmem:[#allocation5 + $0x130] sm:$0xff]
        %v668 = vld [vmem:[#allocation5 + $0x138] sm:$0xff]
        %v669 = vld [vmem:[#allocation5 + $0x140] sm:$0xff]
        %v670 = vld [vmem:[#allocation5 + $0x148] sm:$0xff]
        %v671 = vld [vmem:[#allocation5 + $0x150] sm:$0xff]
        %v672 = vld [vmem:[#allocation5 + $0x158] sm:$0xff]
        %v673 = vld [vmem:[#allocation5 + $0x160] sm:$0xff]
        %v674 = vld [vmem:[#allocation5 + $0x168] sm:$0xff]
        %v675 = vld [vmem:[#allocation5 + $0x170] sm:$0xff]
        %v676 = vld [vmem:[#allocation5 + $0x178] sm:$0xff]
        %v677 = vld [vmem:[#allocation5 + $0x180] sm:$0xff]
        %v678 = vld [vmem:[#allocation5 + $0x188] sm:$0xff]
        %v679 = vld [vmem:[#allocation5 + $0x190] sm:$0xff]
        %v680 = vld [vmem:[#allocation5 + $0x198] sm:$0xff]
        %v681 = vld [vmem:[#allocation5 + $0x1a0] sm:$0xff]
        %v682 = vld [vmem:[#allocation5 + $0x1a8] sm:$0xff]
        %v683 = vld [vmem:[#allocation5 + $0x1b0] sm:$0xff]
        %v684 = vld [vmem:[#allocation5 + $0x1b8] sm:$0xff]
        %v685 = vld [vmem:[#allocation5 + $0x1c0] sm:$0xff]
        %v686 = vld [vmem:[#allocation5 + $0x1c8] sm:$0xff]
        %v687 = vld [vmem:[#allocation5 + $0x1d0] sm:$0xff]
        %v688 = vld [vmem:[#allocation5 + $0x1d8] sm:$0xff]
        %v689 = vld [vmem:[#allocation5 + $0x1e0] sm:$0xff]
        %v690 = vld [vmem:[#allocation5 + $0x1e8] sm:$0xff]
        %v691 = vld [vmem:[#allocation5 + $0x1f0] sm:$0xff]
        %v692 = vld [vmem:[#allocation5 + $0x1f8] sm:$0xff]
        %v693 = vld [vmem:[#allocation5 + $0x200] sm:$0xff]
        %v694 = vld [vmem:[#allocation5 + $0x208] sm:$0xff]
        %v695 = vld [vmem:[#allocation5 + $0x210] sm:$0xff]
        %v696 = vld [vmem:[#allocation5 + $0x218] sm:$0xff]
        %v697 = vld [vmem:[#allocation5 + $0x220] sm:$0xff]
        %v698 = vld [vmem:[#allocation5 + $0x228] sm:$0xff]
        %v699 = vld [vmem:[#allocation5 + $0x230] sm:$0xff]
        %v700 = vld [vmem:[#allocation5 + $0x238] sm:$0xff]
        %v701 = vld [vmem:[#allocation5 + $0x240] sm:$0xff]
        %v702 = vld [vmem:[#allocation5 + $0x248] sm:$0xff]
        %v703 = vld [vmem:[#allocation5 + $0x250] sm:$0xff]
        %v704 = vld [vmem:[#allocation5 + $0x258] sm:$0xff]
        %v705 = vld [vmem:[#allocation5 + $0x260] sm:$0xff]
        %v706 = vld [vmem:[#allocation5 + $0x268] sm:$0xff]
        %v707 = vld [vmem:[#allocation5 + $0x270] sm:$0xff]
        %v708 = vld [vmem:[#allocation5 + $0x278] sm:$0xff]
        %v709 = vld [vmem:[#allocation5 + $0x280] sm:$0xff]
        %v710 = vld [vmem:[#allocation5 + $0x288] sm:$0xff]
        %v711 = vld [vmem:[#allocation5 + $0x290] sm:$0xff]
        %v712 = vld [vmem:[#allocation5 + $0x298] sm:$0xff]
        %v713 = vld [vmem:[#allocation5 + $0x2a0] sm:$0xff]
        %v714 = vld [vmem:[#allocation5 + $0x2a8] sm:$0xff]
        %v715 = vld [vmem:[#allocation5 + $0x2b0] sm:$0xff]
        %v716 = vld [vmem:[#allocation5 + $0x2b8] sm:$0xff]
        %v717 = vld [vmem:[#allocation5 + $0x2c0] sm:$0xff]
        %v718 = vld [vmem:[#allocation5 + $0x2c8] sm:$0xff]
        %v719 = vld [vmem:[#allocation5 + $0x2d0] sm:$0xff]
        %v720 = vld [vmem:[#allocation5 + $0x2d8] sm:$0xff]
        %v721 = vld [vmem:[#allocation5 + $0x2e0] sm:$0xff]
        %v722 = vld [vmem:[#allocation5 + $0x2e8] sm:$0xff]
        %v723 = vld [vmem:[#allocation5 + $0x2f0] sm:$0xff]
        %v724 = vld [vmem:[#allocation5 + $0x2f8] sm:$0xff]
        %v725 = vld [vmem:[#allocation5 + $0x300] sm:$0xff]
        %v726 = vld [vmem:[#allocation5 + $0x308] sm:$0xff]
        %v727 = vld [vmem:[#allocation5 + $0x310] sm:$0xff]
        %v728 = vld [vmem:[#allocation5 + $0x318] sm:$0xff]
        %v729 = vld [vmem:[#allocation5 + $0x320] sm:$0xff]
        %v730 = vld [vmem:[#allocation5 + $0x328] sm:$0xff]
        %v731 = vld [vmem:[#allocation5 + $0x330] sm:$0xff]
        %v732 = vld [vmem:[#allocation5 + $0x338] sm:$0xff]
        %v733 = vld [vmem:[#allocation5 + $0x340] sm:$0xff]
        %v734 = vld [vmem:[#allocation5 + $0x348] sm:$0xff]
        %v735 = vld [vmem:[#allocation5 + $0x350] sm:$0xff]
        %v736 = vld [vmem:[#allocation5 + $0x358] sm:$0xff]
        %v737 = vld [vmem:[#allocation5 + $0x360] sm:$0xff]
        %v738 = vld [vmem:[#allocation5 + $0x368] sm:$0xff]
        %v739 = vld [vmem:[#allocation5 + $0x370] sm:$0xff]
        %v740 = vld [vmem:[#allocation5 + $0x378] sm:$0xff]
        %v741 = vld [vmem:[#allocation5 + $0x380] sm:$0xff]
        %v742 = vld [vmem:[#allocation5 + $0x388] sm:$0xff]
        %v743 = vld [vmem:[#allocation5 + $0x390] sm:$0xff]
        %v744 = vld [vmem:[#allocation5 + $0x398] sm:$0xff]
        %v745 = vld [vmem:[#allocation5 + $0x3a0] sm:$0xff]
        %v746 = vld [vmem:[#allocation5 + $0x3a8] sm:$0xff]
        %v747 = vld [vmem:[#allocation5 + $0x3b0] sm:$0xff]
        %v748 = vld [vmem:[#allocation5 + $0x3b8] sm:$0xff]
        %v749 = vld [vmem:[#allocation5 + $0x3c0] sm:$0xff]
        %v750 = vld [vmem:[#allocation5 + $0x3c8] sm:$0xff]
        %v751 = vld [vmem:[#allocation5 + $0x3d0] sm:$0xff]
        %v752 = vld [vmem:[#allocation5 + $0x3d8] sm:$0xff]
        %v753 = vld [vmem:[#allocation5 + $0x3e0] sm:$0xff]
        %v754 = vld [vmem:[#allocation5 + $0x3e8] sm:$0xff]
        %v755 = vld [vmem:[#allocation5 + $0x3f0] sm:$0xff]
        %v756 = vld [vmem:[#allocation5 + $0x3f8] sm:$0xff]
        %v757 = vld [vmem:[#allocation5 + $0x400] sm:$0xff]
        %v758 = vld [vmem:[#allocation5 + $0x408] sm:$0xff]
        %v759 = vld [vmem:[#allocation5 + $0x410] sm:$0xff]
        %v760 = vld [vmem:[#allocation5 + $0x418] sm:$0xff]
        %v761 = vld [vmem:[#allocation5 + $0x420] sm:$0xff]
        %v762 = vld [vmem:[#allocation5 + $0x428] sm:$0xff]
        %v763 = vld [vmem:[#allocation5 + $0x430] sm:$0xff]
        %v764 = vld [vmem:[#allocation5 + $0x438] sm:$0xff]
        %v765 = vld [vmem:[#allocation5 + $0x440] sm:$0xff]
        %v766 = vld [vmem:[#allocation5 + $0x448] sm:$0xff]
        %v767 = vld [vmem:[#allocation5 + $0x450] sm:$0xff]
        %v768 = vld [vmem:[#allocation5 + $0x458] sm:$0xff]
        %v769 = vld [vmem:[#allocation5 + $0x460] sm:$0xff]
        %v770 = vld [vmem:[#allocation5 + $0x468] sm:$0xff]
        %v771 = vld [vmem:[#allocation5 + $0x470] sm:$0xff]
        %v772 = vld [vmem:[#allocation5 + $0x478] sm:$0xff]
        %v773 = vld [vmem:[#allocation5 + $0x480] sm:$0xff]
        %v774 = vld [vmem:[#allocation5 + $0x488] sm:$0xff]
        %v775 = vld [vmem:[#allocation5 + $0x490] sm:$0xff]
        %v776 = vld [vmem:[#allocation5 + $0x498] sm:$0xff]
        %v777 = vld [vmem:[#allocation5 + $0x4a0] sm:$0xff]
        %v778 = vld [vmem:[#allocation5 + $0x4a8] sm:$0xff]
        %v779 = vld [vmem:[#allocation5 + $0x4b0] sm:$0xff]
        %v780 = vld [vmem:[#allocation5 + $0x4b8] sm:$0xff]
        %v781 = vld [vmem:[#allocation5 + $0x4c0] sm:$0xff]
        %v782 = vld [vmem:[#allocation5 + $0x4c8] sm:$0xff]
        %v783 = vld [vmem:[#allocation5 + $0x4d0] sm:$0xff]
        %v784 = vld [vmem:[#allocation5 + $0x4d8] sm:$0xff]
        %v785 = vld [vmem:[#allocation5 + $0x4e0] sm:$0xff]
        %v786 = vld [vmem:[#allocation5 + $0x4e8] sm:$0xff]
        %v787 = vld [vmem:[#allocation5 + $0x4f0] sm:$0xff]
        %v788 = vld [vmem:[#allocation5 + $0x4f8] sm:$0xff]
        %v789 = vld [vmem:[#allocation5 + $0x500] sm:$0xff]
        %v790 = vld [vmem:[#allocation5 + $0x508] sm:$0xff]
        %v791 = vld [vmem:[#allocation5 + $0x510] sm:$0xff]
        %v792 = vld [vmem:[#allocation5 + $0x518] sm:$0xff]
        %v793 = vld [vmem:[#allocation5 + $0x520] sm:$0xff]
        %v794 = vld [vmem:[#allocation5 + $0x528] sm:$0xff]
        %v795 = vld [vmem:[#allocation5 + $0x530] sm:$0xff]
        %v796 = vld [vmem:[#allocation5 + $0x538] sm:$0xff]
        %v797 = vld [vmem:[#allocation5 + $0x540] sm:$0xff]
        %v798 = vld [vmem:[#allocation5 + $0x548] sm:$0xff]
        %v799 = vld [vmem:[#allocation5 + $0x550] sm:$0xff]
        %v800 = vld [vmem:[#allocation5 + $0x558] sm:$0xff]
        %v801 = vld [vmem:[#allocation5 + $0x560] sm:$0xff]
        %v802 = vld [vmem:[#allocation5 + $0x568] sm:$0xff]
        %v803 = vld [vmem:[#allocation5 + $0x570] sm:$0xff]
        %v804 = vld [vmem:[#allocation5 + $0x578] sm:$0xff]
        %v805 = vld [vmem:[#allocation5 + $0x580] sm:$0xff]
        %v806 = vld [vmem:[#allocation5 + $0x588] sm:$0xff]
        %v807 = vld [vmem:[#allocation5 + $0x590] sm:$0xff]
        %v808 = vld [vmem:[#allocation5 + $0x598] sm:$0xff]
        %v809 = vld [vmem:[#allocation5 + $0x5a0] sm:$0xff]
        %v810 = vld [vmem:[#allocation5 + $0x5a8] sm:$0xff]
        %v811 = vld [vmem:[#allocation5 + $0x5b0] sm:$0xff]
        %v812 = vld [vmem:[#allocation5 + $0x5b8] sm:$0xff]
        %v813 = vld [vmem:[#allocation5 + $0x5c0] sm:$0xff]
        %v814 = vld [vmem:[#allocation5 + $0x5c8] sm:$0xff]
        %v815 = vld [vmem:[#allocation5 + $0x5d0] sm:$0xff]
        %v816 = vld [vmem:[#allocation5 + $0x5d8] sm:$0xff]
        %v817 = vld [vmem:[#allocation5 + $0x5e0] sm:$0xff]
        %v818 = vld [vmem:[#allocation5 + $0x5e8] sm:$0xff]
        %v819 = vld [vmem:[#allocation5 + $0x5f0] sm:$0xff]
        %v820 = vld [vmem:[#allocation5 + $0x5f8] sm:$0xff]
        %v821 = vld [vmem:[#allocation5 + $0x600] sm:$0xff]
        %v822 = vld [vmem:[#allocation5 + $0x608] sm:$0xff]
        %v823 = vld [vmem:[#allocation5 + $0x610] sm:$0xff]
        %v824 = vld [vmem:[#allocation5 + $0x618] sm:$0xff]
        %v825 = vpack.c.bf16 %v626, %v626
        %v826 = vld [vmem:[%s4] sm:$0xff]
        %v827 = vld [vmem:[%s4 + $0x8] sm:$0xff]
        %v828 = vld [vmem:[%s4 + $0x10] sm:$0x11]
        %v829 = vld [vmem:[%s4 + $0x18] sm:$0x11]
        %v834 = vunpack.c.l.b16 %v826
        %v835 = vunpack.c.h.b16 %v826
        %v836 = vunpack.c.l.b16 %v827
        %v837 = vunpack.c.h.b16 %v827
        %v838 = vunpack.c.l.b16 %v828
        %v839 = vunpack.c.h.b16 %v828
        %v840 = vunpack.c.l.b16 %v829
        %v841 = vunpack.c.h.b16 %v829
        %v842 = vpack.c.b16 %v838, %v834
        %v843 = vpack.c.b16 %v839, %v835
        %v844 = vpack.c.b16 %v840, %v836
        %v845 = vpack.c.b16 %v841, %v837
        %vm846 = vcmask 80896
        %v848 = vsel %vm846, %v825, 0
        %vm850 = vcmask 1044480
        %v852 = vsel %vm850, %v842, 0
        %v855 = vsel %vm850, %v843, 0
        %v858 = vsel %vm850, %v844, 0
        %v861 = vsel %vm850, %v845, 0
        %863 = vmatpush.bf16.msra.mxu0 0
        %864 = vmatpush.bf16.msra.mxu0 0
        %865 = vmatpush.bf16.msra.mxu0 0
        %866 = vmatpush.bf16.msra.mxu0 0
        %867 = vmatpush.bf16.msra.mxu0 0
        %868 = vmatpush.bf16.msra.mxu0 0
        %869 = vmatpush.bf16.msra.mxu0 0
        %870 = vmatpush.bf16.msra.mxu0 %v852
        %871 = vmatmul.bf16.gmra.mxu0 %v848
        %v872 = vpop.f32.mrf.mxu0
        %v873 = vadd.f32 0.0, %v872
        %v874 = vpop.f32.mrf.mxu0
        %875 = vdwg.mxu0
        %876 = vmatpush.bf16.msra.mxu0 0
        %877 = vmatpush.bf16.msra.mxu0 0
        %878 = vmatpush.bf16.msra.mxu0 0
        %879 = vmatpush.bf16.msra.mxu0 0
        %880 = vmatpush.bf16.msra.mxu0 0
        %881 = vmatpush.bf16.msra.mxu0 0
        %882 = vmatpush.bf16.msra.mxu0 0
        %883 = vmatpush.bf16.msra.mxu0 %v855
        %884 = vmatmul.bf16.gmra.mxu0 %v848
        %v885 = vpop.f32.mrf.mxu0
        %v886 = vadd.f32 0.0, %v885
        %v887 = vpop.f32.mrf.mxu0
        %888 = vdwg.mxu0
        %889 = vmatpush.bf16.msra.mxu0 0
        %890 = vmatpush.bf16.msra.mxu0 0
        %891 = vmatpush.bf16.msra.mxu0 0
        %892 = vmatpush.bf16.msra.mxu0 0
        %893 = vmatpush.bf16.msra.mxu0 0
        %894 = vmatpush.bf16.msra.mxu0 0
        %895 = vmatpush.bf16.msra.mxu0 0
        %896 = vmatpush.bf16.msra.mxu0 %v858
        %897 = vmatmul.bf16.gmra.mxu0 %v848
        %v898 = vpop.f32.mrf.mxu0
        %v899 = vadd.f32 0.0, %v898
        %v900 = vpop.f32.mrf.mxu0
        %901 = vdwg.mxu0
        %902 = vmatpush.bf16.msra.mxu0 0
        %903 = vmatpush.bf16.msra.mxu0 0
        %904 = vmatpush.bf16.msra.mxu0 0
        %905 = vmatpush.bf16.msra.mxu0 0
        %906 = vmatpush.bf16.msra.mxu0 0
        %907 = vmatpush.bf16.msra.mxu0 0
        %908 = vmatpush.bf16.msra.mxu0 0
        %909 = vmatpush.bf16.msra.mxu0 %v861
        %910 = vmatmul.bf16.gmra.mxu0 %v848
        %v911 = vpop.f32.mrf.mxu0
        %v912 = vadd.f32 0.0, %v911
        %v913 = vpop.f32.mrf.mxu0
        %914 = vdwg.mxu0
        %v1111 = vunpack.c.l.b16 %v629
        %v1112 = vunpack.c.h.b16 %v629
        %v1113 = vunpack.c.l.b16 %v630
        %v1114 = vunpack.c.h.b16 %v630
        %v1115 = vunpack.c.l.b16 %v631
        %v1116 = vunpack.c.h.b16 %v631
        %v1117 = vunpack.c.l.b16 %v632
        %v1118 = vunpack.c.h.b16 %v632
        %v1119 = vunpack.c.l.b16 %v633
        %v1120 = vunpack.c.h.b16 %v633
        %v1121 = vunpack.c.l.b16 %v634
        %v1122 = vunpack.c.h.b16 %v634
        %v1123 = vunpack.c.l.b16 %v635
        %v1124 = vunpack.c.h.b16 %v635
        %v1125 = vunpack.c.l.b16 %v636
        %v1126 = vunpack.c.h.b16 %v636
        %v1127 = vunpack.c.l.b16 %v637
        %v1128 = vunpack.c.h.b16 %v637
        %v1129 = vunpack.c.l.b16 %v638
        %v1130 = vunpack.c.h.b16 %v638
        %v1131 = vunpack.c.l.b16 %v639
        %v1132 = vunpack.c.h.b16 %v639
        %v1133 = vunpack.c.l.b16 %v640
        %v1134 = vunpack.c.h.b16 %v640
        %v1135 = vunpack.c.l.b16 %v641
        %v1136 = vunpack.c.h.b16 %v641
        %v1137 = vunpack.c.l.b16 %v642
        %v1138 = vunpack.c.h.b16 %v642
        %v1139 = vunpack.c.l.b16 %v643
        %v1140 = vunpack.c.h.b16 %v643
        %v1141 = vunpack.c.l.b16 %v644
        %v1142 = vunpack.c.h.b16 %v644
        %v1143 = vunpack.c.l.b16 %v645
        %v1144 = vunpack.c.h.b16 %v645
        %v1145 = vunpack.c.l.b16 %v646
        %v1146 = vunpack.c.h.b16 %v646
        %v1147 = vunpack.c.l.b16 %v647
        %v1148 = vunpack.c.h.b16 %v647
        %v1149 = vunpack.c.l.b16 %v648
        %v1150 = vunpack.c.h.b16 %v648
        %v1151 = vunpack.c.l.b16 %v649
        %v1152 = vunpack.c.h.b16 %v649
        %v1153 = vunpack.c.l.b16 %v650
        %v1154 = vunpack.c.h.b16 %v650
        %v1155 = vunpack.c.l.b16 %v651
        %v1156 = vunpack.c.h.b16 %v651
        %v1157 = vunpack.c.l.b16 %v652
        %v1158 = vunpack.c.h.b16 %v652
        %v1159 = vunpack.c.l.b16 %v653
        %v1160 = vunpack.c.h.b16 %v653
        %v1161 = vunpack.c.l.b16 %v654
        %v1162 = vunpack.c.h.b16 %v654
        %v1163 = vunpack.c.l.b16 %v655
        %v1164 = vunpack.c.h.b16 %v655
        %v1165 = vunpack.c.l.b16 %v656
        %v1166 = vunpack.c.h.b16 %v656
        %v1167 = vunpack.c.l.b16 %v657
        %v1168 = vunpack.c.h.b16 %v657
        %v1169 = vunpack.c.l.b16 %v658
        %v1170 = vunpack.c.h.b16 %v658
        %v1171 = vunpack.c.l.b16 %v659
        %v1172 = vunpack.c.h.b16 %v659
        %v1173 = vunpack.c.l.b16 %v660
        %v1174 = vunpack.c.h.b16 %v660
        %v1175 = vunpack.c.l.b16 %v661
        %v1176 = vunpack.c.h.b16 %v661
        %v1177 = vunpack.c.l.b16 %v662
        %v1178 = vunpack.c.h.b16 %v662
        %v1179 = vunpack.c.l.b16 %v663
        %v1180 = vunpack.c.h.b16 %v663
        %v1181 = vunpack.c.l.b16 %v664
        %v1182 = vunpack.c.h.b16 %v664
        %v1183 = vunpack.c.l.b16 %v665
        %v1184 = vunpack.c.h.b16 %v665
        %v1185 = vunpack.c.l.b16 %v666
        %v1186 = vunpack.c.h.b16 %v666
        %v1187 = vunpack.c.l.b16 %v667
        %v1188 = vunpack.c.h.b16 %v667
        %v1189 = vunpack.c.l.b16 %v668
        %v1190 = vunpack.c.h.b16 %v668
        %v1191 = vunpack.c.l.b16 %v669
        %v1192 = vunpack.c.h.b16 %v669
        %v1193 = vunpack.c.l.b16 %v670
        %v1194 = vunpack.c.h.b16 %v670
        %v1195 = vunpack.c.l.b16 %v671
        %v1196 = vunpack.c.h.b16 %v671
        %v1197 = vunpack.c.l.b16 %v672
        %v1198 = vunpack.c.h.b16 %v672
        %v1199 = vunpack.c.l.b16 %v673
        %v1200 = vunpack.c.h.b16 %v673
        %v1201 = vunpack.c.l.b16 %v674
        %v1202 = vunpack.c.h.b16 %v674
        %v1203 = vunpack.c.l.b16 %v675
        %v1204 = vunpack.c.h.b16 %v675
        %v1205 = vunpack.c.l.b16 %v676
        %v1206 = vunpack.c.h.b16 %v676
        %v1207 = vunpack.c.l.b16 %v677
        %v1208 = vunpack.c.h.b16 %v677
        %v1209 = vunpack.c.l.b16 %v678
        %v1210 = vunpack.c.h.b16 %v678
        %v1211 = vunpack.c.l.b16 %v679
        %v1212 = vunpack.c.h.b16 %v679
        %v1213 = vunpack.c.l.b16 %v680
        %v1214 = vunpack.c.h.b16 %v680
        %v1215 = vunpack.c.l.b16 %v681
        %v1216 = vunpack.c.h.b16 %v681
        %v1217 = vunpack.c.l.b16 %v682
        %v1218 = vunpack.c.h.b16 %v682
        %v1219 = vunpack.c.l.b16 %v683
        %v1220 = vunpack.c.h.b16 %v683
        %v1221 = vunpack.c.l.b16 %v684
        %v1222 = vunpack.c.h.b16 %v684
        %v1223 = vunpack.c.l.b16 %v685
        %v1224 = vunpack.c.h.b16 %v685
        %v1225 = vunpack.c.l.b16 %v686
        %v1226 = vunpack.c.h.b16 %v686
        %v1227 = vunpack.c.l.b16 %v687
        %v1228 = vunpack.c.h.b16 %v687
        %v1229 = vunpack.c.l.b16 %v688
        %v1230 = vunpack.c.h.b16 %v688
        %v1231 = vunpack.c.l.b16 %v689
        %v1232 = vunpack.c.h.b16 %v689
        %v1233 = vunpack.c.l.b16 %v690
        %v1234 = vunpack.c.h.b16 %v690
        %v1235 = vunpack.c.l.b16 %v691
        %v1236 = vunpack.c.h.b16 %v691
        %v1237 = vunpack.c.l.b16 %v692
        %v1238 = vunpack.c.h.b16 %v692
        %v1239 = vunpack.c.l.b16 %v693
        %v1240 = vunpack.c.h.b16 %v693
        %v1241 = vunpack.c.l.b16 %v694
        %v1242 = vunpack.c.h.b16 %v694
        %v1243 = vunpack.c.l.b16 %v695
        %v1244 = vunpack.c.h.b16 %v695
        %v1245 = vunpack.c.l.b16 %v696
        %v1246 = vunpack.c.h.b16 %v696
        %v1247 = vunpack.c.l.b16 %v697
        %v1248 = vunpack.c.h.b16 %v697
        %v1249 = vunpack.c.l.b16 %v698
        %v1250 = vunpack.c.h.b16 %v698
        %v1251 = vunpack.c.l.b16 %v699
        %v1252 = vunpack.c.h.b16 %v699
        %v1253 = vunpack.c.l.b16 %v700
        %v1254 = vunpack.c.h.b16 %v700
        %v1255 = vunpack.c.l.b16 %v701
        %v1256 = vunpack.c.h.b16 %v701
        %v1257 = vunpack.c.l.b16 %v702
        %v1258 = vunpack.c.h.b16 %v702
        %v1259 = vunpack.c.l.b16 %v703
        %v1260 = vunpack.c.h.b16 %v703
        %v1261 = vunpack.c.l.b16 %v704
        %v1262 = vunpack.c.h.b16 %v704
        %v1263 = vunpack.c.l.b16 %v705
        %v1264 = vunpack.c.h.b16 %v705
        %v1265 = vunpack.c.l.b16 %v706
        %v1266 = vunpack.c.h.b16 %v706
        %v1267 = vunpack.c.l.b16 %v707
        %v1268 = vunpack.c.h.b16 %v707
        %v1269 = vunpack.c.l.b16 %v708
        %v1270 = vunpack.c.h.b16 %v708
        %v1271 = vunpack.c.l.b16 %v709
        %v1272 = vunpack.c.h.b16 %v709
        %v1273 = vunpack.c.l.b16 %v710
        %v1274 = vunpack.c.h.b16 %v710
        %v1275 = vunpack.c.l.b16 %v711
        %v1276 = vunpack.c.h.b16 %v711
        %v1277 = vunpack.c.l.b16 %v712
        %v1278 = vunpack.c.h.b16 %v712
        %v1279 = vunpack.c.l.b16 %v713
        %v1280 = vunpack.c.h.b16 %v713
        %v1281 = vunpack.c.l.b16 %v714
        %v1282 = vunpack.c.h.b16 %v714
        %v1283 = vunpack.c.l.b16 %v715
        %v1284 = vunpack.c.h.b16 %v715
        %v1285 = vunpack.c.l.b16 %v716
        %v1286 = vunpack.c.h.b16 %v716
        %v1287 = vunpack.c.l.b16 %v717
        %v1288 = vunpack.c.h.b16 %v717
        %v1289 = vunpack.c.l.b16 %v718
        %v1290 = vunpack.c.h.b16 %v718
        %v1291 = vunpack.c.l.b16 %v719
        %v1292 = vunpack.c.h.b16 %v719
        %v1293 = vunpack.c.l.b16 %v720
        %v1294 = vunpack.c.h.b16 %v720
        %v1295 = vunpack.c.l.b16 %v721
        %v1296 = vunpack.c.h.b16 %v721
        %v1297 = vunpack.c.l.b16 %v722
        %v1298 = vunpack.c.h.b16 %v722
        %v1299 = vunpack.c.l.b16 %v723
        %v1300 = vunpack.c.h.b16 %v723
        %v1301 = vunpack.c.l.b16 %v724
        %v1302 = vunpack.c.h.b16 %v724
        %v1303 = vunpack.c.l.b16 %v725
        %v1304 = vunpack.c.h.b16 %v725
        %v1305 = vunpack.c.l.b16 %v726
        %v1306 = vunpack.c.h.b16 %v726
        %v1307 = vunpack.c.l.b16 %v727
        %v1308 = vunpack.c.h.b16 %v727
        %v1309 = vunpack.c.l.b16 %v728
        %v1310 = vunpack.c.h.b16 %v728
        %v1311 = vunpack.c.l.b16 %v729
        %v1312 = vunpack.c.h.b16 %v729
        %v1313 = vunpack.c.l.b16 %v730
        %v1314 = vunpack.c.h.b16 %v730
        %v1315 = vunpack.c.l.b16 %v731
        %v1316 = vunpack.c.h.b16 %v731
        %v1317 = vunpack.c.l.b16 %v732
        %v1318 = vunpack.c.h.b16 %v732
        %v1319 = vunpack.c.l.b16 %v733
        %v1320 = vunpack.c.h.b16 %v733
        %v1321 = vunpack.c.l.b16 %v734
        %v1322 = vunpack.c.h.b16 %v734
        %v1323 = vunpack.c.l.b16 %v735
        %v1324 = vunpack.c.h.b16 %v735
        %v1325 = vunpack.c.l.b16 %v736
        %v1326 = vunpack.c.h.b16 %v736
        %v1327 = vunpack.c.l.b16 %v737
        %v1328 = vunpack.c.h.b16 %v737
        %v1329 = vunpack.c.l.b16 %v738
        %v1330 = vunpack.c.h.b16 %v738
        %v1331 = vunpack.c.l.b16 %v739
        %v1332 = vunpack.c.h.b16 %v739
        %v1333 = vunpack.c.l.b16 %v740
        %v1334 = vunpack.c.h.b16 %v740
        %v1335 = vunpack.c.l.b16 %v741
        %v1336 = vunpack.c.h.b16 %v741
        %v1337 = vunpack.c.l.b16 %v742
        %v1338 = vunpack.c.h.b16 %v742
        %v1339 = vunpack.c.l.b16 %v743
        %v1340 = vunpack.c.h.b16 %v743
        %v1341 = vunpack.c.l.b16 %v744
        %v1342 = vunpack.c.h.b16 %v744
        %v1343 = vunpack.c.l.b16 %v745
        %v1344 = vunpack.c.h.b16 %v745
        %v1345 = vunpack.c.l.b16 %v746
        %v1346 = vunpack.c.h.b16 %v746
        %v1347 = vunpack.c.l.b16 %v747
        %v1348 = vunpack.c.h.b16 %v747
        %v1349 = vunpack.c.l.b16 %v748
        %v1350 = vunpack.c.h.b16 %v748
        %v1351 = vunpack.c.l.b16 %v749
        %v1352 = vunpack.c.h.b16 %v749
        %v1353 = vunpack.c.l.b16 %v750
        %v1354 = vunpack.c.h.b16 %v750
        %v1355 = vunpack.c.l.b16 %v751
        %v1356 = vunpack.c.h.b16 %v751
        %v1357 = vunpack.c.l.b16 %v752
        %v1358 = vunpack.c.h.b16 %v752
        %v1359 = vunpack.c.l.b16 %v753
        %v1360 = vunpack.c.h.b16 %v753
        %v1361 = vunpack.c.l.b16 %v754
        %v1362 = vunpack.c.h.b16 %v754
        %v1363 = vunpack.c.l.b16 %v755
        %v1364 = vunpack.c.h.b16 %v755
        %v1365 = vunpack.c.l.b16 %v756
        %v1366 = vunpack.c.h.b16 %v756
        %v1367 = vunpack.c.l.b16 %v757
        %v1368 = vunpack.c.h.b16 %v757
        %v1369 = vunpack.c.l.b16 %v758
        %v1370 = vunpack.c.h.b16 %v758
        %v1371 = vunpack.c.l.b16 %v759
        %v1372 = vunpack.c.h.b16 %v759
        %v1373 = vunpack.c.l.b16 %v760
        %v1374 = vunpack.c.h.b16 %v760
        %v1375 = vunpack.c.l.b16 %v761
        %v1376 = vunpack.c.h.b16 %v761
        %v1377 = vunpack.c.l.b16 %v762
        %v1378 = vunpack.c.h.b16 %v762
        %v1379 = vunpack.c.l.b16 %v763
        %v1380 = vunpack.c.h.b16 %v763
        %v1381 = vunpack.c.l.b16 %v764
        %v1382 = vunpack.c.h.b16 %v764
        %v1383 = vunpack.c.l.b16 %v765
        %v1384 = vunpack.c.h.b16 %v765
        %v1385 = vunpack.c.l.b16 %v766
        %v1386 = vunpack.c.h.b16 %v766
        %v1387 = vunpack.c.l.b16 %v767
        %v1388 = vunpack.c.h.b16 %v767
        %v1389 = vunpack.c.l.b16 %v768
        %v1390 = vunpack.c.h.b16 %v768
        %v1391 = vunpack.c.l.b16 %v769
        %v1392 = vunpack.c.h.b16 %v769
        %v1393 = vunpack.c.l.b16 %v770
        %v1394 = vunpack.c.h.b16 %v770
        %v1395 = vunpack.c.l.b16 %v771
        %v1396 = vunpack.c.h.b16 %v771
        %v1397 = vunpack.c.l.b16 %v772
        %v1398 = vunpack.c.h.b16 %v772
        %v1399 = vunpack.c.l.b16 %v773
        %v1400 = vunpack.c.h.b16 %v773
        %v1401 = vunpack.c.l.b16 %v774
        %v1402 = vunpack.c.h.b16 %v774
        %v1403 = vunpack.c.l.b16 %v775
        %v1404 = vunpack.c.h.b16 %v775
        %v1405 = vunpack.c.l.b16 %v776
        %v1406 = vunpack.c.h.b16 %v776
        %v1407 = vunpack.c.l.b16 %v777
        %v1408 = vunpack.c.h.b16 %v777
        %v1409 = vunpack.c.l.b16 %v778
        %v1410 = vunpack.c.h.b16 %v778
        %v1411 = vunpack.c.l.b16 %v779
        %v1412 = vunpack.c.h.b16 %v779
        %v1413 = vunpack.c.l.b16 %v780
        %v1414 = vunpack.c.h.b16 %v780
        %v1415 = vunpack.c.l.b16 %v781
        %v1416 = vunpack.c.h.b16 %v781
        %v1417 = vunpack.c.l.b16 %v782
        %v1418 = vunpack.c.h.b16 %v782
        %v1419 = vunpack.c.l.b16 %v783
        %v1420 = vunpack.c.h.b16 %v783
        %v1421 = vunpack.c.l.b16 %v784
        %v1422 = vunpack.c.h.b16 %v784
        %v1423 = vunpack.c.l.b16 %v785
        %v1424 = vunpack.c.h.b16 %v785
        %v1425 = vunpack.c.l.b16 %v786
        %v1426 = vunpack.c.h.b16 %v786
        %v1427 = vunpack.c.l.b16 %v787
        %v1428 = vunpack.c.h.b16 %v787
        %v1429 = vunpack.c.l.b16 %v788
        %v1430 = vunpack.c.h.b16 %v788
        %v1431 = vunpack.c.l.b16 %v789
        %v1432 = vunpack.c.h.b16 %v789
        %v1433 = vunpack.c.l.b16 %v790
        %v1434 = vunpack.c.h.b16 %v790
        %v1435 = vunpack.c.l.b16 %v791
        %v1436 = vunpack.c.h.b16 %v791
        %v1437 = vunpack.c.l.b16 %v792
        %v1438 = vunpack.c.h.b16 %v792
        %v1439 = vunpack.c.l.b16 %v793
        %v1440 = vunpack.c.h.b16 %v793
        %v1441 = vunpack.c.l.b16 %v794
        %v1442 = vunpack.c.h.b16 %v794
        %v1443 = vunpack.c.l.b16 %v795
        %v1444 = vunpack.c.h.b16 %v795
        %v1445 = vunpack.c.l.b16 %v796
        %v1446 = vunpack.c.h.b16 %v796
        %v1447 = vunpack.c.l.b16 %v797
        %v1448 = vunpack.c.h.b16 %v797
        %v1449 = vunpack.c.l.b16 %v798
        %v1450 = vunpack.c.h.b16 %v798
        %v1451 = vunpack.c.l.b16 %v799
        %v1452 = vunpack.c.h.b16 %v799
        %v1453 = vunpack.c.l.b16 %v800
        %v1454 = vunpack.c.h.b16 %v800
        %v1455 = vunpack.c.l.b16 %v801
        %v1456 = vunpack.c.h.b16 %v801
        %v1457 = vunpack.c.l.b16 %v802
        %v1458 = vunpack.c.h.b16 %v802
        %v1459 = vunpack.c.l.b16 %v803
        %v1460 = vunpack.c.h.b16 %v803
        %v1461 = vunpack.c.l.b16 %v804
        %v1462 = vunpack.c.h.b16 %v804
        %v1463 = vunpack.c.l.b16 %v805
        %v1464 = vunpack.c.h.b16 %v805
        %v1465 = vunpack.c.l.b16 %v806
        %v1466 = vunpack.c.h.b16 %v806
        %v1467 = vunpack.c.l.b16 %v807
        %v1468 = vunpack.c.h.b16 %v807
        %v1469 = vunpack.c.l.b16 %v808
        %v1470 = vunpack.c.h.b16 %v808
        %v1471 = vunpack.c.l.b16 %v809
        %v1472 = vunpack.c.h.b16 %v809
        %v1473 = vunpack.c.l.b16 %v810
        %v1474 = vunpack.c.h.b16 %v810
        %v1475 = vunpack.c.l.b16 %v811
        %v1476 = vunpack.c.h.b16 %v811
        %v1477 = vunpack.c.l.b16 %v812
        %v1478 = vunpack.c.h.b16 %v812
        %v1479 = vunpack.c.l.b16 %v813
        %v1480 = vunpack.c.h.b16 %v813
        %v1481 = vunpack.c.l.b16 %v814
        %v1482 = vunpack.c.h.b16 %v814
        %v1483 = vunpack.c.l.b16 %v815
        %v1484 = vunpack.c.h.b16 %v815
        %v1485 = vunpack.c.l.b16 %v816
        %v1486 = vunpack.c.h.b16 %v816
        %v1487 = vunpack.c.l.b16 %v817
        %v1488 = vunpack.c.h.b16 %v817
        %v1489 = vunpack.c.l.b16 %v818
        %v1490 = vunpack.c.h.b16 %v818
        %v1491 = vunpack.c.l.b16 %v819
        %v1492 = vunpack.c.h.b16 %v819
        %v1493 = vunpack.c.l.b16 %v820
        %v1494 = vunpack.c.h.b16 %v820
        %v1495 = vunpack.c.l.b16 %v821
        %v1496 = vunpack.c.h.b16 %v821
        %v1497 = vunpack.c.l.b16 %v822
        %v1498 = vunpack.c.h.b16 %v822
        %v1499 = vunpack.c.l.b16 %v823
        %v1500 = vunpack.c.h.b16 %v823
        %v1501 = vunpack.c.l.b16 %v824
        %v1502 = vunpack.c.h.b16 %v824
        %v1503 = vpack.c.b16 %v1115, %v1111
        %v1504 = vpack.c.b16 %v1116, %v1112
        %v1505 = vpack.c.b16 %v1117, %v1113
        %v1506 = vpack.c.b16 %v1118, %v1114
        %v1507 = vpack.c.b16 %v1123, %v1119
        %v1508 = vpack.c.b16 %v1124, %v1120
        %v1509 = vpack.c.b16 %v1125, %v1121
        %v1510 = vpack.c.b16 %v1126, %v1122
        %v1511 = vpack.c.b16 %v1131, %v1127
        %v1512 = vpack.c.b16 %v1132, %v1128
        %v1513 = vpack.c.b16 %v1133, %v1129
        %v1514 = vpack.c.b16 %v1134, %v1130
        %v1515 = vpack.c.b16 %v1139, %v1135
        %v1516 = vpack.c.b16 %v1140, %v1136
        %v1517 = vpack.c.b16 %v1141, %v1137
        %v1518 = vpack.c.b16 %v1142, %v1138
        %v1519 = vpack.c.b16 %v1147, %v1143
        %v1520 = vpack.c.b16 %v1148, %v1144
        %v1521 = vpack.c.b16 %v1149, %v1145
        %v1522 = vpack.c.b16 %v1150, %v1146
        %v1523 = vpack.c.b16 %v1155, %v1151
        %v1524 = vpack.c.b16 %v1156, %v1152
        %v1525 = vpack.c.b16 %v1157, %v1153
        %v1526 = vpack.c.b16 %v1158, %v1154
        %v1527 = vpack.c.b16 %v1163, %v1159
        %v1528 = vpack.c.b16 %v1164, %v1160
        %v1529 = vpack.c.b16 %v1165, %v1161
        %v1530 = vpack.c.b16 %v1166, %v1162
        %v1531 = vpack.c.b16 %v1171, %v1167
        %v1532 = vpack.c.b16 %v1172, %v1168
        %v1533 = vpack.c.b16 %v1173, %v1169
        %v1534 = vpack.c.b16 %v1174, %v1170
        %v1535 = vpack.c.b16 %v1179, %v1175
        %v1536 = vpack.c.b16 %v1180, %v1176
        %v1537 = vpack.c.b16 %v1181, %v1177
        %v1538 = vpack.c.b16 %v1182, %v1178
        %v1539 = vpack.c.b16 %v1187, %v1183
        %v1540 = vpack.c.b16 %v1188, %v1184
        %v1541 = vpack.c.b16 %v1189, %v1185
        %v1542 = vpack.c.b16 %v1190, %v1186
        %v1543 = vpack.c.b16 %v1195, %v1191
        %v1544 = vpack.c.b16 %v1196, %v1192
        %v1545 = vpack.c.b16 %v1197, %v1193
        %v1546 = vpack.c.b16 %v1198, %v1194
        %v1547 = vpack.c.b16 %v1203, %v1199
        %v1548 = vpack.c.b16 %v1204, %v1200
        %v1549 = vpack.c.b16 %v1205, %v1201
        %v1550 = vpack.c.b16 %v1206, %v1202
        %v1551 = vpack.c.b16 %v1211, %v1207
        %v1552 = vpack.c.b16 %v1212, %v1208
        %v1553 = vpack.c.b16 %v1213, %v1209
        %v1554 = vpack.c.b16 %v1214, %v1210
        %v1555 = vpack.c.b16 %v1219, %v1215
        %v1556 = vpack.c.b16 %v1220, %v1216
        %v1557 = vpack.c.b16 %v1221, %v1217
        %v1558 = vpack.c.b16 %v1222, %v1218
        %v1559 = vpack.c.b16 %v1227, %v1223
        %v1560 = vpack.c.b16 %v1228, %v1224
        %v1561 = vpack.c.b16 %v1229, %v1225
        %v1562 = vpack.c.b16 %v1230, %v1226
        %v1563 = vpack.c.b16 %v1235, %v1231
        %v1564 = vpack.c.b16 %v1236, %v1232
        %v1565 = vpack.c.b16 %v1237, %v1233
        %v1566 = vpack.c.b16 %v1238, %v1234
        %v1567 = vpack.c.b16 %v1243, %v1239
        %v1568 = vpack.c.b16 %v1244, %v1240
        %v1569 = vpack.c.b16 %v1245, %v1241
        %v1570 = vpack.c.b16 %v1246, %v1242
        %v1571 = vpack.c.b16 %v1251, %v1247
        %v1572 = vpack.c.b16 %v1252, %v1248
        %v1573 = vpack.c.b16 %v1253, %v1249
        %v1574 = vpack.c.b16 %v1254, %v1250
        %v1575 = vpack.c.b16 %v1259, %v1255
        %v1576 = vpack.c.b16 %v1260, %v1256
        %v1577 = vpack.c.b16 %v1261, %v1257
        %v1578 = vpack.c.b16 %v1262, %v1258
        %v1579 = vpack.c.b16 %v1267, %v1263
        %v1580 = vpack.c.b16 %v1268, %v1264
        %v1581 = vpack.c.b16 %v1269, %v1265
        %v1582 = vpack.c.b16 %v1270, %v1266
        %v1583 = vpack.c.b16 %v1275, %v1271
        %v1584 = vpack.c.b16 %v1276, %v1272
        %v1585 = vpack.c.b16 %v1277, %v1273
        %v1586 = vpack.c.b16 %v1278, %v1274
        %v1587 = vpack.c.b16 %v1283, %v1279
        %v1588 = vpack.c.b16 %v1284, %v1280
        %v1589 = vpack.c.b16 %v1285, %v1281
        %v1590 = vpack.c.b16 %v1286, %v1282
        %v1591 = vpack.c.b16 %v1291, %v1287
        %v1592 = vpack.c.b16 %v1292, %v1288
        %v1593 = vpack.c.b16 %v1293, %v1289
        %v1594 = vpack.c.b16 %v1294, %v1290
        %v1595 = vpack.c.b16 %v1299, %v1295
        %v1596 = vpack.c.b16 %v1300, %v1296
        %v1597 = vpack.c.b16 %v1301, %v1297
        %v1598 = vpack.c.b16 %v1302, %v1298
        %v1599 = vpack.c.b16 %v1307, %v1303
        %v1600 = vpack.c.b16 %v1308, %v1304
        %v1601 = vpack.c.b16 %v1309, %v1305
        %v1602 = vpack.c.b16 %v1310, %v1306
        %v1603 = vpack.c.b16 %v1315, %v1311
        %v1604 = vpack.c.b16 %v1316, %v1312
        %v1605 = vpack.c.b16 %v1317, %v1313
        %v1606 = vpack.c.b16 %v1318, %v1314
        %v1607 = vpack.c.b16 %v1323, %v1319
        %v1608 = vpack.c.b16 %v1324, %v1320
        %v1609 = vpack.c.b16 %v1325, %v1321
        %v1610 = vpack.c.b16 %v1326, %v1322
        %v1611 = vpack.c.b16 %v1331, %v1327
        %v1612 = vpack.c.b16 %v1332, %v1328
        %v1613 = vpack.c.b16 %v1333, %v1329
        %v1614 = vpack.c.b16 %v1334, %v1330
        %v1615 = vpack.c.b16 %v1339, %v1335
        %v1616 = vpack.c.b16 %v1340, %v1336
        %v1617 = vpack.c.b16 %v1341, %v1337
        %v1618 = vpack.c.b16 %v1342, %v1338
        %v1619 = vpack.c.b16 %v1347, %v1343
        %v1620 = vpack.c.b16 %v1348, %v1344
        %v1621 = vpack.c.b16 %v1349, %v1345
        %v1622 = vpack.c.b16 %v1350, %v1346
        %v1623 = vpack.c.b16 %v1355, %v1351
        %v1624 = vpack.c.b16 %v1356, %v1352
        %v1625 = vpack.c.b16 %v1357, %v1353
        %v1626 = vpack.c.b16 %v1358, %v1354
        %v1627 = vpack.c.b16 %v1363, %v1359
        %v1628 = vpack.c.b16 %v1364, %v1360
        %v1629 = vpack.c.b16 %v1365, %v1361
        %v1630 = vpack.c.b16 %v1366, %v1362
        %v1631 = vpack.c.b16 %v1371, %v1367
        %v1632 = vpack.c.b16 %v1372, %v1368
        %v1633 = vpack.c.b16 %v1373, %v1369
        %v1634 = vpack.c.b16 %v1374, %v1370
        %v1635 = vpack.c.b16 %v1379, %v1375
        %v1636 = vpack.c.b16 %v1380, %v1376
        %v1637 = vpack.c.b16 %v1381, %v1377
        %v1638 = vpack.c.b16 %v1382, %v1378
        %v1639 = vpack.c.b16 %v1387, %v1383
        %v1640 = vpack.c.b16 %v1388, %v1384
        %v1641 = vpack.c.b16 %v1389, %v1385
        %v1642 = vpack.c.b16 %v1390, %v1386
        %v1643 = vpack.c.b16 %v1395, %v1391
        %v1644 = vpack.c.b16 %v1396, %v1392
        %v1645 = vpack.c.b16 %v1397, %v1393
        %v1646 = vpack.c.b16 %v1398, %v1394
        %v1647 = vpack.c.b16 %v1403, %v1399
        %v1648 = vpack.c.b16 %v1404, %v1400
        %v1649 = vpack.c.b16 %v1405, %v1401
        %v1650 = vpack.c.b16 %v1406, %v1402
        %v1651 = vpack.c.b16 %v1411, %v1407
        %v1652 = vpack.c.b16 %v1412, %v1408
        %v1653 = vpack.c.b16 %v1413, %v1409
        %v1654 = vpack.c.b16 %v1414, %v1410
        %v1655 = vpack.c.b16 %v1419, %v1415
        %v1656 = vpack.c.b16 %v1420, %v1416
        %v1657 = vpack.c.b16 %v1421, %v1417
        %v1658 = vpack.c.b16 %v1422, %v1418
        %v1659 = vpack.c.b16 %v1427, %v1423
        %v1660 = vpack.c.b16 %v1428, %v1424
        %v1661 = vpack.c.b16 %v1429, %v1425
        %v1662 = vpack.c.b16 %v1430, %v1426
        %v1663 = vpack.c.b16 %v1435, %v1431
        %v1664 = vpack.c.b16 %v1436, %v1432
        %v1665 = vpack.c.b16 %v1437, %v1433
        %v1666 = vpack.c.b16 %v1438, %v1434
        %v1667 = vpack.c.b16 %v1443, %v1439
        %v1668 = vpack.c.b16 %v1444, %v1440
        %v1669 = vpack.c.b16 %v1445, %v1441
        %v1670 = vpack.c.b16 %v1446, %v1442
        %v1671 = vpack.c.b16 %v1451, %v1447
        %v1672 = vpack.c.b16 %v1452, %v1448
        %v1673 = vpack.c.b16 %v1453, %v1449
        %v1674 = vpack.c.b16 %v1454, %v1450
        %v1675 = vpack.c.b16 %v1459, %v1455
        %v1676 = vpack.c.b16 %v1460, %v1456
        %v1677 = vpack.c.b16 %v1461, %v1457
        %v1678 = vpack.c.b16 %v1462, %v1458
        %v1679 = vpack.c.b16 %v1467, %v1463
        %v1680 = vpack.c.b16 %v1468, %v1464
        %v1681 = vpack.c.b16 %v1469, %v1465
        %v1682 = vpack.c.b16 %v1470, %v1466
        %v1683 = vpack.c.b16 %v1475, %v1471
        %v1684 = vpack.c.b16 %v1476, %v1472
        %v1685 = vpack.c.b16 %v1477, %v1473
        %v1686 = vpack.c.b16 %v1478, %v1474
        %v1687 = vpack.c.b16 %v1483, %v1479
        %v1688 = vpack.c.b16 %v1484, %v1480
        %v1689 = vpack.c.b16 %v1485, %v1481
        %v1690 = vpack.c.b16 %v1486, %v1482
        %v1691 = vpack.c.b16 %v1491, %v1487
        %v1692 = vpack.c.b16 %v1492, %v1488
        %v1693 = vpack.c.b16 %v1493, %v1489
        %v1694 = vpack.c.b16 %v1494, %v1490
        %v1695 = vpack.c.b16 %v1499, %v1495
        %v1696 = vpack.c.b16 %v1500, %v1496
        %v1697 = vpack.c.b16 %v1501, %v1497
        %v1698 = vpack.c.b16 %v1502, %v1498
        %vm1895 = vcmask 130048
        %v1897 = vsel %vm1895, %v625, 0
        %1899 = vmatpush.bf16.msra.mxu0 %v1531
        %1900 = vmatpush.bf16.msra.mxu0 %v1527
        %1901 = vmatpush.bf16.msra.mxu0 %v1523
        %1902 = vmatpush.bf16.msra.mxu0 %v1519
        %1903 = vmatpush.bf16.msra.mxu0 %v1515
        %1904 = vmatpush.bf16.msra.mxu0 %v1511
        %1905 = vmatpush.bf16.msra.mxu0 %v1507
        %1906 = vmatpush.bf16.msra.mxu0 %v1503
        %1907 = vmatmul.bf16.gmra.mxu0 %v619
        %v1908 = vpop.f32.mrf.mxu0
        %v1909 = vadd.f32 %v873, %v1908
        %v1910 = vpop.f32.mrf.mxu0
        %1911 = vdwg.mxu0
        %1912 = vmatpush.bf16.msra.mxu0 %v1563
        %1913 = vmatpush.bf16.msra.mxu0 %v1559
        %1914 = vmatpush.bf16.msra.mxu0 %v1555
        %1915 = vmatpush.bf16.msra.mxu0 %v1551
        %1916 = vmatpush.bf16.msra.mxu0 %v1547
        %1917 = vmatpush.bf16.msra.mxu0 %v1543
        %1918 = vmatpush.bf16.msra.mxu0 %v1539
        %1919 = vmatpush.bf16.msra.mxu0 %v1535
        %1920 = vmatmul.bf16.gmra.mxu0 %v620
        %v1921 = vpop.f32.mrf.mxu0
        %v1922 = vadd.f32 %v1909, %v1921
        %v1923 = vpop.f32.mrf.mxu0
        %1924 = vdwg.mxu0
        %1925 = vmatpush.bf16.msra.mxu0 %v1595
        %1926 = vmatpush.bf16.msra.mxu0 %v1591
        %1927 = vmatpush.bf16.msra.mxu0 %v1587
        %1928 = vmatpush.bf16.msra.mxu0 %v1583
        %1929 = vmatpush.bf16.msra.mxu0 %v1579
        %1930 = vmatpush.bf16.msra.mxu0 %v1575
        %1931 = vmatpush.bf16.msra.mxu0 %v1571
        %1932 = vmatpush.bf16.msra.mxu0 %v1567
        %1933 = vmatmul.bf16.gmra.mxu0 %v621
        %v1934 = vpop.f32.mrf.mxu0
        %v1935 = vadd.f32 %v1922, %v1934
        %v1936 = vpop.f32.mrf.mxu0
        %1937 = vdwg.mxu0
        %1938 = vmatpush.bf16.msra.mxu0 %v1627
        %1939 = vmatpush.bf16.msra.mxu0 %v1623
        %1940 = vmatpush.bf16.msra.mxu0 %v1619
        %1941 = vmatpush.bf16.msra.mxu0 %v1615
        %1942 = vmatpush.bf16.msra.mxu0 %v1611
        %1943 = vmatpush.bf16.msra.mxu0 %v1607
        %1944 = vmatpush.bf16.msra.mxu0 %v1603
        %1945 = vmatpush.bf16.msra.mxu0 %v1599
        %1946 = vmatmul.bf16.gmra.mxu0 %v622
        %v1947 = vpop.f32.mrf.mxu0
        %v1948 = vadd.f32 %v1935, %v1947
        %v1949 = vpop.f32.mrf.mxu0
        %1950 = vdwg.mxu0
        %1951 = vmatpush.bf16.msra.mxu0 %v1659
        %1952 = vmatpush.bf16.msra.mxu0 %v1655
        %1953 = vmatpush.bf16.msra.mxu0 %v1651
        %1954 = vmatpush.bf16.msra.mxu0 %v1647
        %1955 = vmatpush.bf16.msra.mxu0 %v1643
        %1956 = vmatpush.bf16.msra.mxu0 %v1639
        %1957 = vmatpush.bf16.msra.mxu0 %v1635
        %1958 = vmatpush.bf16.msra.mxu0 %v1631
        %1959 = vmatmul.bf16.gmra.mxu0 %v623
        %v1960 = vpop.f32.mrf.mxu0
        %v1961 = vadd.f32 %v1948, %v1960
        %v1962 = vpop.f32.mrf.mxu0
        %1963 = vdwg.mxu0
        %1964 = vmatpush.bf16.msra.mxu0 %v1691
        %1965 = vmatpush.bf16.msra.mxu0 %v1687
        %1966 = vmatpush.bf16.msra.mxu0 %v1683
        %1967 = vmatpush.bf16.msra.mxu0 %v1679
        %1968 = vmatpush.bf16.msra.mxu0 %v1675
        %1969 = vmatpush.bf16.msra.mxu0 %v1671
        %1970 = vmatpush.bf16.msra.mxu0 %v1667
        %1971 = vmatpush.bf16.msra.mxu0 %v1663
        %1972 = vmatmul.bf16.gmra.mxu0 %v624
        %v1973 = vpop.f32.mrf.mxu0
        %v1974 = vadd.f32 %v1961, %v1973
        %v1975 = vpop.f32.mrf.mxu0
        %1976 = vdwg.mxu0
        %1977 = vmatpush.bf16.msra.mxu0 0
        %1978 = vmatpush.bf16.msra.mxu0 0
        %1979 = vmatpush.bf16.msra.mxu0 0
        %1980 = vmatpush.bf16.msra.mxu0 0
        %1981 = vmatpush.bf16.msra.mxu0 0
        %1982 = vmatpush.bf16.msra.mxu0 0
        %1983 = vmatpush.bf16.msra.mxu0 0
        %1984 = vmatpush.bf16.msra.mxu0 %v1695
        %1985 = vmatmul.bf16.gmra.mxu0 %v1897
        %v1986 = vpop.f32.mrf.mxu0
        %v1987 = vadd.f32 %v1974, %v1986
        %v1988 = vpop.f32.mrf.mxu0
        %1989 = vdwg.mxu0
        %1990 = vmatpush.bf16.msra.mxu0 %v1532
        %1991 = vmatpush.bf16.msra.mxu0 %v1528
        %1992 = vmatpush.bf16.msra.mxu0 %v1524
        %1993 = vmatpush.bf16.msra.mxu0 %v1520
        %1994 = vmatpush.bf16.msra.mxu0 %v1516
        %1995 = vmatpush.bf16.msra.mxu0 %v1512
        %1996 = vmatpush.bf16.msra.mxu0 %v1508
        %1997 = vmatpush.bf16.msra.mxu0 %v1504
        %1998 = vmatmul.bf16.gmra.mxu0 %v619
        %v1999 = vpop.f32.mrf.mxu0
        %v2000 = vadd.f32 %v886, %v1999
        %v2001 = vpop.f32.mrf.mxu0
        %2002 = vdwg.mxu0
        %2003 = vmatpush.bf16.msra.mxu0 %v1564
        %2004 = vmatpush.bf16.msra.mxu0 %v1560
        %2005 = vmatpush.bf16.msra.mxu0 %v1556
        %2006 = vmatpush.bf16.msra.mxu0 %v1552
        %2007 = vmatpush.bf16.msra.mxu0 %v1548
        %2008 = vmatpush.bf16.msra.mxu0 %v1544
        %2009 = vmatpush.bf16.msra.mxu0 %v1540
        %2010 = vmatpush.bf16.msra.mxu0 %v1536
        %2011 = vmatmul.bf16.gmra.mxu0 %v620
        %v2012 = vpop.f32.mrf.mxu0
        %v2013 = vadd.f32 %v2000, %v2012
        %v2014 = vpop.f32.mrf.mxu0
        %2015 = vdwg.mxu0
        %2016 = vmatpush.bf16.msra.mxu0 %v1596
        %2017 = vmatpush.bf16.msra.mxu0 %v1592
        %2018 = vmatpush.bf16.msra.mxu0 %v1588
        %2019 = vmatpush.bf16.msra.mxu0 %v1584
        %2020 = vmatpush.bf16.msra.mxu0 %v1580
        %2021 = vmatpush.bf16.msra.mxu0 %v1576
        %2022 = vmatpush.bf16.msra.mxu0 %v1572
        %2023 = vmatpush.bf16.msra.mxu0 %v1568
        %2024 = vmatmul.bf16.gmra.mxu0 %v621
        %v2025 = vpop.f32.mrf.mxu0
        %v2026 = vadd.f32 %v2013, %v2025
        %v2027 = vpop.f32.mrf.mxu0
        %2028 = vdwg.mxu0
        %2029 = vmatpush.bf16.msra.mxu0 %v1628
        %2030 = vmatpush.bf16.msra.mxu0 %v1624
        %2031 = vmatpush.bf16.msra.mxu0 %v1620
        %2032 = vmatpush.bf16.msra.mxu0 %v1616
        %2033 = vmatpush.bf16.msra.mxu0 %v1612
        %2034 = vmatpush.bf16.msra.mxu0 %v1608
        %2035 = vmatpush.bf16.msra.mxu0 %v1604
        %2036 = vmatpush.bf16.msra.mxu0 %v1600
        %2037 = vmatmul.bf16.gmra.mxu0 %v622
        %v2038 = vpop.f32.mrf.mxu0
        %v2039 = vadd.f32 %v2026, %v2038
        %v2040 = vpop.f32.mrf.mxu0
        %2041 = vdwg.mxu0
        %2042 = vmatpush.bf16.msra.mxu0 %v1660
        %2043 = vmatpush.bf16.msra.mxu0 %v1656
        %2044 = vmatpush.bf16.msra.mxu0 %v1652
        %2045 = vmatpush.bf16.msra.mxu0 %v1648
        %2046 = vmatpush.bf16.msra.mxu0 %v1644
        %2047 = vmatpush.bf16.msra.mxu0 %v1640
        %2048 = vmatpush.bf16.msra.mxu0 %v1636
        %2049 = vmatpush.bf16.msra.mxu0 %v1632
        %2050 = vmatmul.bf16.gmra.mxu0 %v623
        %v2051 = vpop.f32.mrf.mxu0
        %v2052 = vadd.f32 %v2039, %v2051
        %v2053 = vpop.f32.mrf.mxu0
        %2054 = vdwg.mxu0
        %2055 = vmatpush.bf16.msra.mxu0 %v1692
        %2056 = vmatpush.bf16.msra.mxu0 %v1688
        %2057 = vmatpush.bf16.msra.mxu0 %v1684
        %2058 = vmatpush.bf16.msra.mxu0 %v1680
        %2059 = vmatpush.bf16.msra.mxu0 %v1676
        %2060 = vmatpush.bf16.msra.mxu0 %v1672
        %2061 = vmatpush.bf16.msra.mxu0 %v1668
        %2062 = vmatpush.bf16.msra.mxu0 %v1664
        %2063 = vmatmul.bf16.gmra.mxu0 %v624
        %v2064 = vpop.f32.mrf.mxu0
        %v2065 = vadd.f32 %v2052, %v2064
        %v2066 = vpop.f32.mrf.mxu0
        %2067 = vdwg.mxu0
        %2068 = vmatpush.bf16.msra.mxu0 0
        %2069 = vmatpush.bf16.msra.mxu0 0
        %2070 = vmatpush.bf16.msra.mxu0 0
        %2071 = vmatpush.bf16.msra.mxu0 0
        %2072 = vmatpush.bf16.msra.mxu0 0
        %2073 = vmatpush.bf16.msra.mxu0 0
        %2074 = vmatpush.bf16.msra.mxu0 0
        %2075 = vmatpush.bf16.msra.mxu0 %v1696
        %2076 = vmatmul.bf16.gmra.mxu0 %v1897
        %v2077 = vpop.f32.mrf.mxu0
        %v2078 = vadd.f32 %v2065, %v2077
        %v2079 = vpop.f32.mrf.mxu0
        %2080 = vdwg.mxu0
        %2081 = vmatpush.bf16.msra.mxu0 %v1533
        %2082 = vmatpush.bf16.msra.mxu0 %v1529
        %2083 = vmatpush.bf16.msra.mxu0 %v1525
        %2084 = vmatpush.bf16.msra.mxu0 %v1521
        %2085 = vmatpush.bf16.msra.mxu0 %v1517
        %2086 = vmatpush.bf16.msra.mxu0 %v1513
        %2087 = vmatpush.bf16.msra.mxu0 %v1509
        %2088 = vmatpush.bf16.msra.mxu0 %v1505
        %2089 = vmatmul.bf16.gmra.mxu0 %v619
        %v2090 = vpop.f32.mrf.mxu0
        %v2091 = vadd.f32 %v899, %v2090
        %v2092 = vpop.f32.mrf.mxu0
        %2093 = vdwg.mxu0
        %2094 = vmatpush.bf16.msra.mxu0 %v1565
        %2095 = vmatpush.bf16.msra.mxu0 %v1561
        %2096 = vmatpush.bf16.msra.mxu0 %v1557
        %2097 = vmatpush.bf16.msra.mxu0 %v1553
        %2098 = vmatpush.bf16.msra.mxu0 %v1549
        %2099 = vmatpush.bf16.msra.mxu0 %v1545
        %2100 = vmatpush.bf16.msra.mxu0 %v1541
        %2101 = vmatpush.bf16.msra.mxu0 %v1537
        %2102 = vmatmul.bf16.gmra.mxu0 %v620
        %v2103 = vpop.f32.mrf.mxu0
        %v2104 = vadd.f32 %v2091, %v2103
        %v2105 = vpop.f32.mrf.mxu0
        %2106 = vdwg.mxu0
        %2107 = vmatpush.bf16.msra.mxu0 %v1597
        %2108 = vmatpush.bf16.msra.mxu0 %v1593
        %2109 = vmatpush.bf16.msra.mxu0 %v1589
        %2110 = vmatpush.bf16.msra.mxu0 %v1585
        %2111 = vmatpush.bf16.msra.mxu0 %v1581
        %2112 = vmatpush.bf16.msra.mxu0 %v1577
        %2113 = vmatpush.bf16.msra.mxu0 %v1573
        %2114 = vmatpush.bf16.msra.mxu0 %v1569
        %2115 = vmatmul.bf16.gmra.mxu0 %v621
        %v2116 = vpop.f32.mrf.mxu0
        %v2117 = vadd.f32 %v2104, %v2116
        %v2118 = vpop.f32.mrf.mxu0
        %2119 = vdwg.mxu0
        %2120 = vmatpush.bf16.msra.mxu0 %v1629
        %2121 = vmatpush.bf16.msra.mxu0 %v1625
        %2122 = vmatpush.bf16.msra.mxu0 %v1621
        %2123 = vmatpush.bf16.msra.mxu0 %v1617
        %2124 = vmatpush.bf16.msra.mxu0 %v1613
        %2125 = vmatpush.bf16.msra.mxu0 %v1609
        %2126 = vmatpush.bf16.msra.mxu0 %v1605
        %2127 = vmatpush.bf16.msra.mxu0 %v1601
        %2128 = vmatmul.bf16.gmra.mxu0 %v622
        %v2129 = vpop.f32.mrf.mxu0
        %v2130 = vadd.f32 %v2117, %v2129
        %v2131 = vpop.f32.mrf.mxu0
        %2132 = vdwg.mxu0
        %2133 = vmatpush.bf16.msra.mxu0 %v1661
        %2134 = vmatpush.bf16.msra.mxu0 %v1657
        %2135 = vmatpush.bf16.msra.mxu0 %v1653
        %2136 = vmatpush.bf16.msra.mxu0 %v1649
        %2137 = vmatpush.bf16.msra.mxu0 %v1645
        %2138 = vmatpush.bf16.msra.mxu0 %v1641
        %2139 = vmatpush.bf16.msra.mxu0 %v1637
        %2140 = vmatpush.bf16.msra.mxu0 %v1633
        %2141 = vmatmul.bf16.gmra.mxu0 %v623
        %v2142 = vpop.f32.mrf.mxu0
        %v2143 = vadd.f32 %v2130, %v2142
        %v2144 = vpop.f32.mrf.mxu0
        %2145 = vdwg.mxu0
        %2146 = vmatpush.bf16.msra.mxu0 %v1693
        %2147 = vmatpush.bf16.msra.mxu0 %v1689
        %2148 = vmatpush.bf16.msra.mxu0 %v1685
        %2149 = vmatpush.bf16.msra.mxu0 %v1681
        %2150 = vmatpush.bf16.msra.mxu0 %v1677
        %2151 = vmatpush.bf16.msra.mxu0 %v1673
        %2152 = vmatpush.bf16.msra.mxu0 %v1669
        %2153 = vmatpush.bf16.msra.mxu0 %v1665
        %2154 = vmatmul.bf16.gmra.mxu0 %v624
        %v2155 = vpop.f32.mrf.mxu0
        %v2156 = vadd.f32 %v2143, %v2155
        %v2157 = vpop.f32.mrf.mxu0
        %2158 = vdwg.mxu0
        %2159 = vmatpush.bf16.msra.mxu0 0
        %2160 = vmatpush.bf16.msra.mxu0 0
        %2161 = vmatpush.bf16.msra.mxu0 0
        %2162 = vmatpush.bf16.msra.mxu0 0
        %2163 = vmatpush.bf16.msra.mxu0 0
        %2164 = vmatpush.bf16.msra.mxu0 0
        %2165 = vmatpush.bf16.msra.mxu0 0
        %2166 = vmatpush.bf16.msra.mxu0 %v1697
        %2167 = vmatmul.bf16.gmra.mxu0 %v1897
        %v2168 = vpop.f32.mrf.mxu0
        %v2169 = vadd.f32 %v2156, %v2168
        %v2170 = vpop.f32.mrf.mxu0
        %2171 = vdwg.mxu0
        %2172 = vmatpush.bf16.msra.mxu0 %v1534
        %2173 = vmatpush.bf16.msra.mxu0 %v1530
        %2174 = vmatpush.bf16.msra.mxu0 %v1526
        %2175 = vmatpush.bf16.msra.mxu0 %v1522
        %2176 = vmatpush.bf16.msra.mxu0 %v1518
        %2177 = vmatpush.bf16.msra.mxu0 %v1514
        %2178 = vmatpush.bf16.msra.mxu0 %v1510
        %2179 = vmatpush.bf16.msra.mxu0 %v1506
        %2180 = vmatmul.bf16.gmra.mxu0 %v619
        %v2181 = vpop.f32.mrf.mxu0
        %v2182 = vadd.f32 %v912, %v2181
        %v2183 = vpop.f32.mrf.mxu0
        %2184 = vdwg.mxu0
        %2185 = vmatpush.bf16.msra.mxu0 %v1566
        %2186 = vmatpush.bf16.msra.mxu0 %v1562
        %2187 = vmatpush.bf16.msra.mxu0 %v1558
        %2188 = vmatpush.bf16.msra.mxu0 %v1554
        %2189 = vmatpush.bf16.msra.mxu0 %v1550
        %2190 = vmatpush.bf16.msra.mxu0 %v1546
        %2191 = vmatpush.bf16.msra.mxu0 %v1542
        %2192 = vmatpush.bf16.msra.mxu0 %v1538
        %2193 = vmatmul.bf16.gmra.mxu0 %v620
        %v2194 = vpop.f32.mrf.mxu0
        %v2195 = vadd.f32 %v2182, %v2194
        %v2196 = vpop.f32.mrf.mxu0
        %2197 = vdwg.mxu0
        %2198 = vmatpush.bf16.msra.mxu0 %v1598
        %2199 = vmatpush.bf16.msra.mxu0 %v1594
        %2200 = vmatpush.bf16.msra.mxu0 %v1590
        %2201 = vmatpush.bf16.msra.mxu0 %v1586
        %2202 = vmatpush.bf16.msra.mxu0 %v1582
        %2203 = vmatpush.bf16.msra.mxu0 %v1578
        %2204 = vmatpush.bf16.msra.mxu0 %v1574
        %2205 = vmatpush.bf16.msra.mxu0 %v1570
        %2206 = vmatmul.bf16.gmra.mxu0 %v621
        %v2207 = vpop.f32.mrf.mxu0
        %v2208 = vadd.f32 %v2195, %v2207
        %v2209 = vpop.f32.mrf.mxu0
        %2210 = vdwg.mxu0
        %2211 = vmatpush.bf16.msra.mxu0 %v1630
        %2212 = vmatpush.bf16.msra.mxu0 %v1626
        %2213 = vmatpush.bf16.msra.mxu0 %v1622
        %2214 = vmatpush.bf16.msra.mxu0 %v1618
        %2215 = vmatpush.bf16.msra.mxu0 %v1614
        %2216 = vmatpush.bf16.msra.mxu0 %v1610
        %2217 = vmatpush.bf16.msra.mxu0 %v1606
        %2218 = vmatpush.bf16.msra.mxu0 %v1602
        %2219 = vmatmul.bf16.gmra.mxu0 %v622
        %v2220 = vpop.f32.mrf.mxu0
        %v2221 = vadd.f32 %v2208, %v2220
        %v2222 = vpop.f32.mrf.mxu0
        %2223 = vdwg.mxu0
        %2224 = vmatpush.bf16.msra.mxu0 %v1662
        %2225 = vmatpush.bf16.msra.mxu0 %v1658
        %2226 = vmatpush.bf16.msra.mxu0 %v1654
        %2227 = vmatpush.bf16.msra.mxu0 %v1650
        %2228 = vmatpush.bf16.msra.mxu0 %v1646
        %2229 = vmatpush.bf16.msra.mxu0 %v1642
        %2230 = vmatpush.bf16.msra.mxu0 %v1638
        %2231 = vmatpush.bf16.msra.mxu0 %v1634
        %2232 = vmatmul.bf16.gmra.mxu0 %v623
        %v2233 = vpop.f32.mrf.mxu0
        %v2234 = vadd.f32 %v2221, %v2233
        %v2235 = vpop.f32.mrf.mxu0
        %2236 = vdwg.mxu0
        %2237 = vmatpush.bf16.msra.mxu0 %v1694
        %2238 = vmatpush.bf16.msra.mxu0 %v1690
        %2239 = vmatpush.bf16.msra.mxu0 %v1686
        %2240 = vmatpush.bf16.msra.mxu0 %v1682
        %2241 = vmatpush.bf16.msra.mxu0 %v1678
        %2242 = vmatpush.bf16.msra.mxu0 %v1674
        %2243 = vmatpush.bf16.msra.mxu0 %v1670
        %2244 = vmatpush.bf16.msra.mxu0 %v1666
        %2245 = vmatmul.bf16.gmra.mxu0 %v624
        %v2246 = vpop.f32.mrf.mxu0
        %v2247 = vadd.f32 %v2234, %v2246
        %v2248 = vpop.f32.mrf.mxu0
        %2249 = vdwg.mxu0
        %2250 = vmatpush.bf16.msra.mxu0 0
        %2251 = vmatpush.bf16.msra.mxu0 0
        %2252 = vmatpush.bf16.msra.mxu0 0
        %2253 = vmatpush.bf16.msra.mxu0 0
        %2254 = vmatpush.bf16.msra.mxu0 0
        %2255 = vmatpush.bf16.msra.mxu0 0
        %2256 = vmatpush.bf16.msra.mxu0 0
        %2257 = vmatpush.bf16.msra.mxu0 %v1698
        %2258 = vmatmul.bf16.gmra.mxu0 %v1897
        %v2259 = vpop.f32.mrf.mxu0
        %v2260 = vadd.f32 %v2247, %v2259
        %v2261 = vpop.f32.mrf.mxu0
        %2262 = vdwg.mxu0
        %v2263 = vld [vmem:[%s5] sm:$0xf]
        %v2265 = vperm.slane %v2263, 0
        %v2266 = vperm.slane %v2263, 1
        %v2267 = vperm.slane %v2263, 2
        %v2268 = vperm.slane %v2263, 3
        %v2273 = vadd.f32 %v1987, %v2265
        %v2274 = vadd.f32 %v2078, %v2266
        %v2275 = vadd.f32 %v2169, %v2267
        %v2276 = vadd.f32 %v2260, %v2268
        %vm2277 = vcmp.gt.f32.partialorder %v2273, 0.0
        %vm2278 = vcmp.gt.f32.partialorder %v2274, 0.0
        %vm2279 = vcmp.gt.f32.partialorder %v2275, 0.0
        %vm2280 = vcmp.gt.f32.partialorder %v2276, 0.0
        %v2281 = vmul.f32 %v2273, 0.01
        %v2282 = vmul.f32 %v2274, 0.01
        %v2283 = vmul.f32 %v2275, 0.01
        %v2284 = vmul.f32 %v2276, 0.01
        %v2285 = vsel %vm2277, %v2273, %v2281
        %v2286 = vsel %vm2278, %v2274, %v2282
        %v2287 = vsel %vm2279, %v2275, %v2283
        %v2288 = vsel %vm2280, %v2276, %v2284
        %v2289 = vpack.c.bf16 %v2285, %v2285
        %v2290 = vpack.c.bf16 %v2286, %v2286
        %v2291 = vpack.c.bf16 %v2287, %v2287
        %v2292 = vpack.c.bf16 %v2288, %v2288
        %v2293 = vld [vmem:[#allocation7] sm:$0xf]
        %v2294 = vld [vmem:[#allocation7 + $0x4] sm:$0xf]
        %v2295 = vld [vmem:[#allocation7 + $0x8] sm:$0xf]
        %v2296 = vld [vmem:[#allocation7 + $0xc] sm:$0xf]
        %v2297 = vld [vmem:[#allocation7 + $0x10] sm:$0xf]
        %v2298 = vld [vmem:[#allocation7 + $0x14] sm:$0xf]
        %v2299 = vld [vmem:[#allocation7 + $0x18] sm:$0xf]
        %v2300 = vld [vmem:[#allocation7 + $0x1c] sm:$0xf]
        %v2301 = vld [vmem:[#allocation7 + $0x20] sm:$0xf]
        %v2302 = vld [vmem:[#allocation7 + $0x24] sm:$0xf]
        %v2303 = vld [vmem:[#allocation7 + $0x28] sm:$0xf]
        %v2304 = vld [vmem:[#allocation7 + $0x2c] sm:$0xf]
        %v2305 = vld [vmem:[#allocation7 + $0x30] sm:$0xf]
        %v2306 = vld [vmem:[#allocation7 + $0x34] sm:$0xf]
        %v2307 = vld [vmem:[#allocation7 + $0x38] sm:$0xf]
        %v2308 = vld [vmem:[#allocation7 + $0x3c] sm:$0xf]
        %v2309 = vld [vmem:[#allocation7 + $0x40] sm:$0xf]
        %v2310 = vld [vmem:[#allocation7 + $0x44] sm:$0xf]
        %v2311 = vld [vmem:[#allocation7 + $0x48] sm:$0xf]
        %v2312 = vld [vmem:[#allocation7 + $0x4c] sm:$0xf]
        %v2313 = vld [vmem:[#allocation7 + $0x50] sm:$0xf]
        %v2314 = vld [vmem:[#allocation7 + $0x54] sm:$0xf]
        %v2315 = vld [vmem:[#allocation7 + $0x58] sm:$0xf]
        %v2316 = vld [vmem:[#allocation7 + $0x5c] sm:$0xf]
        %v2317 = vld [vmem:[#allocation7 + $0x60] sm:$0xf]
        %v2318 = vld [vmem:[#allocation7 + $0x64] sm:$0xf]
        %v2319 = vld [vmem:[#allocation7 + $0x68] sm:$0xf]
        %v2320 = vld [vmem:[#allocation7 + $0x6c] sm:$0xf]
        %v2321 = vld [vmem:[#allocation7 + $0x70] sm:$0xf]
        %v2322 = vld [vmem:[#allocation7 + $0x74] sm:$0xf]
        %v2323 = vld [vmem:[#allocation7 + $0x78] sm:$0xf]
        %v2324 = vld [vmem:[#allocation7 + $0x7c] sm:$0xf]
        %v2325 = vld [vmem:[#allocation7 + $0x80] sm:$0xf]
        %v2326 = vld [vmem:[#allocation7 + $0x84] sm:$0xf]
        %v2327 = vld [vmem:[#allocation7 + $0x88] sm:$0xf]
        %v2328 = vld [vmem:[#allocation7 + $0x8c] sm:$0xf]
        %v2329 = vld [vmem:[#allocation7 + $0x90] sm:$0xf]
        %v2330 = vld [vmem:[#allocation7 + $0x94] sm:$0xf]
        %v2331 = vld [vmem:[#allocation7 + $0x98] sm:$0xf]
        %v2332 = vld [vmem:[#allocation7 + $0x9c] sm:$0xf]
        %v2333 = vld [vmem:[#allocation7 + $0xa0] sm:$0xf]
        %v2334 = vld [vmem:[#allocation7 + $0xa4] sm:$0xf]
        %v2335 = vld [vmem:[#allocation7 + $0xa8] sm:$0xf]
        %v2336 = vld [vmem:[#allocation7 + $0xac] sm:$0xf]
        %v2337 = vld [vmem:[#allocation7 + $0xb0] sm:$0xf]
        %v2338 = vld [vmem:[#allocation7 + $0xb4] sm:$0xf]
        %v2339 = vld [vmem:[#allocation7 + $0xb8] sm:$0xf]
        %v2340 = vld [vmem:[#allocation7 + $0xbc] sm:$0xf]
        %v2341 = vld [vmem:[#allocation7 + $0xc0] sm:$0xf]
        %v2342 = vld [vmem:[#allocation7 + $0xc4] sm:$0xf]
        %v2343 = vld [vmem:[#allocation7 + $0xc8] sm:$0xf]
        %v2344 = vld [vmem:[#allocation7 + $0xcc] sm:$0xf]
        %v2345 = vld [vmem:[#allocation7 + $0xd0] sm:$0xf]
        %v2346 = vld [vmem:[#allocation7 + $0xd4] sm:$0xf]
        %v2347 = vld [vmem:[#allocation7 + $0xd8] sm:$0xf]
        %v2348 = vld [vmem:[#allocation7 + $0xdc] sm:$0xf]
        %v2349 = vld [vmem:[#allocation7 + $0xe0] sm:$0xf]
        %v2350 = vld [vmem:[#allocation7 + $0xe4] sm:$0xf]
        %v2351 = vld [vmem:[#allocation7 + $0xe8] sm:$0xf]
        %v2352 = vld [vmem:[#allocation7 + $0xec] sm:$0xf]
        %v2353 = vld [vmem:[#allocation7 + $0xf0] sm:$0xf]
        %v2354 = vld [vmem:[#allocation7 + $0xf4] sm:$0xf]
        %v2355 = vld [vmem:[#allocation7 + $0xf8] sm:$0xf]
        %v2356 = vld [vmem:[#allocation7 + $0xfc] sm:$0xf]
        %v2357 = vld [vmem:[%s7] sm:$0x1]
        %v2359 = vperm.slane %v2357, 0
        %v2425 = vunpack.c.l.b16 %v2293
        %v2426 = vunpack.c.l.b16 %v2294
        %v2427 = vunpack.c.l.b16 %v2295
        %v2428 = vunpack.c.l.b16 %v2296
        %v2429 = vunpack.c.l.b16 %v2297
        %v2430 = vunpack.c.l.b16 %v2298
        %v2431 = vunpack.c.l.b16 %v2299
        %v2432 = vunpack.c.l.b16 %v2300
        %v2433 = vunpack.c.l.b16 %v2301
        %v2434 = vunpack.c.l.b16 %v2302
        %v2435 = vunpack.c.l.b16 %v2303
        %v2436 = vunpack.c.l.b16 %v2304
        %v2437 = vunpack.c.l.b16 %v2305
        %v2438 = vunpack.c.l.b16 %v2306
        %v2439 = vunpack.c.l.b16 %v2307
        %v2440 = vunpack.c.l.b16 %v2308
        %v2441 = vunpack.c.l.b16 %v2309
        %v2442 = vunpack.c.l.b16 %v2310
        %v2443 = vunpack.c.l.b16 %v2311
        %v2444 = vunpack.c.l.b16 %v2312
        %v2445 = vunpack.c.l.b16 %v2313
        %v2446 = vunpack.c.l.b16 %v2314
        %v2447 = vunpack.c.l.b16 %v2315
        %v2448 = vunpack.c.l.b16 %v2316
        %v2449 = vunpack.c.l.b16 %v2317
        %v2450 = vunpack.c.l.b16 %v2318
        %v2451 = vunpack.c.l.b16 %v2319
        %v2452 = vunpack.c.l.b16 %v2320
        %v2453 = vunpack.c.l.b16 %v2321
        %v2454 = vunpack.c.l.b16 %v2322
        %v2455 = vunpack.c.l.b16 %v2323
        %v2456 = vunpack.c.l.b16 %v2324
        %v2457 = vunpack.c.l.b16 %v2325
        %v2458 = vunpack.c.l.b16 %v2326
        %v2459 = vunpack.c.l.b16 %v2327
        %v2460 = vunpack.c.l.b16 %v2328
        %v2461 = vunpack.c.l.b16 %v2329
        %v2462 = vunpack.c.l.b16 %v2330
        %v2463 = vunpack.c.l.b16 %v2331
        %v2464 = vunpack.c.l.b16 %v2332
        %v2465 = vunpack.c.l.b16 %v2333
        %v2466 = vunpack.c.l.b16 %v2334
        %v2467 = vunpack.c.l.b16 %v2335
        %v2468 = vunpack.c.l.b16 %v2336
        %v2469 = vunpack.c.l.b16 %v2337
        %v2470 = vunpack.c.l.b16 %v2338
        %v2471 = vunpack.c.l.b16 %v2339
        %v2472 = vunpack.c.l.b16 %v2340
        %v2473 = vunpack.c.l.b16 %v2341
        %v2474 = vunpack.c.l.b16 %v2342
        %v2475 = vunpack.c.l.b16 %v2343
        %v2476 = vunpack.c.l.b16 %v2344
        %v2477 = vunpack.c.l.b16 %v2345
        %v2478 = vunpack.c.l.b16 %v2346
        %v2479 = vunpack.c.l.b16 %v2347
        %v2480 = vunpack.c.l.b16 %v2348
        %v2481 = vunpack.c.l.b16 %v2349
        %v2482 = vunpack.c.l.b16 %v2350
        %v2483 = vunpack.c.l.b16 %v2351
        %v2484 = vunpack.c.l.b16 %v2352
        %v2485 = vunpack.c.l.b16 %v2353
        %v2486 = vunpack.c.l.b16 %v2354
        %v2487 = vunpack.c.l.b16 %v2355
        %v2488 = vunpack.c.l.b16 %v2356
        %v2489 = vpack.c.b16 %v2426, %v2425
        %v2490 = vpack.c.b16 %v2428, %v2427
        %v2491 = vpack.c.b16 %v2430, %v2429
        %v2492 = vpack.c.b16 %v2432, %v2431
        %v2493 = vpack.c.b16 %v2434, %v2433
        %v2494 = vpack.c.b16 %v2436, %v2435
        %v2495 = vpack.c.b16 %v2438, %v2437
        %v2496 = vpack.c.b16 %v2440, %v2439
        %v2497 = vpack.c.b16 %v2442, %v2441
        %v2498 = vpack.c.b16 %v2444, %v2443
        %v2499 = vpack.c.b16 %v2446, %v2445
        %v2500 = vpack.c.b16 %v2448, %v2447
        %v2501 = vpack.c.b16 %v2450, %v2449
        %v2502 = vpack.c.b16 %v2452, %v2451
        %v2503 = vpack.c.b16 %v2454, %v2453
        %v2504 = vpack.c.b16 %v2456, %v2455
        %v2505 = vpack.c.b16 %v2458, %v2457
        %v2506 = vpack.c.b16 %v2460, %v2459
        %v2507 = vpack.c.b16 %v2462, %v2461
        %v2508 = vpack.c.b16 %v2464, %v2463
        %v2509 = vpack.c.b16 %v2466, %v2465
        %v2510 = vpack.c.b16 %v2468, %v2467
        %v2511 = vpack.c.b16 %v2470, %v2469
        %v2512 = vpack.c.b16 %v2472, %v2471
        %v2513 = vpack.c.b16 %v2474, %v2473
        %v2514 = vpack.c.b16 %v2476, %v2475
        %v2515 = vpack.c.b16 %v2478, %v2477
        %v2516 = vpack.c.b16 %v2480, %v2479
        %v2517 = vpack.c.b16 %v2482, %v2481
        %v2518 = vpack.c.b16 %v2484, %v2483
        %v2519 = vpack.c.b16 %v2486, %v2485
        %v2520 = vpack.c.b16 %v2488, %v2487
        %2553 = vmatpush.bf16.msra.mxu0 %v2496
        %2554 = vmatpush.bf16.msra.mxu0 %v2495
        %2555 = vmatpush.bf16.msra.mxu0 %v2494
        %2556 = vmatpush.bf16.msra.mxu0 %v2493
        %2557 = vmatpush.bf16.msra.mxu0 %v2492
        %2558 = vmatpush.bf16.msra.mxu0 %v2491
        %2559 = vmatpush.bf16.msra.mxu0 %v2490
        %2560 = vmatpush.bf16.msra.mxu0 %v2489
        %2561 = vmatmul.bf16.gmra.mxu0 %v2289
        %v2562 = vpop.f32.mrf.mxu0
        %v2563 = vadd.f32 %v2359, %v2562
        %v2564 = vpop.f32.mrf.mxu0
        %2565 = vdwg.mxu0
        %2566 = vmatpush.bf16.msra.mxu0 %v2504
        %2567 = vmatpush.bf16.msra.mxu0 %v2503
        %2568 = vmatpush.bf16.msra.mxu0 %v2502
        %2569 = vmatpush.bf16.msra.mxu0 %v2501
        %2570 = vmatpush.bf16.msra.mxu0 %v2500
        %2571 = vmatpush.bf16.msra.mxu0 %v2499
        %2572 = vmatpush.bf16.msra.mxu0 %v2498
        %2573 = vmatpush.bf16.msra.mxu0 %v2497
        %2574 = vmatmul.bf16.gmra.mxu0 %v2290
        %v2575 = vpop.f32.mrf.mxu0
        %v2576 = vadd.f32 %v2563, %v2575
        %v2577 = vpop.f32.mrf.mxu0
        %2578 = vdwg.mxu0
        %2579 = vmatpush.bf16.msra.mxu0 %v2512
        %2580 = vmatpush.bf16.msra.mxu0 %v2511
        %2581 = vmatpush.bf16.msra.mxu0 %v2510
        %2582 = vmatpush.bf16.msra.mxu0 %v2509
        %2583 = vmatpush.bf16.msra.mxu0 %v2508
        %2584 = vmatpush.bf16.msra.mxu0 %v2507
        %2585 = vmatpush.bf16.msra.mxu0 %v2506
        %2586 = vmatpush.bf16.msra.mxu0 %v2505
        %2587 = vmatmul.bf16.gmra.mxu0 %v2291
        %v2588 = vpop.f32.mrf.mxu0
        %v2589 = vadd.f32 %v2576, %v2588
        %v2590 = vpop.f32.mrf.mxu0
        %2591 = vdwg.mxu0
        %2592 = vmatpush.bf16.msra.mxu0 %v2520
        %2593 = vmatpush.bf16.msra.mxu0 %v2519
        %2594 = vmatpush.bf16.msra.mxu0 %v2518
        %2595 = vmatpush.bf16.msra.mxu0 %v2517
        %2596 = vmatpush.bf16.msra.mxu0 %v2516
        %2597 = vmatpush.bf16.msra.mxu0 %v2515
        %2598 = vmatpush.bf16.msra.mxu0 %v2514
        %2599 = vmatpush.bf16.msra.mxu0 %v2513
        %2600 = vmatmul.bf16.gmra.mxu0 %v2292
        %v2601 = vpop.f32.mrf.mxu0
        %v2602 = vadd.f32 %v2589, %v2601
        %v2603 = vpop.f32.mrf.mxu0
        %2604 = vdwg.mxu0
        %2605 = vmatpush.xpose.msra.mxu0 0.0
        %2606 = vmatpush.xpose.msra.mxu0 0.0
        %2607 = vmatpush.xpose.msra.mxu0 0.0
        %2608 = vmatpush.xpose.msra.mxu0 0.0
        %2609 = vmatpush.xpose.msra.mxu0 0.0
        %2610 = vmatpush.xpose.msra.mxu0 0.0
        %2611 = vmatpush.xpose.msra.mxu0 0.0
        %2612 = vmatpush.xpose.msra.mxu0 0.0
        %2613 = vmatpush.xpose.msra.mxu0 0.0
        %2614 = vmatpush.xpose.msra.mxu0 0.0
        %2615 = vmatpush.xpose.msra.mxu0 0.0
        %2616 = vmatpush.xpose.msra.mxu0 0.0
        %2617 = vmatpush.xpose.msra.mxu0 0.0
        %2618 = vmatpush.xpose.msra.mxu0 0.0
        %2619 = vmatpush.xpose.msra.mxu0 %v628
        %2620 = vmatpush.xpose.msra.mxu0 %v627
        %2621 = vmatmul.f32.gmra.mxu0 %v2602
        %v2622 = vpop.f32.mrf.mxu0
        %v2623 = vadd.f32 0.0, %v2622
        %2624 = vdwg.mxu0
        %v2625 = vsel %vm846, %v2623, -inf
        %2626 = vmax.xlane.f32.xlu0 %v2625
        %v2627 = vpop.xlane.xlu0 %2626
        %v2628 = vsub.f32 %v2623, %v2627
        %v2629 = vmul.f32 %v2628, 1.442695
        %v2630 = vpow.pop %v2629
        %v2631 = vsel %vm846, %v2630, 0.0
        %2632 = vadd.xlane.f32.xlu0 %v2631
        %v2633 = vpop.xlane.xlu0 %2632
        %v2634 = vrcp.pop %v2633
        %v2635 = vmul.f32 %v2630, %v2634
        %v2637 = vsel %vm846, %v2635, 0
        %vm2639 = vcmask 1041408
        %v2641 = vsel %vm2639, %v628, 0
        %2643 = vmatpush.msra.mxu0 0.0
        %2644 = vmatpush.msra.mxu0 0.0
        %2645 = vmatpush.msra.mxu0 0.0
        %2646 = vmatpush.msra.mxu0 0.0
        %2647 = vmatpush.msra.mxu0 0.0
        %2648 = vmatpush.msra.mxu0 0.0
        %2649 = vmatpush.msra.mxu0 0.0
        %2650 = vmatpush.msra.mxu0 0.0
        %2651 = vmatpush.msra.mxu0 0.0
        %2652 = vmatpush.msra.mxu0 0.0
        %2653 = vmatpush.msra.mxu0 0.0
        %2654 = vmatpush.msra.mxu0 0.0
        %2655 = vmatpush.msra.mxu0 0.0
        %2656 = vmatpush.msra.mxu0 0.0
        %2657 = vmatpush.msra.mxu0 %v2641
        %2658 = vmatpush.msra.mxu0 %v627
        %2659 = vmatmul.f32.gmra.mxu0 %v2637
        %v2660 = vpop.f32.mrf.mxu0
        %v2661 = vadd.f32 0.0, %v2660
        %2662 = vdwg.mxu0
        %v2663 = vlaneseq
        %v2664 = vand.u32 %v2663, 127
        %v2665 = vsel %vm846, %v626, -inf
        %2666 = vmax.xlane.f32.xlu0 %v2665
        %v2667 = vpop.xlane.xlu0 %2666
        %vm2668 = vcmp.eq.f32.partialorder %v626, %v2667
        %v2669 = vsel %vm2668, %v2664, 10
        %v2670 = vsel %vm846, %v2669, 2147483647
        %v2671 = vand.u32 %v2670, 65535
        %v2672 = vshra.s32 %v2670, 16
        %v2673 = vcvt.s32.f32 %v2671
        %v2674 = vcvt.s32.f32 %v2672
        %2675 = vmin.xlane.f32.xlu0 %v2674
        %v2676 = vpop.xlane.xlu0 %2675
        %vm2677 = vcmp.eq.f32.partialorder %v2674, %v2676
        %v2678 = vsel %vm2677, %v2673, inf
        %2679 = vmin.xlane.f32.xlu0 %v2678
        %v2680 = vpop.xlane.xlu0 %2679
        %v2681 = vcvt.f32.s32 %v2680
        %v2682 = vcvt.f32.s32 %v2676
        %v2683 = vshll.u32 %v2682, 16
        %v2684 = vadd.s32 %v2683, %v2681
        %vm2685 = vcmp.eq.s32.totalorder %v2664, %v2684
        %v2686 = vsel %vm2685, 1, 0
        %v2687 = vcvt.s32.f32 %v2686
        %2688 = vxpose.xlu0.b32.start [1/16] %v2687, 128
        %2689 = vxpose.xlu0.b32.cont [2/16] 0.0, 128
        %2690 = vxpose.xlu0.b32.cont [3/16] 0.0, 128
        %2691 = vxpose.xlu0.b32.cont [4/16] 0.0, 128
        %2692 = vxpose.xlu0.b32.cont [5/16] 0.0, 128
        %2693 = vxpose.xlu0.b32.cont [6/16] 0.0, 128
        %2694 = vxpose.xlu0.b32.cont [7/16] 0.0, 128
        %2695 = vxpose.xlu0.b32.cont [8/16] 0.0, 128
        %2696 = vxpose.xlu0.b32.cont [9/16] 0.0, 128
        %2697 = vxpose.xlu0.b32.cont [10/16] 0.0, 128
        %2698 = vxpose.xlu0.b32.cont [11/16] 0.0, 128
        %2699 = vxpose.xlu0.b32.cont [12/16] 0.0, 128
        %2700 = vxpose.xlu0.b32.cont [13/16] 0.0, 128
        %2701 = vxpose.xlu0.b32.cont [14/16] 0.0, 128
        %2702 = vxpose.xlu0.b32.cont [15/16] 0.0, 128
        %2703 = vxpose.xlu0.b32.end [16/16] 0.0, 128
        %v2704 = vpop.trf.xlu0
        %v2705 = vpop.trf.xlu0
        %v2706 = vpop.trf.xlu0
        %v2707 = vpop.trf.xlu0
        %v2708 = vpop.trf.xlu0
        %v2709 = vpop.trf.xlu0
        %v2710 = vpop.trf.xlu0
        %v2711 = vpop.trf.xlu0
        %v2712 = vpop.trf.xlu0
        %v2713 = vpop.trf.xlu0
        %v2714 = vpop.trf.xlu0
        %v2715 = vpop.trf.xlu0
        %v2716 = vpop.trf.xlu0
        %v2717 = vpop.trf.xlu0
        %v2718 = vpop.trf.xlu0
        %v2719 = vpop.trf.xlu0
        %vm2720 = vcmask 64512
        %v2722 = vsel %vm2720, %v2704, 0
        %v2725 = vsel %vm2720, %v2705, 0
        %2727 = vmatpush.msra.mxu0 0.0
        %2728 = vmatpush.msra.mxu0 0.0
        %2729 = vmatpush.msra.mxu0 0.0
        %2730 = vmatpush.msra.mxu0 0.0
        %2731 = vmatpush.msra.mxu0 0.0
        %2732 = vmatpush.msra.mxu0 0.0
        %2733 = vmatpush.msra.mxu0 0.0
        %2734 = vmatpush.msra.mxu0 0.0
        %2735 = vmatpush.msra.mxu0 0.0
        %2736 = vmatpush.msra.mxu0 0.0
        %2737 = vmatpush.msra.mxu0 0.0
        %2738 = vmatpush.msra.mxu0 0.0
        %2739 = vmatpush.msra.mxu0 0.0
        %2740 = vmatpush.msra.mxu0 0.0
        %2741 = vmatpush.msra.mxu0 0.0
        %2742 = vmatpush.msra.mxu0 %v2661
        %2743 = vmatmul.f32.gmra.mxu0 %v2722
        %v2744 = vpop.f32.mrf.mxu0
        %v2745 = vadd.f32 0.0, %v2744
        %2746 = vmatmul.f32.gmra.mxu0 %v2725
        %v2747 = vpop.f32.mrf.mxu0
        %v2748 = vadd.f32 0.0, %v2747
        %2749 = vdwg.mxu0
        %p2750 = scmp.eq.s32.totalorder %s35, 0
        // Predicated region
        $region101: #{discriminator_forward.1} parent=75 // pred_check
          %p2751 = pneg %p2750
        $region102: #{discriminator_forward.1} parent=75 // pred_check_branch
          %2753 = sbr.rel (%p2751) target = $region104
        $region103: #{discriminator_forward.1} parent=75 // pred_region
          %2754 = vst [vmem:[%s15] sm:$0xff] 0.0
          %2755 = vst [vmem:[%s15 + $0x8] sm:$0x3] 0.0
        $region104: #{discriminator_forward.1} parent=75 // pred_fallthru
          _
        %v2756 = vld [vmem:[%s15] sm:$0xff]
        %v2757 = vld [vmem:[%s15 + $0x8] sm:$0x3]
        %v2758 = vadd.f32 %v2756, %v2745
        %v2759 = vadd.f32 %v2757, %v2748
        %2760 = vst [vmem:[%s15] sm:$0xff] %v2758
        %2761 = vst [vmem:[%s15 + $0x8] sm:$0x3] %v2759
        %p2762 = scmp.eq.s32.totalorder %s35, 1
        // Predicated region
        $region105: #{discriminator_forward.1} parent=75 // pred_check
          %p2763 = pneg %p2762
        $region106: #{discriminator_forward.1} parent=75 // pred_check_branch
          %2765 = sbr.rel (%p2763) target = $region108
        $region107: #{discriminator_forward.1} parent=75 // pred_region
          %v2766 = vmul.f32 %v627, 0.6
          %v2767 = vmul.f32 %v628, 0.6
          %v2768 = vld [vmem:[%s15] sm:$0xff]
          %v2769 = vld [vmem:[%s15 + $0x8] sm:$0x3]
          %v2770 = vmul.f32 %v2768, 0.4
          %v2771 = vmul.f32 %v2769, 0.4
          %v2772 = vmul.f32 %v2770, 0.0625
          %v2773 = vmul.f32 %v2771, 0.0625
          %v2774 = vadd.f32 %v2766, %v2772
          %v2775 = vadd.f32 %v2767, %v2773
          %2776 = vst [vmem:[%s15] sm:$0xff] %v2774
          %2777 = vst [vmem:[%s15 + $0x8] sm:$0x3] %v2775
        $region108: #{discriminator_forward.1} parent=75 // pred_fallthru
          _
        %v2778 = vpack.c.bf16 %v2661, %v2661
        %v2779 = vld [vmem:[#allocation8] sm:$0xff]
        %v2780 = vld [vmem:[#allocation8 + $0x8] sm:$0xff]
        %v2781 = vld [vmem:[#allocation8 + $0x10] sm:$0xff]
        %v2782 = vld [vmem:[#allocation8 + $0x18] sm:$0xff]
        %v2783 = vld [vmem:[#allocation8 + $0x20] sm:$0xff]
        %v2784 = vld [vmem:[#allocation8 + $0x28] sm:$0xff]
        %v2785 = vld [vmem:[#allocation8 + $0x30] sm:$0xff]
        %v2786 = vld [vmem:[#allocation8 + $0x38] sm:$0xff]
        %v2787 = vld [vmem:[#allocation8 + $0x40] sm:$0xff]
        %v2788 = vld [vmem:[#allocation8 + $0x48] sm:$0xff]
        %v2789 = vld [vmem:[#allocation8 + $0x50] sm:$0xff]
        %v2790 = vld [vmem:[#allocation8 + $0x58] sm:$0xff]
        %v2791 = vld [vmem:[#allocation8 + $0x60] sm:$0xff]
        %v2792 = vld [vmem:[#allocation8 + $0x68] sm:$0xff]
        %v2793 = vld [vmem:[#allocation8 + $0x70] sm:$0xff]
        %v2794 = vld [vmem:[#allocation8 + $0x78] sm:$0xff]
        %v2795 = vld [vmem:[#allocation8 + $0x80] sm:$0xff]
        %v2796 = vld [vmem:[#allocation8 + $0x88] sm:$0xff]
        %v2797 = vld [vmem:[#allocation8 + $0x90] sm:$0xff]
        %v2798 = vld [vmem:[#allocation8 + $0x98] sm:$0xff]
        %v2799 = vld [vmem:[#allocation8 + $0xa0] sm:$0xff]
        %v2800 = vld [vmem:[#allocation8 + $0xa8] sm:$0xff]
        %v2801 = vld [vmem:[#allocation8 + $0xb0] sm:$0xff]
        %v2802 = vld [vmem:[#allocation8 + $0xb8] sm:$0xff]
        %v2803 = vld [vmem:[#allocation8 + $0xc0] sm:$0xff]
        %v2804 = vld [vmem:[#allocation8 + $0xc8] sm:$0xff]
        %v2805 = vld [vmem:[#allocation8 + $0xd0] sm:$0xff]
        %v2806 = vld [vmem:[#allocation8 + $0xd8] sm:$0xff]
        %v2807 = vld [vmem:[#allocation8 + $0xe0] sm:$0xff]
        %v2808 = vld [vmem:[#allocation8 + $0xe8] sm:$0xff]
        %v2809 = vld [vmem:[#allocation8 + $0xf0] sm:$0xff]
        %v2810 = vld [vmem:[#allocation8 + $0xf8] sm:$0xff]
        %v2811 = vld [vmem:[#allocation10] sm:$0xf]
        %v2813 = vperm.slane %v2811, 0
        %v2814 = vperm.slane %v2811, 1
        %v2815 = vperm.slane %v2811, 2
        %v2816 = vperm.slane %v2811, 3
        %v2853 = vunpack.c.l.b16 %v2779
        %v2854 = vunpack.c.h.b16 %v2779
        %v2855 = vunpack.c.l.b16 %v2780
        %v2856 = vunpack.c.h.b16 %v2780
        %v2857 = vunpack.c.l.b16 %v2781
        %v2858 = vunpack.c.h.b16 %v2781
        %v2859 = vunpack.c.l.b16 %v2782
        %v2860 = vunpack.c.h.b16 %v2782
        %v2861 = vunpack.c.l.b16 %v2783
        %v2862 = vunpack.c.h.b16 %v2783
        %v2863 = vunpack.c.l.b16 %v2784
        %v2864 = vunpack.c.h.b16 %v2784
        %v2865 = vunpack.c.l.b16 %v2785
        %v2866 = vunpack.c.h.b16 %v2785
        %v2867 = vunpack.c.l.b16 %v2786
        %v2868 = vunpack.c.h.b16 %v2786
        %v2869 = vunpack.c.l.b16 %v2787
        %v2870 = vunpack.c.h.b16 %v2787
        %v2871 = vunpack.c.l.b16 %v2788
        %v2872 = vunpack.c.h.b16 %v2788
        %v2873 = vunpack.c.l.b16 %v2789
        %v2874 = vunpack.c.h.b16 %v2789
        %v2875 = vunpack.c.l.b16 %v2790
        %v2876 = vunpack.c.h.b16 %v2790
        %v2877 = vunpack.c.l.b16 %v2791
        %v2878 = vunpack.c.h.b16 %v2791
        %v2879 = vunpack.c.l.b16 %v2792
        %v2880 = vunpack.c.h.b16 %v2792
        %v2881 = vunpack.c.l.b16 %v2793
        %v2882 = vunpack.c.h.b16 %v2793
        %v2883 = vunpack.c.l.b16 %v2794
        %v2884 = vunpack.c.h.b16 %v2794
        %v2885 = vunpack.c.l.b16 %v2795
        %v2886 = vunpack.c.h.b16 %v2795
        %v2887 = vunpack.c.l.b16 %v2796
        %v2888 = vunpack.c.h.b16 %v2796
        %v2889 = vunpack.c.l.b16 %v2797
        %v2890 = vunpack.c.h.b16 %v2797
        %v2891 = vunpack.c.l.b16 %v2798
        %v2892 = vunpack.c.h.b16 %v2798
        %v2893 = vunpack.c.l.b16 %v2799
        %v2894 = vunpack.c.h.b16 %v2799
        %v2895 = vunpack.c.l.b16 %v2800
        %v2896 = vunpack.c.h.b16 %v2800
        %v2897 = vunpack.c.l.b16 %v2801
        %v2898 = vunpack.c.h.b16 %v2801
        %v2899 = vunpack.c.l.b16 %v2802
        %v2900 = vunpack.c.h.b16 %v2802
        %v2901 = vunpack.c.l.b16 %v2803
        %v2902 = vunpack.c.h.b16 %v2803
        %v2903 = vunpack.c.l.b16 %v2804
        %v2904 = vunpack.c.h.b16 %v2804
        %v2905 = vunpack.c.l.b16 %v2805
        %v2906 = vunpack.c.h.b16 %v2805
        %v2907 = vunpack.c.l.b16 %v2806
        %v2908 = vunpack.c.h.b16 %v2806
        %v2909 = vunpack.c.l.b16 %v2807
        %v2910 = vunpack.c.h.b16 %v2807
        %v2911 = vunpack.c.l.b16 %v2808
        %v2912 = vunpack.c.h.b16 %v2808
        %v2913 = vunpack.c.l.b16 %v2809
        %v2914 = vunpack.c.h.b16 %v2809
        %v2915 = vunpack.c.l.b16 %v2810
        %v2916 = vunpack.c.h.b16 %v2810
        %v2917 = vpack.c.b16 %v2857, %v2853
        %v2918 = vpack.c.b16 %v2858, %v2854
        %v2919 = vpack.c.b16 %v2859, %v2855
        %v2920 = vpack.c.b16 %v2860, %v2856
        %v2921 = vpack.c.b16 %v2865, %v2861
        %v2922 = vpack.c.b16 %v2866, %v2862
        %v2923 = vpack.c.b16 %v2867, %v2863
        %v2924 = vpack.c.b16 %v2868, %v2864
        %v2925 = vpack.c.b16 %v2873, %v2869
        %v2926 = vpack.c.b16 %v2874, %v2870
        %v2927 = vpack.c.b16 %v2875, %v2871
        %v2928 = vpack.c.b16 %v2876, %v2872
        %v2929 = vpack.c.b16 %v2881, %v2877
        %v2930 = vpack.c.b16 %v2882, %v2878
        %v2931 = vpack.c.b16 %v2883, %v2879
        %v2932 = vpack.c.b16 %v2884, %v2880
        %v2933 = vpack.c.b16 %v2889, %v2885
        %v2934 = vpack.c.b16 %v2890, %v2886
        %v2935 = vpack.c.b16 %v2891, %v2887
        %v2936 = vpack.c.b16 %v2892, %v2888
        %v2937 = vpack.c.b16 %v2897, %v2893
        %v2938 = vpack.c.b16 %v2898, %v2894
        %v2939 = vpack.c.b16 %v2899, %v2895
        %v2940 = vpack.c.b16 %v2900, %v2896
        %v2941 = vpack.c.b16 %v2905, %v2901
        %v2942 = vpack.c.b16 %v2906, %v2902
        %v2943 = vpack.c.b16 %v2907, %v2903
        %v2944 = vpack.c.b16 %v2908, %v2904
        %v2945 = vpack.c.b16 %v2913, %v2909
        %v2946 = vpack.c.b16 %v2914, %v2910
        %v2947 = vpack.c.b16 %v2915, %v2911
        %v2948 = vpack.c.b16 %v2916, %v2912
        %2981 = vmatpush.bf16.msra.mxu0 %v2945
        %2982 = vmatpush.bf16.msra.mxu0 %v2941
        %2983 = vmatpush.bf16.msra.mxu0 %v2937
        %2984 = vmatpush.bf16.msra.mxu0 %v2933
        %2985 = vmatpush.bf16.msra.mxu0 %v2929
        %2986 = vmatpush.bf16.msra.mxu0 %v2925
        %2987 = vmatpush.bf16.msra.mxu0 %v2921
        %2988 = vmatpush.bf16.msra.mxu0 %v2917
        %2989 = vmatmul.bf16.gmra.mxu0 %v2778
        %v2990 = vpop.f32.mrf.mxu0
        %v2991 = vadd.f32 %v2813, %v2990
        %v2992 = vpop.f32.mrf.mxu0
        %2993 = vdwg.mxu0
        %2994 = vmatpush.bf16.msra.mxu0 %v2946
        %2995 = vmatpush.bf16.msra.mxu0 %v2942
        %2996 = vmatpush.bf16.msra.mxu0 %v2938
        %2997 = vmatpush.bf16.msra.mxu0 %v2934
        %2998 = vmatpush.bf16.msra.mxu0 %v2930
        %2999 = vmatpush.bf16.msra.mxu0 %v2926
        %3000 = vmatpush.bf16.msra.mxu0 %v2922
        %3001 = vmatpush.bf16.msra.mxu0 %v2918
        %3002 = vmatmul.bf16.gmra.mxu0 %v2778
        %v3003 = vpop.f32.mrf.mxu0
        %v3004 = vadd.f32 %v2814, %v3003
        %v3005 = vpop.f32.mrf.mxu0
        %3006 = vdwg.mxu0
        %3007 = vmatpush.bf16.msra.mxu0 %v2947
        %3008 = vmatpush.bf16.msra.mxu0 %v2943
        %3009 = vmatpush.bf16.msra.mxu0 %v2939
        %3010 = vmatpush.bf16.msra.mxu0 %v2935
        %3011 = vmatpush.bf16.msra.mxu0 %v2931
        %3012 = vmatpush.bf16.msra.mxu0 %v2927
        %3013 = vmatpush.bf16.msra.mxu0 %v2923
        %3014 = vmatpush.bf16.msra.mxu0 %v2919
        %3015 = vmatmul.bf16.gmra.mxu0 %v2778
        %v3016 = vpop.f32.mrf.mxu0
        %v3017 = vadd.f32 %v2815, %v3016
        %v3018 = vpop.f32.mrf.mxu0
        %3019 = vdwg.mxu0
        %3020 = vmatpush.bf16.msra.mxu0 %v2948
        %3021 = vmatpush.bf16.msra.mxu0 %v2944
        %3022 = vmatpush.bf16.msra.mxu0 %v2940
        %3023 = vmatpush.bf16.msra.mxu0 %v2936
        %3024 = vmatpush.bf16.msra.mxu0 %v2932
        %3025 = vmatpush.bf16.msra.mxu0 %v2928
        %3026 = vmatpush.bf16.msra.mxu0 %v2924
        %3027 = vmatpush.bf16.msra.mxu0 %v2920
        %3028 = vmatmul.bf16.gmra.mxu0 %v2778
        %v3029 = vpop.f32.mrf.mxu0
        %v3030 = vadd.f32 %v2816, %v3029
        %v3031 = vpop.f32.mrf.mxu0
        %3032 = vdwg.mxu0
        %v3033 = vadd.f32 %v2991, %v2285
        %v3034 = vadd.f32 %v3004, %v2286
        %v3035 = vadd.f32 %v3017, %v2287
        %v3036 = vadd.f32 %v3030, %v2288
        %v3037 = vpack.c.bf16 %v3033, %v3033
        %v3038 = vpack.c.bf16 %v3034, %v3034
        %v3039 = vpack.c.bf16 %v3035, %v3035
        %v3040 = vpack.c.bf16 %v3036, %v3036
        %v3041 = vld [vmem:[#allocation11] sm:$0xf]
        %v3042 = vld [vmem:[#allocation11 + $0x4] sm:$0xf]
        %v3043 = vld [vmem:[#allocation11 + $0x8] sm:$0xf]
        %v3044 = vld [vmem:[#allocation11 + $0xc] sm:$0xf]
        %v3045 = vld [vmem:[#allocation11 + $0x10] sm:$0xf]
        %v3046 = vld [vmem:[#allocation11 + $0x14] sm:$0xf]
        %v3047 = vld [vmem:[#allocation11 + $0x18] sm:$0xf]
        %v3048 = vld [vmem:[#allocation11 + $0x1c] sm:$0xf]
        %v3049 = vld [vmem:[#allocation11 + $0x20] sm:$0xf]
        %v3050 = vld [vmem:[#allocation11 + $0x24] sm:$0xf]
        %v3051 = vld [vmem:[#allocation11 + $0x28] sm:$0xf]
        %v3052 = vld [vmem:[#allocation11 + $0x2c] sm:$0xf]
        %v3053 = vld [vmem:[#allocation11 + $0x30] sm:$0xf]
        %v3054 = vld [vmem:[#allocation11 + $0x34] sm:$0xf]
        %v3055 = vld [vmem:[#allocation11 + $0x38] sm:$0xf]
        %v3056 = vld [vmem:[#allocation11 + $0x3c] sm:$0xf]
        %v3057 = vld [vmem:[#allocation11 + $0x40] sm:$0xf]
        %v3058 = vld [vmem:[#allocation11 + $0x44] sm:$0xf]
        %v3059 = vld [vmem:[#allocation11 + $0x48] sm:$0xf]
        %v3060 = vld [vmem:[#allocation11 + $0x4c] sm:$0xf]
        %v3061 = vld [vmem:[#allocation11 + $0x50] sm:$0xf]
        %v3062 = vld [vmem:[#allocation11 + $0x54] sm:$0xf]
        %v3063 = vld [vmem:[#allocation11 + $0x58] sm:$0xf]
        %v3064 = vld [vmem:[#allocation11 + $0x5c] sm:$0xf]
        %v3065 = vld [vmem:[#allocation11 + $0x60] sm:$0xf]
        %v3066 = vld [vmem:[#allocation11 + $0x64] sm:$0xf]
        %v3067 = vld [vmem:[#allocation11 + $0x68] sm:$0xf]
        %v3068 = vld [vmem:[#allocation11 + $0x6c] sm:$0xf]
        %v3069 = vld [vmem:[#allocation11 + $0x70] sm:$0xf]
        %v3070 = vld [vmem:[#allocation11 + $0x74] sm:$0xf]
        %v3071 = vld [vmem:[#allocation11 + $0x78] sm:$0xf]
        %v3072 = vld [vmem:[#allocation11 + $0x7c] sm:$0xf]
        %v3073 = vld [vmem:[#allocation11 + $0x80] sm:$0xf]
        %v3074 = vld [vmem:[#allocation11 + $0x84] sm:$0xf]
        %v3075 = vld [vmem:[#allocation11 + $0x88] sm:$0xf]
        %v3076 = vld [vmem:[#allocation11 + $0x8c] sm:$0xf]
        %v3077 = vld [vmem:[#allocation11 + $0x90] sm:$0xf]
        %v3078 = vld [vmem:[#allocation11 + $0x94] sm:$0xf]
        %v3079 = vld [vmem:[#allocation11 + $0x98] sm:$0xf]
        %v3080 = vld [vmem:[#allocation11 + $0x9c] sm:$0xf]
        %v3081 = vld [vmem:[#allocation11 + $0xa0] sm:$0xf]
        %v3082 = vld [vmem:[#allocation11 + $0xa4] sm:$0xf]
        %v3083 = vld [vmem:[#allocation11 + $0xa8] sm:$0xf]
        %v3084 = vld [vmem:[#allocation11 + $0xac] sm:$0xf]
        %v3085 = vld [vmem:[#allocation11 + $0xb0] sm:$0xf]
        %v3086 = vld [vmem:[#allocation11 + $0xb4] sm:$0xf]
        %v3087 = vld [vmem:[#allocation11 + $0xb8] sm:$0xf]
        %v3088 = vld [vmem:[#allocation11 + $0xbc] sm:$0xf]
        %v3089 = vld [vmem:[#allocation11 + $0xc0] sm:$0xf]
        %v3090 = vld [vmem:[#allocation11 + $0xc4] sm:$0xf]
        %v3091 = vld [vmem:[#allocation11 + $0xc8] sm:$0xf]
        %v3092 = vld [vmem:[#allocation11 + $0xcc] sm:$0xf]
        %v3093 = vld [vmem:[#allocation11 + $0xd0] sm:$0xf]
        %v3094 = vld [vmem:[#allocation11 + $0xd4] sm:$0xf]
        %v3095 = vld [vmem:[#allocation11 + $0xd8] sm:$0xf]
        %v3096 = vld [vmem:[#allocation11 + $0xdc] sm:$0xf]
        %v3097 = vld [vmem:[#allocation11 + $0xe0] sm:$0xf]
        %v3098 = vld [vmem:[#allocation11 + $0xe4] sm:$0xf]
        %v3099 = vld [vmem:[#allocation11 + $0xe8] sm:$0xf]
        %v3100 = vld [vmem:[#allocation11 + $0xec] sm:$0xf]
        %v3101 = vld [vmem:[#allocation11 + $0xf0] sm:$0xf]
        %v3102 = vld [vmem:[#allocation11 + $0xf4] sm:$0xf]
        %v3103 = vld [vmem:[#allocation11 + $0xf8] sm:$0xf]
        %v3104 = vld [vmem:[#allocation11 + $0xfc] sm:$0xf]
        %v3105 = vld [vmem:[%s11] sm:$0x1]
        %v3107 = vperm.slane %v3105, 0
        %v3173 = vunpack.c.l.b16 %v3041
        %v3174 = vunpack.c.l.b16 %v3042
        %v3175 = vunpack.c.l.b16 %v3043
        %v3176 = vunpack.c.l.b16 %v3044
        %v3177 = vunpack.c.l.b16 %v3045
        %v3178 = vunpack.c.l.b16 %v3046
        %v3179 = vunpack.c.l.b16 %v3047
        %v3180 = vunpack.c.l.b16 %v3048
        %v3181 = vunpack.c.l.b16 %v3049
        %v3182 = vunpack.c.l.b16 %v3050
        %v3183 = vunpack.c.l.b16 %v3051
        %v3184 = vunpack.c.l.b16 %v3052
        %v3185 = vunpack.c.l.b16 %v3053
        %v3186 = vunpack.c.l.b16 %v3054
        %v3187 = vunpack.c.l.b16 %v3055
        %v3188 = vunpack.c.l.b16 %v3056
        %v3189 = vunpack.c.l.b16 %v3057
        %v3190 = vunpack.c.l.b16 %v3058
        %v3191 = vunpack.c.l.b16 %v3059
        %v3192 = vunpack.c.l.b16 %v3060
        %v3193 = vunpack.c.l.b16 %v3061
        %v3194 = vunpack.c.l.b16 %v3062
        %v3195 = vunpack.c.l.b16 %v3063
        %v3196 = vunpack.c.l.b16 %v3064
        %v3197 = vunpack.c.l.b16 %v3065
        %v3198 = vunpack.c.l.b16 %v3066
        %v3199 = vunpack.c.l.b16 %v3067
        %v3200 = vunpack.c.l.b16 %v3068
        %v3201 = vunpack.c.l.b16 %v3069
        %v3202 = vunpack.c.l.b16 %v3070
        %v3203 = vunpack.c.l.b16 %v3071
        %v3204 = vunpack.c.l.b16 %v3072
        %v3205 = vunpack.c.l.b16 %v3073
        %v3206 = vunpack.c.l.b16 %v3074
        %v3207 = vunpack.c.l.b16 %v3075
        %v3208 = vunpack.c.l.b16 %v3076
        %v3209 = vunpack.c.l.b16 %v3077
        %v3210 = vunpack.c.l.b16 %v3078
        %v3211 = vunpack.c.l.b16 %v3079
        %v3212 = vunpack.c.l.b16 %v3080
        %v3213 = vunpack.c.l.b16 %v3081
        %v3214 = vunpack.c.l.b16 %v3082
        %v3215 = vunpack.c.l.b16 %v3083
        %v3216 = vunpack.c.l.b16 %v3084
        %v3217 = vunpack.c.l.b16 %v3085
        %v3218 = vunpack.c.l.b16 %v3086
        %v3219 = vunpack.c.l.b16 %v3087
        %v3220 = vunpack.c.l.b16 %v3088
        %v3221 = vunpack.c.l.b16 %v3089
        %v3222 = vunpack.c.l.b16 %v3090
        %v3223 = vunpack.c.l.b16 %v3091
        %v3224 = vunpack.c.l.b16 %v3092
        %v3225 = vunpack.c.l.b16 %v3093
        %v3226 = vunpack.c.l.b16 %v3094
        %v3227 = vunpack.c.l.b16 %v3095
        %v3228 = vunpack.c.l.b16 %v3096
        %v3229 = vunpack.c.l.b16 %v3097
        %v3230 = vunpack.c.l.b16 %v3098
        %v3231 = vunpack.c.l.b16 %v3099
        %v3232 = vunpack.c.l.b16 %v3100
        %v3233 = vunpack.c.l.b16 %v3101
        %v3234 = vunpack.c.l.b16 %v3102
        %v3235 = vunpack.c.l.b16 %v3103
        %v3236 = vunpack.c.l.b16 %v3104
        %v3237 = vpack.c.b16 %v3174, %v3173
        %v3238 = vpack.c.b16 %v3176, %v3175
        %v3239 = vpack.c.b16 %v3178, %v3177
        %v3240 = vpack.c.b16 %v3180, %v3179
        %v3241 = vpack.c.b16 %v3182, %v3181
        %v3242 = vpack.c.b16 %v3184, %v3183
        %v3243 = vpack.c.b16 %v3186, %v3185
        %v3244 = vpack.c.b16 %v3188, %v3187
        %v3245 = vpack.c.b16 %v3190, %v3189
        %v3246 = vpack.c.b16 %v3192, %v3191
        %v3247 = vpack.c.b16 %v3194, %v3193
        %v3248 = vpack.c.b16 %v3196, %v3195
        %v3249 = vpack.c.b16 %v3198, %v3197
        %v3250 = vpack.c.b16 %v3200, %v3199
        %v3251 = vpack.c.b16 %v3202, %v3201
        %v3252 = vpack.c.b16 %v3204, %v3203
        %v3253 = vpack.c.b16 %v3206, %v3205
        %v3254 = vpack.c.b16 %v3208, %v3207
        %v3255 = vpack.c.b16 %v3210, %v3209
        %v3256 = vpack.c.b16 %v3212, %v3211
        %v3257 = vpack.c.b16 %v3214, %v3213
        %v3258 = vpack.c.b16 %v3216, %v3215
        %v3259 = vpack.c.b16 %v3218, %v3217
        %v3260 = vpack.c.b16 %v3220, %v3219
        %v3261 = vpack.c.b16 %v3222, %v3221
        %v3262 = vpack.c.b16 %v3224, %v3223
        %v3263 = vpack.c.b16 %v3226, %v3225
        %v3264 = vpack.c.b16 %v3228, %v3227
        %v3265 = vpack.c.b16 %v3230, %v3229
        %v3266 = vpack.c.b16 %v3232, %v3231
        %v3267 = vpack.c.b16 %v3234, %v3233
        %v3268 = vpack.c.b16 %v3236, %v3235
        %3301 = vmatpush.bf16.msra.mxu0 %v3244
        %3302 = vmatpush.bf16.msra.mxu0 %v3243
        %3303 = vmatpush.bf16.msra.mxu0 %v3242
        %3304 = vmatpush.bf16.msra.mxu0 %v3241
        %3305 = vmatpush.bf16.msra.mxu0 %v3240
        %3306 = vmatpush.bf16.msra.mxu0 %v3239
        %3307 = vmatpush.bf16.msra.mxu0 %v3238
        %3308 = vmatpush.bf16.msra.mxu0 %v3237
        %3309 = vmatmul.bf16.gmra.mxu0 %v3037
        %v3310 = vpop.f32.mrf.mxu0
        %v3311 = vadd.f32 %v3107, %v3310
        %v3312 = vpop.f32.mrf.mxu0
        %3313 = vdwg.mxu0
        %3314 = vmatpush.bf16.msra.mxu0 %v3252
        %3315 = vmatpush.bf16.msra.mxu0 %v3251
        %3316 = vmatpush.bf16.msra.mxu0 %v3250
        %3317 = vmatpush.bf16.msra.mxu0 %v3249
        %3318 = vmatpush.bf16.msra.mxu0 %v3248
        %3319 = vmatpush.bf16.msra.mxu0 %v3247
        %3320 = vmatpush.bf16.msra.mxu0 %v3246
        %3321 = vmatpush.bf16.msra.mxu0 %v3245
        %3322 = vmatmul.bf16.gmra.mxu0 %v3038
        %v3323 = vpop.f32.mrf.mxu0
        %v3324 = vadd.f32 %v3311, %v3323
        %v3325 = vpop.f32.mrf.mxu0
        %3326 = vdwg.mxu0
        %3327 = vmatpush.bf16.msra.mxu0 %v3260
        %3328 = vmatpush.bf16.msra.mxu0 %v3259
        %3329 = vmatpush.bf16.msra.mxu0 %v3258
        %3330 = vmatpush.bf16.msra.mxu0 %v3257
        %3331 = vmatpush.bf16.msra.mxu0 %v3256
        %3332 = vmatpush.bf16.msra.mxu0 %v3255
        %3333 = vmatpush.bf16.msra.mxu0 %v3254
        %3334 = vmatpush.bf16.msra.mxu0 %v3253
        %3335 = vmatmul.bf16.gmra.mxu0 %v3039
        %v3336 = vpop.f32.mrf.mxu0
        %v3337 = vadd.f32 %v3324, %v3336
        %v3338 = vpop.f32.mrf.mxu0
        %3339 = vdwg.mxu0
        %3340 = vmatpush.bf16.msra.mxu0 %v3268
        %3341 = vmatpush.bf16.msra.mxu0 %v3267
        %3342 = vmatpush.bf16.msra.mxu0 %v3266
        %3343 = vmatpush.bf16.msra.mxu0 %v3265
        %3344 = vmatpush.bf16.msra.mxu0 %v3264
        %3345 = vmatpush.bf16.msra.mxu0 %v3263
        %3346 = vmatpush.bf16.msra.mxu0 %v3262
        %3347 = vmatpush.bf16.msra.mxu0 %v3261
        %3348 = vmatmul.bf16.gmra.mxu0 %v3040
        %v3349 = vpop.f32.mrf.mxu0
        %v3350 = vadd.f32 %v3337, %v3349
        %v3351 = vpop.f32.mrf.mxu0
        %3352 = vdwg.mxu0
        %vm3353 = vcmp.gt.f32.partialorder %v3350, 0.0
        %v3354 = vmul.f32 %v3350, 0.01
        %v3355 = vsel %vm3353, %v3350, %v3354
        %v3356 = vpack.c.bf16 %v3355, %v3355
        %v3357 = vld [vmem:[%s12] sm:$0xf]
        %v3358 = vld [vmem:[%s12 + $0x4] sm:$0xf]
        %v3359 = vld [vmem:[%s12 + $0x8] sm:$0xf]
        %v3360 = vld [vmem:[%s12 + $0xc] sm:$0xf]
        %v3361 = vld [vmem:[%s12 + $0x10] sm:$0xf]
        %v3362 = vld [vmem:[%s12 + $0x14] sm:$0xf]
        %v3363 = vld [vmem:[%s12 + $0x18] sm:$0xf]
        %v3364 = vld [vmem:[%s12 + $0x1c] sm:$0xf]
        %v3365 = vld [vmem:[%s12 + $0x20] sm:$0xf]
        %v3366 = vld [vmem:[%s12 + $0x24] sm:$0xf]
        %v3367 = vld [vmem:[%s12 + $0x28] sm:$0xf]
        %v3368 = vld [vmem:[%s12 + $0x2c] sm:$0xf]
        %v3369 = vld [vmem:[%s12 + $0x30] sm:$0xf]
        %v3370 = vld [vmem:[%s12 + $0x34] sm:$0xf]
        %v3371 = vld [vmem:[%s12 + $0x38] sm:$0xf]
        %v3372 = vld [vmem:[%s12 + $0x3c] sm:$0xf]
        %v3373 = vld [vmem:[#allocation2] sm:$0x1]
        %v3375 = vperm.slane %v3373, 0
        %v3393 = vunpack.c.l.b16 %v3357
        %v3394 = vunpack.c.l.b16 %v3358
        %v3395 = vunpack.c.l.b16 %v3359
        %v3396 = vunpack.c.l.b16 %v3360
        %v3397 = vunpack.c.l.b16 %v3361
        %v3398 = vunpack.c.l.b16 %v3362
        %v3399 = vunpack.c.l.b16 %v3363
        %v3400 = vunpack.c.l.b16 %v3364
        %v3401 = vunpack.c.l.b16 %v3365
        %v3402 = vunpack.c.l.b16 %v3366
        %v3403 = vunpack.c.l.b16 %v3367
        %v3404 = vunpack.c.l.b16 %v3368
        %v3405 = vunpack.c.l.b16 %v3369
        %v3406 = vunpack.c.l.b16 %v3370
        %v3407 = vunpack.c.l.b16 %v3371
        %v3408 = vunpack.c.l.b16 %v3372
        %v3409 = vpack.c.b16 %v3394, %v3393
        %v3410 = vpack.c.b16 %v3396, %v3395
        %v3411 = vpack.c.b16 %v3398, %v3397
        %v3412 = vpack.c.b16 %v3400, %v3399
        %v3413 = vpack.c.b16 %v3402, %v3401
        %v3414 = vpack.c.b16 %v3404, %v3403
        %v3415 = vpack.c.b16 %v3406, %v3405
        %v3416 = vpack.c.b16 %v3408, %v3407
        %3425 = vmatpush.bf16.msra.mxu0 %v3416
        %3426 = vmatpush.bf16.msra.mxu0 %v3415
        %3427 = vmatpush.bf16.msra.mxu0 %v3414
        %3428 = vmatpush.bf16.msra.mxu0 %v3413
        %3429 = vmatpush.bf16.msra.mxu0 %v3412
        %3430 = vmatpush.bf16.msra.mxu0 %v3411
        %3431 = vmatpush.bf16.msra.mxu0 %v3410
        %3432 = vmatpush.bf16.msra.mxu0 %v3409
        %3433 = vmatmul.bf16.gmra.mxu0 %v3356
        %v3434 = vpop.f32.mrf.mxu0
        %v3435 = vadd.f32 %v3375, %v3434
        %v3436 = vpop.f32.mrf.mxu0
        %3437 = vdwg.mxu0
        %v3438 = vsub.f32 0.0, %v3435
        %v3439 = vmul.f32 %v3438, 1.442695
        %v3440 = vpow.pop %v3439
        %v3441 = vadd.f32 %v3440, 1.0
        %v3442 = vrcp.pop %v3441
        %v3443 = vmul.f32 %v3441, %v3442
        %v3444 = vsub.f32 1.0, %v3443
        %v3445 = vmul.f32 %v3442, %v3444
        %v3446 = vadd.f32 %v3442, %v3445
        %vm3447 = vweird.f32 %v3441
        %vm3448 = vweird.f32 %v3442
        %vm3449 = vmor %vm3447, %vm3448
        %v3450 = vsel %vm3449, %v3442, %v3446
        %v3451 = vand.u32 2147483647, %v3441
        %vm3452 = vcmp.eq.f32.partialorder %v3451, 8.507059e+37
        %v3453 = vand.u32 %v3441, 2147483648
        %v3454 = vor.u32 1.1754944e-38, %v3453
        %v3455 = vsel %vm3452, %v3454, %v3450
        %v3456 = vmul.f32 1.0, %v3455
        %vm3457 = vcmask 7168
        %3458 = vst.msk [vmem:[%s610] sm:$0xff] %vm3457, %v3456
        %p3459 = scmp.lt.s32.totalorder %s35, 1
        %s3460 = scalar_select %p3459, %s35, 1
        %s3461 = smul.addr %s3460, 8
        %s3462 = scalar_lea.vmem %s14, %s3461
        // Predicated region
        $region109: #{discriminator_forward.1} parent=75 // pred_check
          %p3463 = pneg %p357
        $region110: #{discriminator_forward.1} parent=75 // pred_check_branch
          %3465 = sbr.rel (%p3463) target = $region112
        $region111: #{discriminator_forward.1} parent=75 // pred_region
          _
        $region112: #{discriminator_forward.1} parent=75 // pred_fallthru
          _
        // Predicated region
        $region113: #{discriminator_forward.1} parent=75 // pred_check
          %p3466 = pneg %p378
        $region114: #{discriminator_forward.1} parent=75 // pred_check_branch
          %3468 = sbr.rel (%p3466) target = $region116
        $region115: #{discriminator_forward.1} parent=75 // pred_region
          _
        $region116: #{discriminator_forward.1} parent=75 // pred_fallthru
          _
        // Predicated region
        $region117: #{discriminator_forward.1} parent=75 // pred_check
          %p3469 = pneg %p378
        $region118: #{discriminator_forward.1} parent=75 // pred_check_branch
          %3471 = sbr.rel (%p3469) target = $region120
        $region119: #{discriminator_forward.1} parent=75 // pred_region
          _
        $region120: #{discriminator_forward.1} parent=75 // pred_fallthru
          _
      $region76: #{discriminator_forward.1} parent=5 // pred_fallthru
        _
      %p3472 = scmp.le.s32.totalorder 2, %s30
      // Predicated region
      $region121: #{discriminator_forward.1} parent=5 // pred_check
        %p3473 = pneg %p3472
      $region122: #{discriminator_forward.1} parent=5 // pred_check_branch
        %3475 = sbr.rel (%p3473) target = $region124
      $region123: #{discriminator_forward.1} parent=5 // pred_region
        %s3476 = ssub.s32 %s30, 2
        // Predicated region
        $region125: #{discriminator_forward.1} parent=123 // pred_check
          %p3477 = pneg %p363
        $region126: #{discriminator_forward.1} parent=123 // pred_check_branch
          %3479 = sbr.rel (%p3477) target = $region128
        $region127: #{discriminator_forward.1} parent=123 // pred_region
          %p3480 = scmp.lt.s32.totalorder %s36, 1
          %s3481 = scalar_select %p3480, %s36, 1
          %s3482 = smul.addr %s3481, 8
          %s3483 = scalar_lea.vmem %s14, %s3482
        $region128: #{discriminator_forward.1} parent=123 // pred_fallthru
          _
      $region124: #{discriminator_forward.1} parent=5 // pred_fallthru
        _
    $region6: #{discriminator_forward.1} parent=1 // loop_footer
      %s34 = sadd.s32 1, %s30
    $region7: #{discriminator_forward.1} parent=1 // loop_footer_branch
      %29 = sbr.rel target = $region3
    $region8: #{discriminator_forward.1} parent=1 // loop_exit
      _
    %3484 = vsyncpa [#allocation4], 1
    %s3485 = scalar_lea.sflag [#allocation4], 1
    %3486 = vsyncpa %s3485, 1
    %3487 = vsyncpa [#allocation6], 1
    %3488 = vsyncpa [#allocation9], 1
    %3489 = vsyncpa [#allocation12], 1

</llo_original>
